<compile_context>
chip_gen: v7x
topology: tpu7x:2x2x1
jax: 0.10.0
libtpu: 0.0.40
codegen_flags: <defaults>
</compile_context>

<pallas_src>
import math

import jax
import jax.numpy as jnp
from jax import lax
from jax.experimental import pallas as pl

# ---- synthetic (small) config ----
B, S, H = 2, 8, 32          # batch, seq, hidden
NH, HD = 4, 8               # heads, head dim (NH*HD == H, HD == sublane count)
FFN = 64                    # intermediate size
LAYERS = 2                  # encoder layers
VOCAB = 100
CLS_HID = 128
NUM_CLASSES = 3
LN_EPS = 1e-5
LANE_PAD = 128              # lane-dense padded logits width


# ----------------- in-kernel helpers (f32 elementwise math) -----------------
def _layernorm(x, g, b):
    mu = jnp.mean(x, axis=-1, keepdims=True)
    var = jnp.mean(jnp.square(x - mu), axis=-1, keepdims=True)
    return (x - mu) * lax.rsqrt(var + LN_EPS) * g + b


def _gelu(x):
    # TODO(synk): RoBERTa uses exact erf-GELU; tanh approximation kept for robust lowering.
    c = math.sqrt(2.0 / math.pi)
    return 0.5 * x * (1.0 + jnp.tanh(c * (x + 0.044715 * x * x * x)))


def _softmax_last(x):
    x = x - jnp.max(x, axis=-1, keepdims=True)
    e = jnp.exp(x)
    return e * pl.reciprocal(jnp.sum(e, axis=-1, keepdims=True), approx=True)


def _encoder_layer(x2, mask2, wqT, bq, wkT, bk, wvT, bv, wo, bo, g1, be1,
                   wi, bi, wo2, bo2, g2, be2):
    """One transformer encoder layer on the folded-batch hidden state x2: (B*S, H), f32."""
    scale = 1.0 / math.sqrt(HD)
    f32 = jnp.float32
    bf16 = jnp.bfloat16

    attn_rows = []
    for b in range(B):                                   # static, attention must not mix batches
        xb_bf = x2[b * S:(b + 1) * S, :].astype(bf16)    # (S, H) sublane-aligned slice
        # Transposed projections (head-major rows):  (H, S) = W^T @ x^T  + bias column.
        qT = lax.dot_general(wqT, xb_bf, (((1,), (1,)), ((), ())),
                             preferred_element_type=f32) + bq
        kT = lax.dot_general(wkT, xb_bf, (((1,), (1,)), ((), ())),
                             preferred_element_type=f32) + bk
        vT = lax.dot_general(wvT, xb_bf, (((1,), (1,)), ((), ())),
                             preferred_element_type=f32) + bv
        # (H, S) -> (NH, HD, S): layout-trivial leading-dim split (HD == 8 sublanes).
        qh = jnp.swapaxes(qT.reshape(NH, HD, S), 1, 2).astype(bf16)   # (NH, S, HD)
        kh = kT.reshape(NH, HD, S).astype(bf16)                       # (NH, HD, S)
        vh = vT.reshape(NH, HD, S).astype(bf16)                       # (NH, HD, S)
        # All heads in one batched contraction: scores (NH, S, S), f32 accumulate.
        s = lax.dot_general(qh, kh, (((2,), (1,)), ((0,), (0,))),
                            preferred_element_type=f32) * scale
        s = s + mask2[b:b + 1, :][None, :, :]            # additive key mask (1,1,S)
        p = _softmax_last(s).astype(bf16)                # (NH, S, S)
        # ctx[n,d,s] = sum_t v[n,d,t] * p[n,s,t]  -> (NH, HD, S), batched over heads.
        ctx = lax.dot_general(vh, p, (((2,), (2,)), ((0,), (0,))),
                              preferred_element_type=f32)
        ctx2 = ctx.reshape(H, S).astype(bf16)            # (H, S), head-major rows
        # Output projection: (S, H) = ctx2^T @ W_o.
        ao = lax.dot_general(ctx2, wo, (((0,), (0,)), ((), ())),
                             preferred_element_type=f32) + bo
        attn_rows.append(ao)

    attn = jnp.concatenate(attn_rows, axis=0)            # (B*S, H), sublane concat
    h1 = _layernorm(x2 + attn, g1, be1)

    ff = jnp.dot(h1.astype(bf16), wi, preferred_element_type=f32) + bi
    ff = _gelu(ff)
    ff = jnp.dot(ff.astype(bf16), wo2, preferred_element_type=f32) + bo2
    return _layernorm(h1 + ff, g2, be2)


# ----------------- fused kernel -----------------
def fused_nli_kernel(emb_ref, mask_ref, eg_ref, eb_ref,
                     wqT_ref, bq_ref, wkT_ref, bk_ref, wvT_ref, bv_ref,
                     wo_ref, bo_ref, g1_ref, be1_ref,
                     wi_ref, bi_ref, wo2_ref, bo2_ref, g2_ref, be2_ref,
                     cw1_ref, cb1_ref, cw2_ref, cb2_ref,
                     out_ref):
    # Embedding LayerNorm on the folded batch (B*S, H).
    x = _layernorm(emb_ref[...], eg_ref[...], eb_ref[...])
    mask2 = mask_ref[...]                                # (B, S) additive key bias

    # Statically-unrolled encoder stack; every layer's weights stay resident in VMEM.
    for l in range(LAYERS):
        x = _encoder_layer(
            x, mask2,
            wqT_ref[l], bq_ref[l], wkT_ref[l], bk_ref[l], wvT_ref[l], bv_ref[l],
            wo_ref[l], bo_ref[l], g1_ref[l], be1_ref[l],
            wi_ref[l], bi_ref[l], wo2_ref[l], bo2_ref[l], g2_ref[l], be2_ref[l])

    # Classifier applied to every row (trivial extra compute); the wrapper picks the
    # [CLS] rows and the first NUM_CLASSES lanes of the lane-dense padded output tile.
    hmid = jnp.dot(x.astype(jnp.bfloat16), cw1_ref[...],
                   preferred_element_type=jnp.float32) + cb1_ref[...]
    hmid = jnp.maximum(hmid, 0.0)
    out_ref[...] = jnp.dot(hmid.astype(jnp.bfloat16), cw2_ref[...],
                           preferred_element_type=jnp.float32) + cb2_ref[...]


# ----------------- parameter init (deterministic, synthetic) -----------------
def init_params(key):
    def nrm(k, shape, scale=0.02):
        return scale * jax.random.normal(k, shape, dtype=jnp.float32)

    keys = jax.random.split(key, 8 + LAYERS)
    params = {
        "word_emb": nrm(keys[0], (VOCAB, H)),
        "pos_emb": nrm(keys[1], (S, H)),
        "type_emb": nrm(keys[2], (1, H)),
        "emb_ln_g": jnp.ones((1, H), jnp.float32),
        "emb_ln_b": jnp.zeros((1, H), jnp.float32),
        "cls_w1": nrm(keys[3], (H, CLS_HID)),
        "cls_b1": jnp.zeros((1, CLS_HID), jnp.float32),
        "cls_w2": nrm(keys[4], (CLS_HID, NUM_CLASSES)),
        "cls_b2": jnp.zeros((1, NUM_CLASSES), jnp.float32),
        "layers": [],
    }
    for li in range(LAYERS):
        lk = jax.random.split(keys[8 + li], 6)
        params["layers"].append({
            "wq": nrm(lk[0], (H, H)), "bq": jnp.zeros((1, H), jnp.float32),
            "wk": nrm(lk[1], (H, H)), "bk": jnp.zeros((1, H), jnp.float32),
            "wv": nrm(lk[2], (H, H)), "bv": jnp.zeros((1, H), jnp.float32),
            "wo": nrm(lk[3], (H, H)), "bo": jnp.zeros((1, H), jnp.float32),
            "g1": jnp.ones((1, H), jnp.float32), "be1": jnp.zeros((1, H), jnp.float32),
            "wi": nrm(lk[4], (H, FFN)), "bi": jnp.zeros((1, FFN), jnp.float32),
            "wo2": nrm(lk[5], (FFN, H)), "bo2": jnp.zeros((1, H), jnp.float32),
            "g2": jnp.ones((1, H), jnp.float32), "be2": jnp.zeros((1, H), jnp.float32),
        })
    return params


# ----------------- full forward: XLA glue + one fused Pallas call -----------------
def custom_nli_forward(input_ids, attention_mask, params):
    # Embedding gathers are XLA glue; everything downstream is a single fused Pallas kernel.
    emb = (params["word_emb"][input_ids]
           + params["pos_emb"][jnp.arange(S)][None, :, :]
           + params["type_emb"][0][None, None, :]).astype(jnp.float32)
    emb2 = emb.reshape(B * S, H)
    mask_bias = (1.0 - attention_mask.astype(jnp.float32)) * (-1e9)   # (B, S)

    def stack(name):
        return jnp.stack([lp[name] for lp in params["layers"]], axis=0)

    bf16 = jnp.bfloat16
    # QKV weights pre-transposed to (out, in); their biases as (H, 1) columns.
    wqT = jnp.swapaxes(stack("wq"), 1, 2).astype(bf16)
    wkT = jnp.swapaxes(stack("wk"), 1, 2).astype(bf16)
    wvT = jnp.swapaxes(stack("wv"), 1, 2).astype(bf16)
    bq = jnp.swapaxes(stack("bq"), 1, 2)
    bk = jnp.swapaxes(stack("bk"), 1, 2)
    bv = jnp.swapaxes(stack("bv"), 1, 2)
    wo, bo = stack("wo").astype(bf16), stack("bo")
    g1, be1 = stack("g1"), stack("be1")
    wi, bi = stack("wi").astype(bf16), stack("bi")
    wo2, bo2 = stack("wo2").astype(bf16), stack("bo2")
    g2, be2 = stack("g2"), stack("be2")

    cw1 = params["cls_w1"].astype(bf16)
    cb1 = params["cls_b1"]
    # Pad the 3-class head to a lane-dense 128-wide output tile (sliced back below).
    cw2p = jnp.zeros((CLS_HID, LANE_PAD), jnp.float32)
    cw2p = cw2p.at[:, :NUM_CLASSES].set(params["cls_w2"]).astype(bf16)
    cb2p = jnp.zeros((1, LANE_PAD), jnp.float32).at[:, :NUM_CLASSES].set(params["cls_b2"])

    # Whole forward fits VMEM trivially at this size -> single grid step, no pipelining.
    # TODO(synk): at real roberta-large scale (H=1024, FFN=4096) tile the FFN matmuls, keep
    # weights bf16, set pltpu.CompilerParams(vmem_limit_bytes=...), and add a parallel grid
    # axis so v7x's second TensorCore gets work.
    out = pl.pallas_call(
        fused_nli_kernel,
        out_shape=jax.ShapeDtypeStruct((B * S, LANE_PAD), jnp.float32),
    )(emb2, mask_bias, params["emb_ln_g"], params["emb_ln_b"],
      wqT, bq, wkT, bk, wvT, bv, wo, bo, g1, be1,
      wi, bi, wo2, bo2, g2, be2, cw1, cb1, cw2p, cb2p)

    # [CLS] logits: row b*S of the folded batch, first NUM_CLASSES lanes of the padded tile.
    return out.reshape(B, S, LANE_PAD)[:, 0, :NUM_CLASSES]


if __name__ == "__main__":
    key = jax.random.PRNGKey(0)
    pkey, ikey = jax.random.split(key)
    params = init_params(pkey)

    input_ids = jax.random.randint(ikey, (B, S), 0, VOCAB, dtype=jnp.int32)
    attention_mask = jnp.array([[1, 1, 1, 1, 1, 1, 1, 1],
                                [1, 1, 1, 1, 1, 0, 0, 0]], dtype=jnp.int32)

    forward = jax.jit(custom_nli_forward)
    logits = forward(input_ids, attention_mask, params)
    logits = jax.block_until_ready(logits)
    assert logits.shape == (B, NUM_CLASSES)
    print("KERNEL_OK")
</pallas_src>

<mosaic_0001>
module attributes {stable_mosaic.version = 11 : i64} {
  func.func @fused_nli_kernel(%arg0: memref<16x32xf32, #tpu.memory_space<vmem>>, %arg1: memref<2x8xf32, #tpu.memory_space<vmem>>, %arg2: memref<1x32xf32, #tpu.memory_space<vmem>>, %arg3: memref<1x32xf32, #tpu.memory_space<vmem>>, %arg4: memref<2x32x32xbf16, #tpu.memory_space<vmem>>, %arg5: memref<2x32x1xf32, #tpu.memory_space<vmem>>, %arg6: memref<2x32x32xbf16, #tpu.memory_space<vmem>>, %arg7: memref<2x32x1xf32, #tpu.memory_space<vmem>>, %arg8: memref<2x32x32xbf16, #tpu.memory_space<vmem>>, %arg9: memref<2x32x1xf32, #tpu.memory_space<vmem>>, %arg10: memref<2x32x32xbf16, #tpu.memory_space<vmem>>, %arg11: memref<2x1x32xf32, #tpu.memory_space<vmem>>, %arg12: memref<2x1x32xf32, #tpu.memory_space<vmem>>, %arg13: memref<2x1x32xf32, #tpu.memory_space<vmem>>, %arg14: memref<2x32x64xbf16, #tpu.memory_space<vmem>>, %arg15: memref<2x1x64xf32, #tpu.memory_space<vmem>>, %arg16: memref<2x64x32xbf16, #tpu.memory_space<vmem>>, %arg17: memref<2x1x32xf32, #tpu.memory_space<vmem>>, %arg18: memref<2x1x32xf32, #tpu.memory_space<vmem>>, %arg19: memref<2x1x32xf32, #tpu.memory_space<vmem>>, %arg20: memref<32x128xbf16, #tpu.memory_space<vmem>>, %arg21: memref<1x128xf32, #tpu.memory_space<vmem>>, %arg22: memref<128x128xbf16, #tpu.memory_space<vmem>>, %arg23: memref<1x128xf32, #tpu.memory_space<vmem>>, %arg24: memref<16x128xf32, #tpu.memory_space<vmem>>) attributes {dimension_semantics = [], scalar_prefetch = 0 : i64, scratch_operands = 0 : i64, tpu.core_type = #tpu.core_type<tc>} {
    %c0 = arith.constant 0 : index
    %c0_0 = arith.constant 0 : index
    %0 = vector.load %arg0[%c0, %c0_0] : memref<16x32xf32, #tpu.memory_space<vmem>>, vector<16x32xf32>
    %c0_1 = arith.constant 0 : index
    %c0_2 = arith.constant 0 : index
    %1 = vector.load %arg2[%c0_1, %c0_2] : memref<1x32xf32, #tpu.memory_space<vmem>>, vector<1x32xf32>
    %c0_3 = arith.constant 0 : index
    %c0_4 = arith.constant 0 : index
    %2 = vector.load %arg3[%c0_3, %c0_4] : memref<1x32xf32, #tpu.memory_space<vmem>>, vector<1x32xf32>
    %cst = arith.constant dense<0.000000e+00> : vector<16xf32>
    %3 = vector.multi_reduction <add>, %0, %cst [1] : vector<16x32xf32> to vector<16xf32>
    %4 = vector.shape_cast %3 : vector<16xf32> to vector<16x1xf32>
    %cst_5 = arith.constant 3.200000e+01 : f32
    %5 = vector.broadcast %cst_5 : f32 to vector<16x1xf32>
    %6 = arith.divf %4, %5 : vector<16x1xf32>
    %7 = vector.broadcast %6 : vector<16x1xf32> to vector<16x32xf32>
    %8 = arith.subf %0, %7 : vector<16x32xf32>
    %9 = arith.mulf %8, %8 : vector<16x32xf32>
    %cst_6 = arith.constant dense<0.000000e+00> : vector<16xf32>
    %10 = vector.multi_reduction <add>, %9, %cst_6 [1] : vector<16x32xf32> to vector<16xf32>
    %11 = vector.shape_cast %10 : vector<16xf32> to vector<16x1xf32>
    %cst_7 = arith.constant 3.200000e+01 : f32
    %12 = vector.broadcast %cst_7 : f32 to vector<16x1xf32>
    %13 = arith.divf %11, %12 : vector<16x1xf32>
    %14 = vector.broadcast %6 : vector<16x1xf32> to vector<16x32xf32>
    %15 = arith.subf %0, %14 : vector<16x32xf32>
    %cst_8 = arith.constant 9.99999974E-6 : f32
    %16 = vector.broadcast %cst_8 : f32 to vector<16x1xf32>
    %17 = arith.addf %13, %16 : vector<16x1xf32>
    %18 = math.rsqrt %17 : vector<16x1xf32>
    %19 = vector.broadcast %18 : vector<16x1xf32> to vector<16x32xf32>
    %20 = arith.mulf %15, %19 : vector<16x32xf32>
    %21 = vector.broadcast %1 : vector<1x32xf32> to vector<16x32xf32>
    %22 = arith.mulf %20, %21 : vector<16x32xf32>
    %23 = vector.broadcast %2 : vector<1x32xf32> to vector<16x32xf32>
    %24 = arith.addf %22, %23 : vector<16x32xf32>
    %c0_9 = arith.constant 0 : index
    %c0_10 = arith.constant 0 : index
    %25 = vector.load %arg1[%c0_9, %c0_10] : memref<2x8xf32, #tpu.memory_space<vmem>>, vector<2x8xf32>
    %c0_11 = arith.constant 0 : index
    %c0_12 = arith.constant 0 : index
    %c0_13 = arith.constant 0 : index
    %26 = vector.load %arg4[%c0_11, %c0_12, %c0_13] : memref<2x32x32xbf16, #tpu.memory_space<vmem>>, vector<1x32x32xbf16>
    %27 = vector.shape_cast %26 : vector<1x32x32xbf16> to vector<32x32xbf16>
    %c0_14 = arith.constant 0 : index
    %c0_15 = arith.constant 0 : index
    %c0_16 = arith.constant 0 : index
    %28 = vector.load %arg5[%c0_14, %c0_15, %c0_16] : memref<2x32x1xf32, #tpu.memory_space<vmem>>, vector<1x32x1xf32>
    %29 = vector.shape_cast %28 : vector<1x32x1xf32> to vector<32x1xf32>
    %c0_17 = arith.constant 0 : index
    %c0_18 = arith.constant 0 : index
    %c0_19 = arith.constant 0 : index
    %30 = vector.load %arg6[%c0_17, %c0_18, %c0_19] : memref<2x32x32xbf16, #tpu.memory_space<vmem>>, vector<1x32x32xbf16>
    %31 = vector.shape_cast %30 : vector<1x32x32xbf16> to vector<32x32xbf16>
    %c0_20 = arith.constant 0 : index
    %c0_21 = arith.constant 0 : index
    %c0_22 = arith.constant 0 : index
    %32 = vector.load %arg7[%c0_20, %c0_21, %c0_22] : memref<2x32x1xf32, #tpu.memory_space<vmem>>, vector<1x32x1xf32>
    %33 = vector.shape_cast %32 : vector<1x32x1xf32> to vector<32x1xf32>
    %c0_23 = arith.constant 0 : index
    %c0_24 = arith.constant 0 : index
    %c0_25 = arith.constant 0 : index
    %34 = vector.load %arg8[%c0_23, %c0_24, %c0_25] : memref<2x32x32xbf16, #tpu.memory_space<vmem>>, vector<1x32x32xbf16>
    %35 = vector.shape_cast %34 : vector<1x32x32xbf16> to vector<32x32xbf16>
    %c0_26 = arith.constant 0 : index
    %c0_27 = arith.constant 0 : index
    %c0_28 = arith.constant 0 : index
    %36 = vector.load %arg9[%c0_26, %c0_27, %c0_28] : memref<2x32x1xf32, #tpu.memory_space<vmem>>, vector<1x32x1xf32>
    %37 = vector.shape_cast %36 : vector<1x32x1xf32> to vector<32x1xf32>
    %c0_29 = arith.constant 0 : index
    %c0_30 = arith.constant 0 : index
    %c0_31 = arith.constant 0 : index
    %38 = vector.load %arg10[%c0_29, %c0_30, %c0_31] : memref<2x32x32xbf16, #tpu.memory_space<vmem>>, vector<1x32x32xbf16>
    %39 = vector.shape_cast %38 : vector<1x32x32xbf16> to vector<32x32xbf16>
    %c0_32 = arith.constant 0 : index
    %c0_33 = arith.constant 0 : index
    %c0_34 = arith.constant 0 : index
    %40 = vector.load %arg11[%c0_32, %c0_33, %c0_34] : memref<2x1x32xf32, #tpu.memory_space<vmem>>, vector<1x1x32xf32>
    %41 = vector.shape_cast %40 : vector<1x1x32xf32> to vector<1x32xf32>
    %c0_35 = arith.constant 0 : index
    %c0_36 = arith.constant 0 : index
    %c0_37 = arith.constant 0 : index
    %42 = vector.load %arg12[%c0_35, %c0_36, %c0_37] : memref<2x1x32xf32, #tpu.memory_space<vmem>>, vector<1x1x32xf32>
    %43 = vector.shape_cast %42 : vector<1x1x32xf32> to vector<1x32xf32>
    %c0_38 = arith.constant 0 : index
    %c0_39 = arith.constant 0 : index
    %c0_40 = arith.constant 0 : index
    %44 = vector.load %arg13[%c0_38, %c0_39, %c0_40] : memref<2x1x32xf32, #tpu.memory_space<vmem>>, vector<1x1x32xf32>
    %45 = vector.shape_cast %44 : vector<1x1x32xf32> to vector<1x32xf32>
    %c0_41 = arith.constant 0 : index
    %c0_42 = arith.constant 0 : index
    %c0_43 = arith.constant 0 : index
    %46 = vector.load %arg14[%c0_41, %c0_42, %c0_43] : memref<2x32x64xbf16, #tpu.memory_space<vmem>>, vector<1x32x64xbf16>
    %47 = vector.shape_cast %46 : vector<1x32x64xbf16> to vector<32x64xbf16>
    %c0_44 = arith.constant 0 : index
    %c0_45 = arith.constant 0 : index
    %c0_46 = arith.constant 0 : index
    %48 = vector.load %arg15[%c0_44, %c0_45, %c0_46] : memref<2x1x64xf32, #tpu.memory_space<vmem>>, vector<1x1x64xf32>
    %49 = vector.shape_cast %48 : vector<1x1x64xf32> to vector<1x64xf32>
    %c0_47 = arith.constant 0 : index
    %c0_48 = arith.constant 0 : index
    %c0_49 = arith.constant 0 : index
    %50 = vector.load %arg16[%c0_47, %c0_48, %c0_49] : memref<2x64x32xbf16, #tpu.memory_space<vmem>>, vector<1x64x32xbf16>
    %51 = vector.shape_cast %50 : vector<1x64x32xbf16> to vector<64x32xbf16>
    %c0_50 = arith.constant 0 : index
    %c0_51 = arith.constant 0 : index
    %c0_52 = arith.constant 0 : index
    %52 = vector.load %arg17[%c0_50, %c0_51, %c0_52] : memref<2x1x32xf32, #tpu.memory_space<vmem>>, vector<1x1x32xf32>
    %53 = vector.shape_cast %52 : vector<1x1x32xf32> to vector<1x32xf32>
    %c0_53 = arith.constant 0 : index
    %c0_54 = arith.constant 0 : index
    %c0_55 = arith.constant 0 : index
    %54 = vector.load %arg18[%c0_53, %c0_54, %c0_55] : memref<2x1x32xf32, #tpu.memory_space<vmem>>, vector<1x1x32xf32>
    %55 = vector.shape_cast %54 : vector<1x1x32xf32> to vector<1x32xf32>
    %c0_56 = arith.constant 0 : index
    %c0_57 = arith.constant 0 : index
    %c0_58 = arith.constant 0 : index
    %56 = vector.load %arg19[%c0_56, %c0_57, %c0_58] : memref<2x1x32xf32, #tpu.memory_space<vmem>>, vector<1x1x32xf32>
    %57 = vector.shape_cast %56 : vector<1x1x32xf32> to vector<1x32xf32>
    %58 = vector.extract_strided_slice %24 {offsets = [0, 0], sizes = [8, 32], strides = [1, 1]} : vector<16x32xf32> to vector<8x32xf32>
    %59 = arith.truncf %58 : vector<8x32xf32> to vector<8x32xbf16>
    %cst_59 = arith.constant dense<0.000000e+00> : vector<32x8xf32>
    %60 = tpu.matmul %27, %59, %cst_59 {dimension_numbers = #tpu.dot_dimension_numbers<[1], [1], [0], [0], [0, 0, 1, 0], [], []>} : vector<32x32xbf16>, vector<8x32xbf16>, vector<32x8xf32> -> vector<32x8xf32>
    %61 = vector.broadcast %29 : vector<32x1xf32> to vector<32x8xf32>
    %62 = arith.addf %60, %61 : vector<32x8xf32>
    %cst_60 = arith.constant dense<0.000000e+00> : vector<32x8xf32>
    %63 = tpu.matmul %31, %59, %cst_60 {dimension_numbers = #tpu.dot_dimension_numbers<[1], [1], [0], [0], [0, 0, 1, 0], [], []>} : vector<32x32xbf16>, vector<8x32xbf16>, vector<32x8xf32> -> vector<32x8xf32>
    %64 = vector.broadcast %33 : vector<32x1xf32> to vector<32x8xf32>
    %65 = arith.addf %63, %64 : vector<32x8xf32>
    %cst_61 = arith.constant dense<0.000000e+00> : vector<32x8xf32>
    %66 = tpu.matmul %35, %59, %cst_61 {dimension_numbers = #tpu.dot_dimension_numbers<[1], [1], [0], [0], [0, 0, 1, 0], [], []>} : vector<32x32xbf16>, vector<8x32xbf16>, vector<32x8xf32> -> vector<32x8xf32>
    %67 = vector.broadcast %37 : vector<32x1xf32> to vector<32x8xf32>
    %68 = arith.addf %66, %67 : vector<32x8xf32>
    %69 = vector.shape_cast %62 : vector<32x8xf32> to vector<4x8x8xf32>
    %70 = tpu.transpose %69, [0, 2, 1] : vector<4x8x8xf32> -> vector<4x8x8xf32>
    %71 = arith.truncf %70 : vector<4x8x8xf32> to vector<4x8x8xbf16>
    %72 = vector.shape_cast %65 : vector<32x8xf32> to vector<4x8x8xf32>
    %73 = arith.truncf %72 : vector<4x8x8xf32> to vector<4x8x8xbf16>
    %74 = vector.shape_cast %68 : vector<32x8xf32> to vector<4x8x8xf32>
    %75 = arith.truncf %74 : vector<4x8x8xf32> to vector<4x8x8xbf16>
    %cst_62 = arith.constant dense<0.000000e+00> : vector<4x8x8xf32>
    %76 = tpu.matmul %71, %73, %cst_62 {dimension_numbers = #tpu.dot_dimension_numbers<[2], [1], [1], [2], [0, 0, 0, 1, 1, 2], [0], [0]>} : vector<4x8x8xbf16>, vector<4x8x8xbf16>, vector<4x8x8xf32> -> vector<4x8x8xf32>
    %cst_63 = arith.constant 0.353553385 : f32
    %77 = vector.broadcast %cst_63 : f32 to vector<4x8x8xf32>
    %78 = arith.mulf %76, %77 : vector<4x8x8xf32>
    %79 = vector.extract_strided_slice %25 {offsets = [0, 0], sizes = [1, 8], strides = [1, 1]} : vector<2x8xf32> to vector<1x8xf32>
    %80 = vector.shape_cast %79 : vector<1x8xf32> to vector<1x1x8xf32>
    %81 = vector.broadcast %80 : vector<1x1x8xf32> to vector<4x8x8xf32>
    %82 = arith.addf %78, %81 : vector<4x8x8xf32>
    %cst_64 = arith.constant dense<0xFF800000> : vector<4x8xf32>
    %83 = vector.multi_reduction <maximumf>, %82, %cst_64 [2] : vector<4x8x8xf32> to vector<4x8xf32>
    %84 = vector.shape_cast %83 : vector<4x8xf32> to vector<4x8x1xf32>
    %85 = vector.broadcast %84 : vector<4x8x1xf32> to vector<4x8x8xf32>
    %86 = arith.subf %82, %85 : vector<4x8x8xf32>
    %87 = math.exp %86 : vector<4x8x8xf32>
    %cst_65 = arith.constant dense<0.000000e+00> : vector<4x8xf32>
    %88 = vector.multi_reduction <add>, %87, %cst_65 [2] : vector<4x8x8xf32> to vector<4x8xf32>
    %89 = vector.shape_cast %88 : vector<4x8xf32> to vector<4x8x1xf32>
    %90 = tpu.reciprocal %89 {approx = true} : vector<4x8x1xf32> -> vector<4x8x1xf32>
    %91 = vector.broadcast %90 : vector<4x8x1xf32> to vector<4x8x8xf32>
    %92 = arith.mulf %87, %91 : vector<4x8x8xf32>
    %93 = arith.truncf %92 : vector<4x8x8xf32> to vector<4x8x8xbf16>
    %cst_66 = arith.constant dense<0.000000e+00> : vector<4x8x8xf32>
    %94 = tpu.matmul %75, %93, %cst_66 {dimension_numbers = #tpu.dot_dimension_numbers<[2], [2], [1], [1], [0, 0, 0, 1, 1, 1], [0], [0]>} : vector<4x8x8xbf16>, vector<4x8x8xbf16>, vector<4x8x8xf32> -> vector<4x8x8xf32>
    %95 = vector.shape_cast %94 : vector<4x8x8xf32> to vector<32x8xf32>
    %96 = arith.truncf %95 : vector<32x8xf32> to vector<32x8xbf16>
    %cst_67 = arith.constant dense<0.000000e+00> : vector<8x32xf32>
    %97 = tpu.matmul %96, %39, %cst_67 {dimension_numbers = #tpu.dot_dimension_numbers<[0], [0], [1], [1], [0, 1, 1, 1], [], []>} : vector<32x8xbf16>, vector<32x32xbf16>, vector<8x32xf32> -> vector<8x32xf32>
    %98 = vector.broadcast %41 : vector<1x32xf32> to vector<8x32xf32>
    %99 = arith.addf %97, %98 : vector<8x32xf32>
    %100 = vector.extract_strided_slice %24 {offsets = [8, 0], sizes = [8, 32], strides = [1, 1]} : vector<16x32xf32> to vector<8x32xf32>
    %101 = arith.truncf %100 : vector<8x32xf32> to vector<8x32xbf16>
    %cst_68 = arith.constant dense<0.000000e+00> : vector<32x8xf32>
    %102 = tpu.matmul %27, %101, %cst_68 {dimension_numbers = #tpu.dot_dimension_numbers<[1], [1], [0], [0], [0, 0, 1, 0], [], []>} : vector<32x32xbf16>, vector<8x32xbf16>, vector<32x8xf32> -> vector<32x8xf32>
    %103 = vector.broadcast %29 : vector<32x1xf32> to vector<32x8xf32>
    %104 = arith.addf %102, %103 : vector<32x8xf32>
    %cst_69 = arith.constant dense<0.000000e+00> : vector<32x8xf32>
    %105 = tpu.matmul %31, %101, %cst_69 {dimension_numbers = #tpu.dot_dimension_numbers<[1], [1], [0], [0], [0, 0, 1, 0], [], []>} : vector<32x32xbf16>, vector<8x32xbf16>, vector<32x8xf32> -> vector<32x8xf32>
    %106 = vector.broadcast %33 : vector<32x1xf32> to vector<32x8xf32>
    %107 = arith.addf %105, %106 : vector<32x8xf32>
    %cst_70 = arith.constant dense<0.000000e+00> : vector<32x8xf32>
    %108 = tpu.matmul %35, %101, %cst_70 {dimension_numbers = #tpu.dot_dimension_numbers<[1], [1], [0], [0], [0, 0, 1, 0], [], []>} : vector<32x32xbf16>, vector<8x32xbf16>, vector<32x8xf32> -> vector<32x8xf32>
    %109 = vector.broadcast %37 : vector<32x1xf32> to vector<32x8xf32>
    %110 = arith.addf %108, %109 : vector<32x8xf32>
    %111 = vector.shape_cast %104 : vector<32x8xf32> to vector<4x8x8xf32>
    %112 = tpu.transpose %111, [0, 2, 1] : vector<4x8x8xf32> -> vector<4x8x8xf32>
    %113 = arith.truncf %112 : vector<4x8x8xf32> to vector<4x8x8xbf16>
    %114 = vector.shape_cast %107 : vector<32x8xf32> to vector<4x8x8xf32>
    %115 = arith.truncf %114 : vector<4x8x8xf32> to vector<4x8x8xbf16>
    %116 = vector.shape_cast %110 : vector<32x8xf32> to vector<4x8x8xf32>
    %117 = arith.truncf %116 : vector<4x8x8xf32> to vector<4x8x8xbf16>
    %cst_71 = arith.constant dense<0.000000e+00> : vector<4x8x8xf32>
    %118 = tpu.matmul %113, %115, %cst_71 {dimension_numbers = #tpu.dot_dimension_numbers<[2], [1], [1], [2], [0, 0, 0, 1, 1, 2], [0], [0]>} : vector<4x8x8xbf16>, vector<4x8x8xbf16>, vector<4x8x8xf32> -> vector<4x8x8xf32>
    %cst_72 = arith.constant 0.353553385 : f32
    %119 = vector.broadcast %cst_72 : f32 to vector<4x8x8xf32>
    %120 = arith.mulf %118, %119 : vector<4x8x8xf32>
    %121 = vector.extract_strided_slice %25 {offsets = [1, 0], sizes = [1, 8], strides = [1, 1]} : vector<2x8xf32> to vector<1x8xf32>
    %122 = vector.shape_cast %121 : vector<1x8xf32> to vector<1x1x8xf32>
    %123 = vector.broadcast %122 : vector<1x1x8xf32> to vector<4x8x8xf32>
    %124 = arith.addf %120, %123 : vector<4x8x8xf32>
    %cst_73 = arith.constant dense<0xFF800000> : vector<4x8xf32>
    %125 = vector.multi_reduction <maximumf>, %124, %cst_73 [2] : vector<4x8x8xf32> to vector<4x8xf32>
    %126 = vector.shape_cast %125 : vector<4x8xf32> to vector<4x8x1xf32>
    %127 = vector.broadcast %126 : vector<4x8x1xf32> to vector<4x8x8xf32>
    %128 = arith.subf %124, %127 : vector<4x8x8xf32>
    %129 = math.exp %128 : vector<4x8x8xf32>
    %cst_74 = arith.constant dense<0.000000e+00> : vector<4x8xf32>
    %130 = vector.multi_reduction <add>, %129, %cst_74 [2] : vector<4x8x8xf32> to vector<4x8xf32>
    %131 = vector.shape_cast %130 : vector<4x8xf32> to vector<4x8x1xf32>
    %132 = tpu.reciprocal %131 {approx = true} : vector<4x8x1xf32> -> vector<4x8x1xf32>
    %133 = vector.broadcast %132 : vector<4x8x1xf32> to vector<4x8x8xf32>
    %134 = arith.mulf %129, %133 : vector<4x8x8xf32>
    %135 = arith.truncf %134 : vector<4x8x8xf32> to vector<4x8x8xbf16>
    %cst_75 = arith.constant dense<0.000000e+00> : vector<4x8x8xf32>
    %136 = tpu.matmul %117, %135, %cst_75 {dimension_numbers = #tpu.dot_dimension_numbers<[2], [2], [1], [1], [0, 0, 0, 1, 1, 1], [0], [0]>} : vector<4x8x8xbf16>, vector<4x8x8xbf16>, vector<4x8x8xf32> -> vector<4x8x8xf32>
    %137 = vector.shape_cast %136 : vector<4x8x8xf32> to vector<32x8xf32>
    %138 = arith.truncf %137 : vector<32x8xf32> to vector<32x8xbf16>
    %cst_76 = arith.constant dense<0.000000e+00> : vector<8x32xf32>
    %139 = tpu.matmul %138, %39, %cst_76 {dimension_numbers = #tpu.dot_dimension_numbers<[0], [0], [1], [1], [0, 1, 1, 1], [], []>} : vector<32x8xbf16>, vector<32x32xbf16>, vector<8x32xf32> -> vector<8x32xf32>
    %140 = vector.broadcast %41 : vector<1x32xf32> to vector<8x32xf32>
    %141 = arith.addf %139, %140 : vector<8x32xf32>
    %142 = tpu.concatenate %99, %141 in 0 : vector<8x32xf32>, vector<8x32xf32> -> vector<16x32xf32>
    %143 = arith.addf %24, %142 : vector<16x32xf32>
    %cst_77 = arith.constant dense<0.000000e+00> : vector<16xf32>
    %144 = vector.multi_reduction <add>, %143, %cst_77 [1] : vector<16x32xf32> to vector<16xf32>
    %145 = vector.shape_cast %144 : vector<16xf32> to vector<16x1xf32>
    %cst_78 = arith.constant 3.200000e+01 : f32
    %146 = vector.broadcast %cst_78 : f32 to vector<16x1xf32>
    %147 = arith.divf %145, %146 : vector<16x1xf32>
    %148 = vector.broadcast %147 : vector<16x1xf32> to vector<16x32xf32>
    %149 = arith.subf %143, %148 : vector<16x32xf32>
    %150 = arith.mulf %149, %149 : vector<16x32xf32>
    %cst_79 = arith.constant dense<0.000000e+00> : vector<16xf32>
    %151 = vector.multi_reduction <add>, %150, %cst_79 [1] : vector<16x32xf32> to vector<16xf32>
    %152 = vector.shape_cast %151 : vector<16xf32> to vector<16x1xf32>
    %cst_80 = arith.constant 3.200000e+01 : f32
    %153 = vector.broadcast %cst_80 : f32 to vector<16x1xf32>
    %154 = arith.divf %152, %153 : vector<16x1xf32>
    %155 = vector.broadcast %147 : vector<16x1xf32> to vector<16x32xf32>
    %156 = arith.subf %143, %155 : vector<16x32xf32>
    %cst_81 = arith.constant 9.99999974E-6 : f32
    %157 = vector.broadcast %cst_81 : f32 to vector<16x1xf32>
    %158 = arith.addf %154, %157 : vector<16x1xf32>
    %159 = math.rsqrt %158 : vector<16x1xf32>
    %160 = vector.broadcast %159 : vector<16x1xf32> to vector<16x32xf32>
    %161 = arith.mulf %156, %160 : vector<16x32xf32>
    %162 = vector.broadcast %43 : vector<1x32xf32> to vector<16x32xf32>
    %163 = arith.mulf %161, %162 : vector<16x32xf32>
    %164 = vector.broadcast %45 : vector<1x32xf32> to vector<16x32xf32>
    %165 = arith.addf %163, %164 : vector<16x32xf32>
    %166 = arith.truncf %165 : vector<16x32xf32> to vector<16x32xbf16>
    %cst_82 = arith.constant dense<0.000000e+00> : vector<16x64xf32>
    %167 = tpu.matmul %166, %47, %cst_82 {dimension_numbers = #tpu.dot_dimension_numbers<[1], [0], [0], [1], [0, 0, 1, 1], [], []>} : vector<16x32xbf16>, vector<32x64xbf16>, vector<16x64xf32> -> vector<16x64xf32>
    %168 = vector.broadcast %49 : vector<1x64xf32> to vector<16x64xf32>
    %169 = arith.addf %167, %168 : vector<16x64xf32>
    %cst_83 = arith.constant 5.000000e-01 : f32
    %170 = vector.broadcast %cst_83 : f32 to vector<16x64xf32>
    %171 = arith.mulf %170, %169 : vector<16x64xf32>
    %cst_84 = arith.constant 4.471500e-02 : f32
    %172 = vector.broadcast %cst_84 : f32 to vector<16x64xf32>
    %173 = arith.mulf %172, %169 : vector<16x64xf32>
    %174 = arith.mulf %173, %169 : vector<16x64xf32>
    %175 = arith.mulf %174, %169 : vector<16x64xf32>
    %176 = arith.addf %169, %175 : vector<16x64xf32>
    %cst_85 = arith.constant 0.797884583 : f32
    %177 = vector.broadcast %cst_85 : f32 to vector<16x64xf32>
    %178 = arith.mulf %177, %176 : vector<16x64xf32>
    %179 = math.tanh %178 : vector<16x64xf32>
    %cst_86 = arith.constant 1.000000e+00 : f32
    %180 = vector.broadcast %cst_86 : f32 to vector<16x64xf32>
    %181 = arith.addf %180, %179 : vector<16x64xf32>
    %182 = arith.mulf %171, %181 : vector<16x64xf32>
    %183 = arith.truncf %182 : vector<16x64xf32> to vector<16x64xbf16>
    %cst_87 = arith.constant dense<0.000000e+00> : vector<16x32xf32>
    %184 = tpu.matmul %183, %51, %cst_87 {dimension_numbers = #tpu.dot_dimension_numbers<[1], [0], [0], [1], [0, 0, 1, 1], [], []>} : vector<16x64xbf16>, vector<64x32xbf16>, vector<16x32xf32> -> vector<16x32xf32>
    %185 = vector.broadcast %53 : vector<1x32xf32> to vector<16x32xf32>
    %186 = arith.addf %184, %185 : vector<16x32xf32>
    %187 = arith.addf %165, %186 : vector<16x32xf32>
    %cst_88 = arith.constant dense<0.000000e+00> : vector<16xf32>
    %188 = vector.multi_reduction <add>, %187, %cst_88 [1] : vector<16x32xf32> to vector<16xf32>
    %189 = vector.shape_cast %188 : vector<16xf32> to vector<16x1xf32>
    %cst_89 = arith.constant 3.200000e+01 : f32
    %190 = vector.broadcast %cst_89 : f32 to vector<16x1xf32>
    %191 = arith.divf %189, %190 : vector<16x1xf32>
    %192 = vector.broadcast %191 : vector<16x1xf32> to vector<16x32xf32>
    %193 = arith.subf %187, %192 : vector<16x32xf32>
    %194 = arith.mulf %193, %193 : vector<16x32xf32>
    %cst_90 = arith.constant dense<0.000000e+00> : vector<16xf32>
    %195 = vector.multi_reduction <add>, %194, %cst_90 [1] : vector<16x32xf32> to vector<16xf32>
    %196 = vector.shape_cast %195 : vector<16xf32> to vector<16x1xf32>
    %cst_91 = arith.constant 3.200000e+01 : f32
    %197 = vector.broadcast %cst_91 : f32 to vector<16x1xf32>
    %198 = arith.divf %196, %197 : vector<16x1xf32>
    %199 = vector.broadcast %191 : vector<16x1xf32> to vector<16x32xf32>
    %200 = arith.subf %187, %199 : vector<16x32xf32>
    %cst_92 = arith.constant 9.99999974E-6 : f32
    %201 = vector.broadcast %cst_92 : f32 to vector<16x1xf32>
    %202 = arith.addf %198, %201 : vector<16x1xf32>
    %203 = math.rsqrt %202 : vector<16x1xf32>
    %204 = vector.broadcast %203 : vector<16x1xf32> to vector<16x32xf32>
    %205 = arith.mulf %200, %204 : vector<16x32xf32>
    %206 = vector.broadcast %55 : vector<1x32xf32> to vector<16x32xf32>
    %207 = arith.mulf %205, %206 : vector<16x32xf32>
    %208 = vector.broadcast %57 : vector<1x32xf32> to vector<16x32xf32>
    %209 = arith.addf %207, %208 : vector<16x32xf32>
    %c1 = arith.constant 1 : index
    %c0_93 = arith.constant 0 : index
    %c0_94 = arith.constant 0 : index
    %210 = vector.load %arg4[%c1, %c0_93, %c0_94] : memref<2x32x32xbf16, #tpu.memory_space<vmem>>, vector<1x32x32xbf16>
    %211 = vector.shape_cast %210 : vector<1x32x32xbf16> to vector<32x32xbf16>
    %c1_95 = arith.constant 1 : index
    %c0_96 = arith.constant 0 : index
    %c0_97 = arith.constant 0 : index
    %212 = vector.load %arg5[%c1_95, %c0_96, %c0_97] : memref<2x32x1xf32, #tpu.memory_space<vmem>>, vector<1x32x1xf32>
    %213 = vector.shape_cast %212 : vector<1x32x1xf32> to vector<32x1xf32>
    %c1_98 = arith.constant 1 : index
    %c0_99 = arith.constant 0 : index
    %c0_100 = arith.constant 0 : index
    %214 = vector.load %arg6[%c1_98, %c0_99, %c0_100] : memref<2x32x32xbf16, #tpu.memory_space<vmem>>, vector<1x32x32xbf16>
    %215 = vector.shape_cast %214 : vector<1x32x32xbf16> to vector<32x32xbf16>
    %c1_101 = arith.constant 1 : index
    %c0_102 = arith.constant 0 : index
    %c0_103 = arith.constant 0 : index
    %216 = vector.load %arg7[%c1_101, %c0_102, %c0_103] : memref<2x32x1xf32, #tpu.memory_space<vmem>>, vector<1x32x1xf32>
    %217 = vector.shape_cast %216 : vector<1x32x1xf32> to vector<32x1xf32>
    %c1_104 = arith.constant 1 : index
    %c0_105 = arith.constant 0 : index
    %c0_106 = arith.constant 0 : index
    %218 = vector.load %arg8[%c1_104, %c0_105, %c0_106] : memref<2x32x32xbf16, #tpu.memory_space<vmem>>, vector<1x32x32xbf16>
    %219 = vector.shape_cast %218 : vector<1x32x32xbf16> to vector<32x32xbf16>
    %c1_107 = arith.constant 1 : index
    %c0_108 = arith.constant 0 : index
    %c0_109 = arith.constant 0 : index
    %220 = vector.load %arg9[%c1_107, %c0_108, %c0_109] : memref<2x32x1xf32, #tpu.memory_space<vmem>>, vector<1x32x1xf32>
    %221 = vector.shape_cast %220 : vector<1x32x1xf32> to vector<32x1xf32>
    %c1_110 = arith.constant 1 : index
    %c0_111 = arith.constant 0 : index
    %c0_112 = arith.constant 0 : index
    %222 = vector.load %arg10[%c1_110, %c0_111, %c0_112] : memref<2x32x32xbf16, #tpu.memory_space<vmem>>, vector<1x32x32xbf16>
    %223 = vector.shape_cast %222 : vector<1x32x32xbf16> to vector<32x32xbf16>
    %c1_113 = arith.constant 1 : index
    %c0_114 = arith.constant 0 : index
    %c0_115 = arith.constant 0 : index
    %224 = vector.load %arg11[%c1_113, %c0_114, %c0_115] : memref<2x1x32xf32, #tpu.memory_space<vmem>>, vector<1x1x32xf32>
    %225 = vector.shape_cast %224 : vector<1x1x32xf32> to vector<1x32xf32>
    %c1_116 = arith.constant 1 : index
    %c0_117 = arith.constant 0 : index
    %c0_118 = arith.constant 0 : index
    %226 = vector.load %arg12[%c1_116, %c0_117, %c0_118] : memref<2x1x32xf32, #tpu.memory_space<vmem>>, vector<1x1x32xf32>
    %227 = vector.shape_cast %226 : vector<1x1x32xf32> to vector<1x32xf32>
    %c1_119 = arith.constant 1 : index
    %c0_120 = arith.constant 0 : index
    %c0_121 = arith.constant 0 : index
    %228 = vector.load %arg13[%c1_119, %c0_120, %c0_121] : memref<2x1x32xf32, #tpu.memory_space<vmem>>, vector<1x1x32xf32>
    %229 = vector.shape_cast %228 : vector<1x1x32xf32> to vector<1x32xf32>
    %c1_122 = arith.constant 1 : index
    %c0_123 = arith.constant 0 : index
    %c0_124 = arith.constant 0 : index
    %230 = vector.load %arg14[%c1_122, %c0_123, %c0_124] : memref<2x32x64xbf16, #tpu.memory_space<vmem>>, vector<1x32x64xbf16>
    %231 = vector.shape_cast %230 : vector<1x32x64xbf16> to vector<32x64xbf16>
    %c1_125 = arith.constant 1 : index
    %c0_126 = arith.constant 0 : index
    %c0_127 = arith.constant 0 : index
    %232 = vector.load %arg15[%c1_125, %c0_126, %c0_127] : memref<2x1x64xf32, #tpu.memory_space<vmem>>, vector<1x1x64xf32>
    %233 = vector.shape_cast %232 : vector<1x1x64xf32> to vector<1x64xf32>
    %c1_128 = arith.constant 1 : index
    %c0_129 = arith.constant 0 : index
    %c0_130 = arith.constant 0 : index
    %234 = vector.load %arg16[%c1_128, %c0_129, %c0_130] : memref<2x64x32xbf16, #tpu.memory_space<vmem>>, vector<1x64x32xbf16>
    %235 = vector.shape_cast %234 : vector<1x64x32xbf16> to vector<64x32xbf16>
    %c1_131 = arith.constant 1 : index
    %c0_132 = arith.constant 0 : index
    %c0_133 = arith.constant 0 : index
    %236 = vector.load %arg17[%c1_131, %c0_132, %c0_133] : memref<2x1x32xf32, #tpu.memory_space<vmem>>, vector<1x1x32xf32>
    %237 = vector.shape_cast %236 : vector<1x1x32xf32> to vector<1x32xf32>
    %c1_134 = arith.constant 1 : index
    %c0_135 = arith.constant 0 : index
    %c0_136 = arith.constant 0 : index
    %238 = vector.load %arg18[%c1_134, %c0_135, %c0_136] : memref<2x1x32xf32, #tpu.memory_space<vmem>>, vector<1x1x32xf32>
    %239 = vector.shape_cast %238 : vector<1x1x32xf32> to vector<1x32xf32>
    %c1_137 = arith.constant 1 : index
    %c0_138 = arith.constant 0 : index
    %c0_139 = arith.constant 0 : index
    %240 = vector.load %arg19[%c1_137, %c0_138, %c0_139] : memref<2x1x32xf32, #tpu.memory_space<vmem>>, vector<1x1x32xf32>
    %241 = vector.shape_cast %240 : vector<1x1x32xf32> to vector<1x32xf32>
    %242 = vector.extract_strided_slice %209 {offsets = [0, 0], sizes = [8, 32], strides = [1, 1]} : vector<16x32xf32> to vector<8x32xf32>
    %243 = arith.truncf %242 : vector<8x32xf32> to vector<8x32xbf16>
    %cst_140 = arith.constant dense<0.000000e+00> : vector<32x8xf32>
    %244 = tpu.matmul %211, %243, %cst_140 {dimension_numbers = #tpu.dot_dimension_numbers<[1], [1], [0], [0], [0, 0, 1, 0], [], []>} : vector<32x32xbf16>, vector<8x32xbf16>, vector<32x8xf32> -> vector<32x8xf32>
    %245 = vector.broadcast %213 : vector<32x1xf32> to vector<32x8xf32>
    %246 = arith.addf %244, %245 : vector<32x8xf32>
    %cst_141 = arith.constant dense<0.000000e+00> : vector<32x8xf32>
    %247 = tpu.matmul %215, %243, %cst_141 {dimension_numbers = #tpu.dot_dimension_numbers<[1], [1], [0], [0], [0, 0, 1, 0], [], []>} : vector<32x32xbf16>, vector<8x32xbf16>, vector<32x8xf32> -> vector<32x8xf32>
    %248 = vector.broadcast %217 : vector<32x1xf32> to vector<32x8xf32>
    %249 = arith.addf %247, %248 : vector<32x8xf32>
    %cst_142 = arith.constant dense<0.000000e+00> : vector<32x8xf32>
    %250 = tpu.matmul %219, %243, %cst_142 {dimension_numbers = #tpu.dot_dimension_numbers<[1], [1], [0], [0], [0, 0, 1, 0], [], []>} : vector<32x32xbf16>, vector<8x32xbf16>, vector<32x8xf32> -> vector<32x8xf32>
    %251 = vector.broadcast %221 : vector<32x1xf32> to vector<32x8xf32>
    %252 = arith.addf %250, %251 : vector<32x8xf32>
    %253 = vector.shape_cast %246 : vector<32x8xf32> to vector<4x8x8xf32>
    %254 = tpu.transpose %253, [0, 2, 1] : vector<4x8x8xf32> -> vector<4x8x8xf32>
    %255 = arith.truncf %254 : vector<4x8x8xf32> to vector<4x8x8xbf16>
    %256 = vector.shape_cast %249 : vector<32x8xf32> to vector<4x8x8xf32>
    %257 = arith.truncf %256 : vector<4x8x8xf32> to vector<4x8x8xbf16>
    %258 = vector.shape_cast %252 : vector<32x8xf32> to vector<4x8x8xf32>
    %259 = arith.truncf %258 : vector<4x8x8xf32> to vector<4x8x8xbf16>
    %cst_143 = arith.constant dense<0.000000e+00> : vector<4x8x8xf32>
    %260 = tpu.matmul %255, %257, %cst_143 {dimension_numbers = #tpu.dot_dimension_numbers<[2], [1], [1], [2], [0, 0, 0, 1, 1, 2], [0], [0]>} : vector<4x8x8xbf16>, vector<4x8x8xbf16>, vector<4x8x8xf32> -> vector<4x8x8xf32>
    %cst_144 = arith.constant 0.353553385 : f32
    %261 = vector.broadcast %cst_144 : f32 to vector<4x8x8xf32>
    %262 = arith.mulf %260, %261 : vector<4x8x8xf32>
    %263 = vector.extract_strided_slice %25 {offsets = [0, 0], sizes = [1, 8], strides = [1, 1]} : vector<2x8xf32> to vector<1x8xf32>
    %264 = vector.shape_cast %263 : vector<1x8xf32> to vector<1x1x8xf32>
    %265 = vector.broadcast %264 : vector<1x1x8xf32> to vector<4x8x8xf32>
    %266 = arith.addf %262, %265 : vector<4x8x8xf32>
    %cst_145 = arith.constant dense<0xFF800000> : vector<4x8xf32>
    %267 = vector.multi_reduction <maximumf>, %266, %cst_145 [2] : vector<4x8x8xf32> to vector<4x8xf32>
    %268 = vector.shape_cast %267 : vector<4x8xf32> to vector<4x8x1xf32>
    %269 = vector.broadcast %268 : vector<4x8x1xf32> to vector<4x8x8xf32>
    %270 = arith.subf %266, %269 : vector<4x8x8xf32>
    %271 = math.exp %270 : vector<4x8x8xf32>
    %cst_146 = arith.constant dense<0.000000e+00> : vector<4x8xf32>
    %272 = vector.multi_reduction <add>, %271, %cst_146 [2] : vector<4x8x8xf32> to vector<4x8xf32>
    %273 = vector.shape_cast %272 : vector<4x8xf32> to vector<4x8x1xf32>
    %274 = tpu.reciprocal %273 {approx = true} : vector<4x8x1xf32> -> vector<4x8x1xf32>
    %275 = vector.broadcast %274 : vector<4x8x1xf32> to vector<4x8x8xf32>
    %276 = arith.mulf %271, %275 : vector<4x8x8xf32>
    %277 = arith.truncf %276 : vector<4x8x8xf32> to vector<4x8x8xbf16>
    %cst_147 = arith.constant dense<0.000000e+00> : vector<4x8x8xf32>
    %278 = tpu.matmul %259, %277, %cst_147 {dimension_numbers = #tpu.dot_dimension_numbers<[2], [2], [1], [1], [0, 0, 0, 1, 1, 1], [0], [0]>} : vector<4x8x8xbf16>, vector<4x8x8xbf16>, vector<4x8x8xf32> -> vector<4x8x8xf32>
    %279 = vector.shape_cast %278 : vector<4x8x8xf32> to vector<32x8xf32>
    %280 = arith.truncf %279 : vector<32x8xf32> to vector<32x8xbf16>
    %cst_148 = arith.constant dense<0.000000e+00> : vector<8x32xf32>
    %281 = tpu.matmul %280, %223, %cst_148 {dimension_numbers = #tpu.dot_dimension_numbers<[0], [0], [1], [1], [0, 1, 1, 1], [], []>} : vector<32x8xbf16>, vector<32x32xbf16>, vector<8x32xf32> -> vector<8x32xf32>
    %282 = vector.broadcast %225 : vector<1x32xf32> to vector<8x32xf32>
    %283 = arith.addf %281, %282 : vector<8x32xf32>
    %284 = vector.extract_strided_slice %209 {offsets = [8, 0], sizes = [8, 32], strides = [1, 1]} : vector<16x32xf32> to vector<8x32xf32>
    %285 = arith.truncf %284 : vector<8x32xf32> to vector<8x32xbf16>
    %cst_149 = arith.constant dense<0.000000e+00> : vector<32x8xf32>
    %286 = tpu.matmul %211, %285, %cst_149 {dimension_numbers = #tpu.dot_dimension_numbers<[1], [1], [0], [0], [0, 0, 1, 0], [], []>} : vector<32x32xbf16>, vector<8x32xbf16>, vector<32x8xf32> -> vector<32x8xf32>
    %287 = vector.broadcast %213 : vector<32x1xf32> to vector<32x8xf32>
    %288 = arith.addf %286, %287 : vector<32x8xf32>
    %cst_150 = arith.constant dense<0.000000e+00> : vector<32x8xf32>
    %289 = tpu.matmul %215, %285, %cst_150 {dimension_numbers = #tpu.dot_dimension_numbers<[1], [1], [0], [0], [0, 0, 1, 0], [], []>} : vector<32x32xbf16>, vector<8x32xbf16>, vector<32x8xf32> -> vector<32x8xf32>
    %290 = vector.broadcast %217 : vector<32x1xf32> to vector<32x8xf32>
    %291 = arith.addf %289, %290 : vector<32x8xf32>
    %cst_151 = arith.constant dense<0.000000e+00> : vector<32x8xf32>
    %292 = tpu.matmul %219, %285, %cst_151 {dimension_numbers = #tpu.dot_dimension_numbers<[1], [1], [0], [0], [0, 0, 1, 0], [], []>} : vector<32x32xbf16>, vector<8x32xbf16>, vector<32x8xf32> -> vector<32x8xf32>
    %293 = vector.broadcast %221 : vector<32x1xf32> to vector<32x8xf32>
    %294 = arith.addf %292, %293 : vector<32x8xf32>
    %295 = vector.shape_cast %288 : vector<32x8xf32> to vector<4x8x8xf32>
    %296 = tpu.transpose %295, [0, 2, 1] : vector<4x8x8xf32> -> vector<4x8x8xf32>
    %297 = arith.truncf %296 : vector<4x8x8xf32> to vector<4x8x8xbf16>
    %298 = vector.shape_cast %291 : vector<32x8xf32> to vector<4x8x8xf32>
    %299 = arith.truncf %298 : vector<4x8x8xf32> to vector<4x8x8xbf16>
    %300 = vector.shape_cast %294 : vector<32x8xf32> to vector<4x8x8xf32>
    %301 = arith.truncf %300 : vector<4x8x8xf32> to vector<4x8x8xbf16>
    %cst_152 = arith.constant dense<0.000000e+00> : vector<4x8x8xf32>
    %302 = tpu.matmul %297, %299, %cst_152 {dimension_numbers = #tpu.dot_dimension_numbers<[2], [1], [1], [2], [0, 0, 0, 1, 1, 2], [0], [0]>} : vector<4x8x8xbf16>, vector<4x8x8xbf16>, vector<4x8x8xf32> -> vector<4x8x8xf32>
    %cst_153 = arith.constant 0.353553385 : f32
    %303 = vector.broadcast %cst_153 : f32 to vector<4x8x8xf32>
    %304 = arith.mulf %302, %303 : vector<4x8x8xf32>
    %305 = vector.extract_strided_slice %25 {offsets = [1, 0], sizes = [1, 8], strides = [1, 1]} : vector<2x8xf32> to vector<1x8xf32>
    %306 = vector.shape_cast %305 : vector<1x8xf32> to vector<1x1x8xf32>
    %307 = vector.broadcast %306 : vector<1x1x8xf32> to vector<4x8x8xf32>
    %308 = arith.addf %304, %307 : vector<4x8x8xf32>
    %cst_154 = arith.constant dense<0xFF800000> : vector<4x8xf32>
    %309 = vector.multi_reduction <maximumf>, %308, %cst_154 [2] : vector<4x8x8xf32> to vector<4x8xf32>
    %310 = vector.shape_cast %309 : vector<4x8xf32> to vector<4x8x1xf32>
    %311 = vector.broadcast %310 : vector<4x8x1xf32> to vector<4x8x8xf32>
    %312 = arith.subf %308, %311 : vector<4x8x8xf32>
    %313 = math.exp %312 : vector<4x8x8xf32>
    %cst_155 = arith.constant dense<0.000000e+00> : vector<4x8xf32>
    %314 = vector.multi_reduction <add>, %313, %cst_155 [2] : vector<4x8x8xf32> to vector<4x8xf32>
    %315 = vector.shape_cast %314 : vector<4x8xf32> to vector<4x8x1xf32>
    %316 = tpu.reciprocal %315 {approx = true} : vector<4x8x1xf32> -> vector<4x8x1xf32>
    %317 = vector.broadcast %316 : vector<4x8x1xf32> to vector<4x8x8xf32>
    %318 = arith.mulf %313, %317 : vector<4x8x8xf32>
    %319 = arith.truncf %318 : vector<4x8x8xf32> to vector<4x8x8xbf16>
    %cst_156 = arith.constant dense<0.000000e+00> : vector<4x8x8xf32>
    %320 = tpu.matmul %301, %319, %cst_156 {dimension_numbers = #tpu.dot_dimension_numbers<[2], [2], [1], [1], [0, 0, 0, 1, 1, 1], [0], [0]>} : vector<4x8x8xbf16>, vector<4x8x8xbf16>, vector<4x8x8xf32> -> vector<4x8x8xf32>
    %321 = vector.shape_cast %320 : vector<4x8x8xf32> to vector<32x8xf32>
    %322 = arith.truncf %321 : vector<32x8xf32> to vector<32x8xbf16>
    %cst_157 = arith.constant dense<0.000000e+00> : vector<8x32xf32>
    %323 = tpu.matmul %322, %223, %cst_157 {dimension_numbers = #tpu.dot_dimension_numbers<[0], [0], [1], [1], [0, 1, 1, 1], [], []>} : vector<32x8xbf16>, vector<32x32xbf16>, vector<8x32xf32> -> vector<8x32xf32>
    %324 = vector.broadcast %225 : vector<1x32xf32> to vector<8x32xf32>
    %325 = arith.addf %323, %324 : vector<8x32xf32>
    %326 = tpu.concatenate %283, %325 in 0 : vector<8x32xf32>, vector<8x32xf32> -> vector<16x32xf32>
    %327 = arith.addf %209, %326 : vector<16x32xf32>
    %cst_158 = arith.constant dense<0.000000e+00> : vector<16xf32>
    %328 = vector.multi_reduction <add>, %327, %cst_158 [1] : vector<16x32xf32> to vector<16xf32>
    %329 = vector.shape_cast %328 : vector<16xf32> to vector<16x1xf32>
    %cst_159 = arith.constant 3.200000e+01 : f32
    %330 = vector.broadcast %cst_159 : f32 to vector<16x1xf32>
    %331 = arith.divf %329, %330 : vector<16x1xf32>
    %332 = vector.broadcast %331 : vector<16x1xf32> to vector<16x32xf32>
    %333 = arith.subf %327, %332 : vector<16x32xf32>
    %334 = arith.mulf %333, %333 : vector<16x32xf32>
    %cst_160 = arith.constant dense<0.000000e+00> : vector<16xf32>
    %335 = vector.multi_reduction <add>, %334, %cst_160 [1] : vector<16x32xf32> to vector<16xf32>
    %336 = vector.shape_cast %335 : vector<16xf32> to vector<16x1xf32>
    %cst_161 = arith.constant 3.200000e+01 : f32
    %337 = vector.broadcast %cst_161 : f32 to vector<16x1xf32>
    %338 = arith.divf %336, %337 : vector<16x1xf32>
    %339 = vector.broadcast %331 : vector<16x1xf32> to vector<16x32xf32>
    %340 = arith.subf %327, %339 : vector<16x32xf32>
    %cst_162 = arith.constant 9.99999974E-6 : f32
    %341 = vector.broadcast %cst_162 : f32 to vector<16x1xf32>
    %342 = arith.addf %338, %341 : vector<16x1xf32>
    %343 = math.rsqrt %342 : vector<16x1xf32>
    %344 = vector.broadcast %343 : vector<16x1xf32> to vector<16x32xf32>
    %345 = arith.mulf %340, %344 : vector<16x32xf32>
    %346 = vector.broadcast %227 : vector<1x32xf32> to vector<16x32xf32>
    %347 = arith.mulf %345, %346 : vector<16x32xf32>
    %348 = vector.broadcast %229 : vector<1x32xf32> to vector<16x32xf32>
    %349 = arith.addf %347, %348 : vector<16x32xf32>
    %350 = arith.truncf %349 : vector<16x32xf32> to vector<16x32xbf16>
    %cst_163 = arith.constant dense<0.000000e+00> : vector<16x64xf32>
    %351 = tpu.matmul %350, %231, %cst_163 {dimension_numbers = #tpu.dot_dimension_numbers<[1], [0], [0], [1], [0, 0, 1, 1], [], []>} : vector<16x32xbf16>, vector<32x64xbf16>, vector<16x64xf32> -> vector<16x64xf32>
    %352 = vector.broadcast %233 : vector<1x64xf32> to vector<16x64xf32>
    %353 = arith.addf %351, %352 : vector<16x64xf32>
    %cst_164 = arith.constant 5.000000e-01 : f32
    %354 = vector.broadcast %cst_164 : f32 to vector<16x64xf32>
    %355 = arith.mulf %354, %353 : vector<16x64xf32>
    %cst_165 = arith.constant 4.471500e-02 : f32
    %356 = vector.broadcast %cst_165 : f32 to vector<16x64xf32>
    %357 = arith.mulf %356, %353 : vector<16x64xf32>
    %358 = arith.mulf %357, %353 : vector<16x64xf32>
    %359 = arith.mulf %358, %353 : vector<16x64xf32>
    %360 = arith.addf %353, %359 : vector<16x64xf32>
    %cst_166 = arith.constant 0.797884583 : f32
    %361 = vector.broadcast %cst_166 : f32 to vector<16x64xf32>
    %362 = arith.mulf %361, %360 : vector<16x64xf32>
    %363 = math.tanh %362 : vector<16x64xf32>
    %cst_167 = arith.constant 1.000000e+00 : f32
    %364 = vector.broadcast %cst_167 : f32 to vector<16x64xf32>
    %365 = arith.addf %364, %363 : vector<16x64xf32>
    %366 = arith.mulf %355, %365 : vector<16x64xf32>
    %367 = arith.truncf %366 : vector<16x64xf32> to vector<16x64xbf16>
    %cst_168 = arith.constant dense<0.000000e+00> : vector<16x32xf32>
    %368 = tpu.matmul %367, %235, %cst_168 {dimension_numbers = #tpu.dot_dimension_numbers<[1], [0], [0], [1], [0, 0, 1, 1], [], []>} : vector<16x64xbf16>, vector<64x32xbf16>, vector<16x32xf32> -> vector<16x32xf32>
    %369 = vector.broadcast %237 : vector<1x32xf32> to vector<16x32xf32>
    %370 = arith.addf %368, %369 : vector<16x32xf32>
    %371 = arith.addf %349, %370 : vector<16x32xf32>
    %cst_169 = arith.constant dense<0.000000e+00> : vector<16xf32>
    %372 = vector.multi_reduction <add>, %371, %cst_169 [1] : vector<16x32xf32> to vector<16xf32>
    %373 = vector.shape_cast %372 : vector<16xf32> to vector<16x1xf32>
    %cst_170 = arith.constant 3.200000e+01 : f32
    %374 = vector.broadcast %cst_170 : f32 to vector<16x1xf32>
    %375 = arith.divf %373, %374 : vector<16x1xf32>
    %376 = vector.broadcast %375 : vector<16x1xf32> to vector<16x32xf32>
    %377 = arith.subf %371, %376 : vector<16x32xf32>
    %378 = arith.mulf %377, %377 : vector<16x32xf32>
    %cst_171 = arith.constant dense<0.000000e+00> : vector<16xf32>
    %379 = vector.multi_reduction <add>, %378, %cst_171 [1] : vector<16x32xf32> to vector<16xf32>
    %380 = vector.shape_cast %379 : vector<16xf32> to vector<16x1xf32>
    %cst_172 = arith.constant 3.200000e+01 : f32
    %381 = vector.broadcast %cst_172 : f32 to vector<16x1xf32>
    %382 = arith.divf %380, %381 : vector<16x1xf32>
    %383 = vector.broadcast %375 : vector<16x1xf32> to vector<16x32xf32>
    %384 = arith.subf %371, %383 : vector<16x32xf32>
    %cst_173 = arith.constant 9.99999974E-6 : f32
    %385 = vector.broadcast %cst_173 : f32 to vector<16x1xf32>
    %386 = arith.addf %382, %385 : vector<16x1xf32>
    %387 = math.rsqrt %386 : vector<16x1xf32>
    %388 = vector.broadcast %387 : vector<16x1xf32> to vector<16x32xf32>
    %389 = arith.mulf %384, %388 : vector<16x32xf32>
    %390 = vector.broadcast %239 : vector<1x32xf32> to vector<16x32xf32>
    %391 = arith.mulf %389, %390 : vector<16x32xf32>
    %392 = vector.broadcast %241 : vector<1x32xf32> to vector<16x32xf32>
    %393 = arith.addf %391, %392 : vector<16x32xf32>
    %394 = arith.truncf %393 : vector<16x32xf32> to vector<16x32xbf16>
    %c0_174 = arith.constant 0 : index
    %c0_175 = arith.constant 0 : index
    %395 = vector.load %arg20[%c0_174, %c0_175] : memref<32x128xbf16, #tpu.memory_space<vmem>>, vector<32x128xbf16>
    %cst_176 = arith.constant dense<0.000000e+00> : vector<16x128xf32>
    %396 = tpu.matmul %394, %395, %cst_176 {dimension_numbers = #tpu.dot_dimension_numbers<[1], [0], [0], [1], [0, 0, 1, 1], [], []>} : vector<16x32xbf16>, vector<32x128xbf16>, vector<16x128xf32> -> vector<16x128xf32>
    %c0_177 = arith.constant 0 : index
    %c0_178 = arith.constant 0 : index
    %397 = vector.load %arg21[%c0_177, %c0_178] : memref<1x128xf32, #tpu.memory_space<vmem>>, vector<1x128xf32>
    %398 = vector.broadcast %397 : vector<1x128xf32> to vector<16x128xf32>
    %399 = arith.addf %396, %398 : vector<16x128xf32>
    %cst_179 = arith.constant 0.000000e+00 : f32
    %400 = vector.broadcast %cst_179 : f32 to vector<16x128xf32>
    %401 = arith.maximumf %399, %400 : vector<16x128xf32>
    %402 = arith.truncf %401 : vector<16x128xf32> to vector<16x128xbf16>
    %c0_180 = arith.constant 0 : index
    %c0_181 = arith.constant 0 : index
    %403 = vector.load %arg22[%c0_180, %c0_181] : memref<128x128xbf16, #tpu.memory_space<vmem>>, vector<128x128xbf16>
    %cst_182 = arith.constant dense<0.000000e+00> : vector<16x128xf32>
    %404 = tpu.matmul %402, %403, %cst_182 {dimension_numbers = #tpu.dot_dimension_numbers<[1], [0], [0], [1], [0, 0, 1, 1], [], []>} : vector<16x128xbf16>, vector<128x128xbf16>, vector<16x128xf32> -> vector<16x128xf32>
    %c0_183 = arith.constant 0 : index
    %c0_184 = arith.constant 0 : index
    %405 = vector.load %arg23[%c0_183, %c0_184] : memref<1x128xf32, #tpu.memory_space<vmem>>, vector<1x128xf32>
    %406 = vector.broadcast %405 : vector<1x128xf32> to vector<16x128xf32>
    %407 = arith.addf %404, %406 : vector<16x128xf32>
    %c0_185 = arith.constant 0 : index
    %c0_186 = arith.constant 0 : index
    %408 = vector.load %arg24[%c0_185, %c0_186] : memref<16x128xf32, #tpu.memory_space<vmem>>, vector<16x128xf32>
    tpu.vector_store %arg24[%c0_185, %c0_186], %407 {strides = array<i32>} : memref<16x128xf32, #tpu.memory_space<vmem>>, vector<16x128xf32>,
    return
  }
}

</mosaic_0001>

<llo_original>
// kernel: custom_nli_forward.1
$region0: #{custom_nli_forward.1}
  #allocation0 [shape = 'u32[]', space=smem, size = 0x4, offset = 0x4, fixed_abs, tag = 'smem constant byte address 0x4 - core index']
  #allocation1 [shape = 'u32[144,128]{1,0:T(1,128)}', space=vmem, size = 0x12000, scoped, tag = 'internal scratch']
  %s0 = inlined_call_operand.vmem [shape: f32[16,32], index: 0, kind: input, shape index: {}]
  %s1 = inlined_call_operand.vmem [shape: f32[2,8], index: 1, kind: input, shape index: {}]
  %s2 = inlined_call_operand.vmem [shape: f32[1,32], index: 2, kind: input, shape index: {}]
  %s3 = inlined_call_operand.vmem [shape: f32[1,32], index: 3, kind: input, shape index: {}]
  %s4 = inlined_call_operand.vmem [shape: bf16[2,32,32], index: 4, kind: input, shape index: {}]
  %s5 = inlined_call_operand.vmem [shape: f32[2,32,1], index: 5, kind: input, shape index: {}]
  %s6 = inlined_call_operand.vmem [shape: bf16[2,32,32], index: 6, kind: input, shape index: {}]
  %s7 = inlined_call_operand.vmem [shape: f32[2,32,1], index: 7, kind: input, shape index: {}]
  %s8 = inlined_call_operand.vmem [shape: bf16[2,32,32], index: 8, kind: input, shape index: {}]
  %s9 = inlined_call_operand.vmem [shape: f32[2,32,1], index: 9, kind: input, shape index: {}]
  %s10 = inlined_call_operand.vmem [shape: bf16[2,32,32], index: 10, kind: input, shape index: {}]
  %s11 = inlined_call_operand.vmem [shape: f32[2,1,32], index: 11, kind: input, shape index: {}]
  %s12 = inlined_call_operand.vmem [shape: f32[2,1,32], index: 12, kind: input, shape index: {}]
  %s13 = inlined_call_operand.vmem [shape: f32[2,1,32], index: 13, kind: input, shape index: {}]
  %s14 = inlined_call_operand.vmem [shape: bf16[2,32,64], index: 14, kind: input, shape index: {}]
  %s15 = inlined_call_operand.vmem [shape: f32[2,1,64], index: 15, kind: input, shape index: {}]
  %s16 = inlined_call_operand.vmem [shape: bf16[2,64,32], index: 16, kind: input, shape index: {}]
  %s17 = inlined_call_operand.vmem [shape: f32[2,1,32], index: 17, kind: input, shape index: {}]
  %s18 = inlined_call_operand.vmem [shape: f32[2,1,32], index: 18, kind: input, shape index: {}]
  %s19 = inlined_call_operand.vmem [shape: f32[2,1,32], index: 19, kind: input, shape index: {}]
  %s20 = inlined_call_operand.vmem [shape: bf16[32,128], index: 20, kind: input, shape index: {}]
  %s21 = inlined_call_operand.vmem [shape: f32[1,128], index: 21, kind: input, shape index: {}]
  %s22 = inlined_call_operand.vmem [shape: bf16[128,128], index: 22, kind: input, shape index: {}]
  %s23 = inlined_call_operand.vmem [shape: f32[1,128], index: 23, kind: input, shape index: {}]
  %s24 = inlined_call_operand.vmem [shape: f32[16,128], index: 24, kind: output, shape index: {}]
  %s25 = sld [smem:[#allocation0]]
  $region106: #{custom_nli_forward.1} parent=0
    _
  %s27 = ssub.s32 1, %s25
  %s28 = scalar_select 0, %s27, %s25
  // Predicated region
  $region2: #{custom_nli_forward.1} parent=0 // pred_check
    _
  $region3: #{custom_nli_forward.1} parent=0 // pred_check_branch
    %30 = sbr.rel (0) target = $region5
  $region4: #{custom_nli_forward.1} parent=0 // pred_region
    _
  $region5: #{custom_nli_forward.1} parent=0 // pred_fallthru
    _
  // Predicated region
  $region6: #{custom_nli_forward.1} parent=0 // pred_check
    _
  $region7: #{custom_nli_forward.1} parent=0 // pred_check_branch
    %32 = sbr.rel (0) target = $region9
  $region8: #{custom_nli_forward.1} parent=0 // pred_region
    _
  $region9: #{custom_nli_forward.1} parent=0 // pred_fallthru
    _
  // Predicated region
  $region10: #{custom_nli_forward.1} parent=0 // pred_check
    _
  $region11: #{custom_nli_forward.1} parent=0 // pred_check_branch
    %34 = sbr.rel (0) target = $region13
  $region12: #{custom_nli_forward.1} parent=0 // pred_region
    _
  $region13: #{custom_nli_forward.1} parent=0 // pred_fallthru
    _
  // Predicated region
  $region14: #{custom_nli_forward.1} parent=0 // pred_check
    _
  $region15: #{custom_nli_forward.1} parent=0 // pred_check_branch
    %36 = sbr.rel (0) target = $region17
  $region16: #{custom_nli_forward.1} parent=0 // pred_region
    _
  $region17: #{custom_nli_forward.1} parent=0 // pred_fallthru
    _
  // Predicated region
  $region18: #{custom_nli_forward.1} parent=0 // pred_check
    _
  $region19: #{custom_nli_forward.1} parent=0 // pred_check_branch
    %38 = sbr.rel (0) target = $region21
  $region20: #{custom_nli_forward.1} parent=0 // pred_region
    _
  $region21: #{custom_nli_forward.1} parent=0 // pred_fallthru
    _
  // Predicated region
  $region22: #{custom_nli_forward.1} parent=0 // pred_check
    _
  $region23: #{custom_nli_forward.1} parent=0 // pred_check_branch
    %40 = sbr.rel (0) target = $region25
  $region24: #{custom_nli_forward.1} parent=0 // pred_region
    _
  $region25: #{custom_nli_forward.1} parent=0 // pred_fallthru
    _
  // Predicated region
  $region26: #{custom_nli_forward.1} parent=0 // pred_check
    _
  $region27: #{custom_nli_forward.1} parent=0 // pred_check_branch
    %42 = sbr.rel (0) target = $region29
  $region28: #{custom_nli_forward.1} parent=0 // pred_region
    _
  $region29: #{custom_nli_forward.1} parent=0 // pred_fallthru
    _
  // Predicated region
  $region30: #{custom_nli_forward.1} parent=0 // pred_check
    _
  $region31: #{custom_nli_forward.1} parent=0 // pred_check_branch
    %44 = sbr.rel (0) target = $region33
  $region32: #{custom_nli_forward.1} parent=0 // pred_region
    _
  $region33: #{custom_nli_forward.1} parent=0 // pred_fallthru
    _
  // Predicated region
  $region34: #{custom_nli_forward.1} parent=0 // pred_check
    _
  $region35: #{custom_nli_forward.1} parent=0 // pred_check_branch
    %46 = sbr.rel (0) target = $region37
  $region36: #{custom_nli_forward.1} parent=0 // pred_region
    _
  $region37: #{custom_nli_forward.1} parent=0 // pred_fallthru
    _
  // Predicated region
  $region38: #{custom_nli_forward.1} parent=0 // pred_check
    _
  $region39: #{custom_nli_forward.1} parent=0 // pred_check_branch
    %48 = sbr.rel (0) target = $region41
  $region40: #{custom_nli_forward.1} parent=0 // pred_region
    _
  $region41: #{custom_nli_forward.1} parent=0 // pred_fallthru
    _
  // Predicated region
  $region42: #{custom_nli_forward.1} parent=0 // pred_check
    _
  $region43: #{custom_nli_forward.1} parent=0 // pred_check_branch
    %50 = sbr.rel (0) target = $region45
  $region44: #{custom_nli_forward.1} parent=0 // pred_region
    _
  $region45: #{custom_nli_forward.1} parent=0 // pred_fallthru
    _
  // Predicated region
  $region46: #{custom_nli_forward.1} parent=0 // pred_check
    _
  $region47: #{custom_nli_forward.1} parent=0 // pred_check_branch
    %52 = sbr.rel (0) target = $region49
  $region48: #{custom_nli_forward.1} parent=0 // pred_region
    _
  $region49: #{custom_nli_forward.1} parent=0 // pred_fallthru
    _
  // Predicated region
  $region50: #{custom_nli_forward.1} parent=0 // pred_check
    _
  $region51: #{custom_nli_forward.1} parent=0 // pred_check_branch
    %54 = sbr.rel (0) target = $region53
  $region52: #{custom_nli_forward.1} parent=0 // pred_region
    _
  $region53: #{custom_nli_forward.1} parent=0 // pred_fallthru
    _
  // Predicated region
  $region54: #{custom_nli_forward.1} parent=0 // pred_check
    _
  $region55: #{custom_nli_forward.1} parent=0 // pred_check_branch
    %56 = sbr.rel (0) target = $region57
  $region56: #{custom_nli_forward.1} parent=0 // pred_region
    _
  $region57: #{custom_nli_forward.1} parent=0 // pred_fallthru
    _
  // Predicated region
  $region58: #{custom_nli_forward.1} parent=0 // pred_check
    _
  $region59: #{custom_nli_forward.1} parent=0 // pred_check_branch
    %58 = sbr.rel (0) target = $region61
  $region60: #{custom_nli_forward.1} parent=0 // pred_region
    _
  $region61: #{custom_nli_forward.1} parent=0 // pred_fallthru
    _
  // Predicated region
  $region62: #{custom_nli_forward.1} parent=0 // pred_check
    _
  $region63: #{custom_nli_forward.1} parent=0 // pred_check_branch
    %60 = sbr.rel (0) target = $region65
  $region64: #{custom_nli_forward.1} parent=0 // pred_region
    _
  $region65: #{custom_nli_forward.1} parent=0 // pred_fallthru
    _
  // Predicated region
  $region66: #{custom_nli_forward.1} parent=0 // pred_check
    _
  $region67: #{custom_nli_forward.1} parent=0 // pred_check_branch
    %62 = sbr.rel (0) target = $region69
  $region68: #{custom_nli_forward.1} parent=0 // pred_region
    _
  $region69: #{custom_nli_forward.1} parent=0 // pred_fallthru
    _
  // Predicated region
  $region70: #{custom_nli_forward.1} parent=0 // pred_check
    _
  $region71: #{custom_nli_forward.1} parent=0 // pred_check_branch
    %64 = sbr.rel (0) target = $region73
  $region72: #{custom_nli_forward.1} parent=0 // pred_region
    _
  $region73: #{custom_nli_forward.1} parent=0 // pred_fallthru
    _
  // Predicated region
  $region74: #{custom_nli_forward.1} parent=0 // pred_check
    _
  $region75: #{custom_nli_forward.1} parent=0 // pred_check_branch
    %66 = sbr.rel (0) target = $region77
  $region76: #{custom_nli_forward.1} parent=0 // pred_region
    _
  $region77: #{custom_nli_forward.1} parent=0 // pred_fallthru
    _
  // Predicated region
  $region78: #{custom_nli_forward.1} parent=0 // pred_check
    _
  $region79: #{custom_nli_forward.1} parent=0 // pred_check_branch
    %68 = sbr.rel (0) target = $region81
  $region80: #{custom_nli_forward.1} parent=0 // pred_region
    _
  $region81: #{custom_nli_forward.1} parent=0 // pred_fallthru
    _
  // Predicated region
  $region82: #{custom_nli_forward.1} parent=0 // pred_check
    _
  $region83: #{custom_nli_forward.1} parent=0 // pred_check_branch
    %70 = sbr.rel (0) target = $region85
  $region84: #{custom_nli_forward.1} parent=0 // pred_region
    _
  $region85: #{custom_nli_forward.1} parent=0 // pred_fallthru
    _
  // Predicated region
  $region86: #{custom_nli_forward.1} parent=0 // pred_check
    _
  $region87: #{custom_nli_forward.1} parent=0 // pred_check_branch
    %72 = sbr.rel (0) target = $region89
  $region88: #{custom_nli_forward.1} parent=0 // pred_region
    _
  $region89: #{custom_nli_forward.1} parent=0 // pred_fallthru
    _
  // Predicated region
  $region90: #{custom_nli_forward.1} parent=0 // pred_check
    _
  $region91: #{custom_nli_forward.1} parent=0 // pred_check_branch
    %74 = sbr.rel (0) target = $region93
  $region92: #{custom_nli_forward.1} parent=0 // pred_region
    _
  $region93: #{custom_nli_forward.1} parent=0 // pred_fallthru
    _
  // Predicated region
  $region94: #{custom_nli_forward.1} parent=0 // pred_check
    _
  $region95: #{custom_nli_forward.1} parent=0 // pred_check_branch
    %76 = sbr.rel (0) target = $region97
  $region96: #{custom_nli_forward.1} parent=0 // pred_region
    _
  $region97: #{custom_nli_forward.1} parent=0 // pred_fallthru
    _
  %v78 = vld [vmem:[%s0] sm:$0xff]
  %v79 = vld [vmem:[%s0 + $0x8] sm:$0xff]
  %v80 = vld [vmem:[%s2] sm:$0x1]
  %v81 = vld [vmem:[%s3] sm:$0x1]
  %vm82 = vcmask 261120
  %v83 = vsel %vm82, %v78, 0.0
  %84 = vadd.xlane.f32.xlu0 %v83
  %v85 = vpop.xlane.xlu0 %84
  %v86 = vsel %vm82, %v79, 0.0
  %87 = vadd.xlane.f32.xlu0 %v86
  %v88 = vpop.xlane.xlu0 %87
  %v89 = vrcp.pop 32.0
  %v90 = vmul.f32 %v85, %v89
  %v91 = vmul.f32 %v88, %v89
  %v92 = vsub.f32 %v78, %v90
  %v93 = vsub.f32 %v79, %v91
  %v94 = vmul.f32 %v92, %v92
  %v95 = vmul.f32 %v93, %v93
  %v96 = vsel %vm82, %v94, 0.0
  %97 = vadd.xlane.f32.xlu0 %v96
  %v98 = vpop.xlane.xlu0 %97
  %v99 = vsel %vm82, %v95, 0.0
  %100 = vadd.xlane.f32.xlu0 %v99
  %v101 = vpop.xlane.xlu0 %100
  %v102 = vmul.f32 %v98, %v89
  %v103 = vmul.f32 %v101, %v89
  %v104 = vadd.f32 %v102, 1e-05
  %v105 = vadd.f32 %v103, 1e-05
  %v106 = vrsqrt.pop %v104
  %v107 = vrsqrt.pop %v105
  %v108 = vmul.f32 %v92, %v106
  %v109 = vmul.f32 %v93, %v107
  %v111 = vlaneseq
  %v112 = vshrl.u32 %v111, 7
  %v113 = vsub.s32 0, %v112
  %v114 = vrot.slane %v80, %v113
  %v116 = vmul.f32 %v108, %v114
  %v117 = vmul.f32 %v109, %v114
  %v119 = vlaneseq
  %v120 = vshrl.u32 %v119, 7
  %v121 = vsub.s32 0, %v120
  %v122 = vrot.slane %v81, %v121
  %v124 = vadd.f32 %v116, %v122
  %v125 = vadd.f32 %v117, %v122
  %v126 = vld [vmem:[%s1] sm:$0x3]
  %v127 = vld [vmem:[%s4] sm:$0xf]
  %v128 = vld [vmem:[%s4 + $0x4] sm:$0xf]
  %v129 = vld [vmem:[%s4 + $0x8] sm:$0xf]
  %v130 = vld [vmem:[%s4 + $0xc] sm:$0xf]
  %v131 = vld [vmem:[%s5] sm:$0xff]
  %v132 = vld [vmem:[%s5 + $0x8] sm:$0xff]
  %v133 = vld [vmem:[%s5 + $0x10] sm:$0xff]
  %v134 = vld [vmem:[%s5 + $0x18] sm:$0xff]
  %v135 = vld [vmem:[%s6] sm:$0xf]
  %v136 = vld [vmem:[%s6 + $0x4] sm:$0xf]
  %v137 = vld [vmem:[%s6 + $0x8] sm:$0xf]
  %v138 = vld [vmem:[%s6 + $0xc] sm:$0xf]
  %v139 = vld [vmem:[%s7] sm:$0xff]
  %v140 = vld [vmem:[%s7 + $0x8] sm:$0xff]
  %v141 = vld [vmem:[%s7 + $0x10] sm:$0xff]
  %v142 = vld [vmem:[%s7 + $0x18] sm:$0xff]
  %v143 = vld [vmem:[%s8] sm:$0xf]
  %v144 = vld [vmem:[%s8 + $0x4] sm:$0xf]
  %v145 = vld [vmem:[%s8 + $0x8] sm:$0xf]
  %v146 = vld [vmem:[%s8 + $0xc] sm:$0xf]
  %v147 = vld [vmem:[%s9] sm:$0xff]
  %v148 = vld [vmem:[%s9 + $0x8] sm:$0xff]
  %v149 = vld [vmem:[%s9 + $0x10] sm:$0xff]
  %v150 = vld [vmem:[%s9 + $0x18] sm:$0xff]
  %v151 = vld [vmem:[%s10] sm:$0xf]
  %v152 = vld [vmem:[%s10 + $0x4] sm:$0xf]
  %v153 = vld [vmem:[%s10 + $0x8] sm:$0xf]
  %v154 = vld [vmem:[%s10 + $0xc] sm:$0xf]
  %v155 = vld [vmem:[%s11] sm:$0x1]
  %v156 = vld [vmem:[%s12] sm:$0x1]
  %v157 = vld [vmem:[%s13] sm:$0x1]
  %v158 = vld [vmem:[%s14] sm:$0xf]
  %v159 = vld [vmem:[%s14 + $0x4] sm:$0xf]
  %v160 = vld [vmem:[%s14 + $0x8] sm:$0xf]
  %v161 = vld [vmem:[%s14 + $0xc] sm:$0xf]
  %v162 = vld [vmem:[%s15] sm:$0x1]
  %v163 = vld [vmem:[%s16] sm:$0xf]
  %v164 = vld [vmem:[%s16 + $0x4] sm:$0xf]
  %v165 = vld [vmem:[%s16 + $0x8] sm:$0xf]
  %v166 = vld [vmem:[%s16 + $0xc] sm:$0xf]
  %v167 = vld [vmem:[%s16 + $0x10] sm:$0xf]
  %v168 = vld [vmem:[%s16 + $0x14] sm:$0xf]
  %v169 = vld [vmem:[%s16 + $0x18] sm:$0xf]
  %v170 = vld [vmem:[%s16 + $0x1c] sm:$0xf]
  %v171 = vld [vmem:[%s17] sm:$0x1]
  %v172 = vld [vmem:[%s18] sm:$0x1]
  %v173 = vld [vmem:[%s19] sm:$0x1]
  %v174 = vpack.c.bf16 %v124, %v124
  %176 = vset.pattern.permute.xlu0 0
  %177 = vperm.xlu0 %176, %v131
  %v178 = vpop.permute.xlu0 %177
  %181 = vset.pattern.permute.xlu0 0
  %182 = vperm.xlu0 %181, %v132
  %v183 = vpop.permute.xlu0 %182
  %186 = vset.pattern.permute.xlu0 0
  %187 = vperm.xlu0 %186, %v133
  %v188 = vpop.permute.xlu0 %187
  %191 = vset.pattern.permute.xlu0 0
  %192 = vperm.xlu0 %191, %v134
  %v193 = vpop.permute.xlu0 %192
  %v199 = vunpack.c.l.b16 %v127
  %v200 = vunpack.c.l.b16 %v128
  %v201 = vunpack.c.l.b16 %v129
  %v202 = vunpack.c.l.b16 %v130
  %v203 = vpack.c.b16 %v200, %v199
  %v204 = vpack.c.b16 %v202, %v201
  %v206 = vsel %vm82, %v203, 0
  %v209 = vsel %vm82, %v204, 0
  %v212 = vsel %vm82, %v174, 0
  %214 = vmatprep.subr.bf16.mxu0 0
  %215 = vmatpush1.bf16.xpose.msra.mxu0 %v212
  %216 = vmatprep.subr.bf16.mxu0 0
  %217 = vmatpush1.bf16.xpose.msra.mxu0 0
  %218 = vmatprep.subr.bf16.mxu0 0
  %219 = vmatpush1.bf16.xpose.msra.mxu0 0
  %220 = vmatprep.subr.bf16.mxu0 0
  %221 = vmatpush1.bf16.xpose.msra.mxu0 0
  %222 = vmatprep.subr.bf16.mxu0 0
  %223 = vmatpush1.bf16.xpose.msra.mxu0 0
  %224 = vmatprep.subr.bf16.mxu0 0
  %225 = vmatpush1.bf16.xpose.msra.mxu0 0
  %226 = vmatprep.subr.bf16.mxu0 0
  %227 = vmatpush1.bf16.xpose.msra.mxu0 0
  %228 = vmatprep.subr.bf16.mxu0 0
  %229 = vmatpush1.bf16.xpose.msra.mxu0 0
  %230 = vmatprep.subr.bf16.mxu0 0
  %231 = vmatpush1.bf16.xpose.msra.mxu0 0
  %232 = vmatprep.subr.bf16.mxu0 0
  %233 = vmatpush1.bf16.xpose.msra.mxu0 0
  %234 = vmatprep.subr.bf16.mxu0 0
  %235 = vmatpush1.bf16.xpose.msra.mxu0 0
  %236 = vmatprep.subr.bf16.mxu0 0
  %237 = vmatpush1.bf16.xpose.msra.mxu0 0
  %238 = vmatprep.subr.bf16.mxu0 0
  %239 = vmatpush1.bf16.xpose.msra.mxu0 0
  %240 = vmatprep.subr.bf16.mxu0 0
  %241 = vmatpush1.bf16.xpose.msra.mxu0 0
  %242 = vmatprep.subr.bf16.mxu0 0
  %243 = vmatpush1.bf16.xpose.msra.mxu0 0
  %244 = vmatprep.subr.bf16.mxu0 0
  %245 = vmatpush1.bf16.xpose.msra.mxu0 0
  %246 = vmatprep.mubr.bf16.mxu0 0
  %247 = vmatmul.mubr.bf16.gmra.mrb[0].mxu0 %v206
  %v248 = vpop.f32.mrb[0].mxu0
  %v249 = vadd.f32 %v178, %v248
  %v250 = vpop.f32.mrb[0].mxu0
  %v251 = vpop.f32.mrb[0].mxu0
  %v252 = vadd.f32 %v183, %v251
  %v253 = vpop.f32.mrb[0].mxu0
  %254 = vmatprep.mubr.bf16.mxu0 0
  %255 = vmatmul.mubr.bf16.gmra.mrb[0].mxu0 %v209
  %v256 = vpop.f32.mrb[0].mxu0
  %v257 = vadd.f32 %v188, %v256
  %v258 = vpop.f32.mrb[0].mxu0
  %v259 = vpop.f32.mrb[0].mxu0
  %v260 = vadd.f32 %v193, %v259
  %v261 = vpop.f32.mrb[0].mxu0
  %262 = vdwg.mxu0
  %264 = vset.pattern.permute.xlu0 0
  %265 = vperm.xlu0 %264, %v139
  %v266 = vpop.permute.xlu0 %265
  %269 = vset.pattern.permute.xlu0 0
  %270 = vperm.xlu0 %269, %v140
  %v271 = vpop.permute.xlu0 %270
  %274 = vset.pattern.permute.xlu0 0
  %275 = vperm.xlu0 %274, %v141
  %v276 = vpop.permute.xlu0 %275
  %279 = vset.pattern.permute.xlu0 0
  %280 = vperm.xlu0 %279, %v142
  %v281 = vpop.permute.xlu0 %280
  %v287 = vunpack.c.l.b16 %v135
  %v288 = vunpack.c.l.b16 %v136
  %v289 = vunpack.c.l.b16 %v137
  %v290 = vunpack.c.l.b16 %v138
  %v291 = vpack.c.b16 %v288, %v287
  %v292 = vpack.c.b16 %v290, %v289
  %v294 = vsel %vm82, %v291, 0
  %v297 = vsel %vm82, %v292, 0
  %299 = vmatprep.subr.bf16.mxu0 0
  %300 = vmatpush1.bf16.xpose.msra.mxu0 %v212
  %301 = vmatprep.subr.bf16.mxu0 0
  %302 = vmatpush1.bf16.xpose.msra.mxu0 0
  %303 = vmatprep.subr.bf16.mxu0 0
  %304 = vmatpush1.bf16.xpose.msra.mxu0 0
  %305 = vmatprep.subr.bf16.mxu0 0
  %306 = vmatpush1.bf16.xpose.msra.mxu0 0
  %307 = vmatprep.subr.bf16.mxu0 0
  %308 = vmatpush1.bf16.xpose.msra.mxu0 0
  %309 = vmatprep.subr.bf16.mxu0 0
  %310 = vmatpush1.bf16.xpose.msra.mxu0 0
  %311 = vmatprep.subr.bf16.mxu0 0
  %312 = vmatpush1.bf16.xpose.msra.mxu0 0
  %313 = vmatprep.subr.bf16.mxu0 0
  %314 = vmatpush1.bf16.xpose.msra.mxu0 0
  %315 = vmatprep.subr.bf16.mxu0 0
  %316 = vmatpush1.bf16.xpose.msra.mxu0 0
  %317 = vmatprep.subr.bf16.mxu0 0
  %318 = vmatpush1.bf16.xpose.msra.mxu0 0
  %319 = vmatprep.subr.bf16.mxu0 0
  %320 = vmatpush1.bf16.xpose.msra.mxu0 0
  %321 = vmatprep.subr.bf16.mxu0 0
  %322 = vmatpush1.bf16.xpose.msra.mxu0 0
  %323 = vmatprep.subr.bf16.mxu0 0
  %324 = vmatpush1.bf16.xpose.msra.mxu0 0
  %325 = vmatprep.subr.bf16.mxu0 0
  %326 = vmatpush1.bf16.xpose.msra.mxu0 0
  %327 = vmatprep.subr.bf16.mxu0 0
  %328 = vmatpush1.bf16.xpose.msra.mxu0 0
  %329 = vmatprep.subr.bf16.mxu0 0
  %330 = vmatpush1.bf16.xpose.msra.mxu0 0
  %331 = vmatprep.mubr.bf16.mxu0 0
  %332 = vmatmul.mubr.bf16.gmra.mrb[0].mxu0 %v294
  %v333 = vpop.f32.mrb[0].mxu0
  %v334 = vadd.f32 %v266, %v333
  %v335 = vpop.f32.mrb[0].mxu0
  %v336 = vpop.f32.mrb[0].mxu0
  %v337 = vadd.f32 %v271, %v336
  %v338 = vpop.f32.mrb[0].mxu0
  %339 = vmatprep.mubr.bf16.mxu0 0
  %340 = vmatmul.mubr.bf16.gmra.mrb[0].mxu0 %v297
  %v341 = vpop.f32.mrb[0].mxu0
  %v342 = vadd.f32 %v276, %v341
  %v343 = vpop.f32.mrb[0].mxu0
  %v344 = vpop.f32.mrb[0].mxu0
  %v345 = vadd.f32 %v281, %v344
  %v346 = vpop.f32.mrb[0].mxu0
  %347 = vdwg.mxu0
  %349 = vset.pattern.permute.xlu0 0
  %350 = vperm.xlu0 %349, %v147
  %v351 = vpop.permute.xlu0 %350
  %354 = vset.pattern.permute.xlu0 0
  %355 = vperm.xlu0 %354, %v148
  %v356 = vpop.permute.xlu0 %355
  %359 = vset.pattern.permute.xlu0 0
  %360 = vperm.xlu0 %359, %v149
  %v361 = vpop.permute.xlu0 %360
  %364 = vset.pattern.permute.xlu0 0
  %365 = vperm.xlu0 %364, %v150
  %v366 = vpop.permute.xlu0 %365
  %v372 = vunpack.c.l.b16 %v143
  %v373 = vunpack.c.l.b16 %v144
  %v374 = vunpack.c.l.b16 %v145
  %v375 = vunpack.c.l.b16 %v146
  %v376 = vpack.c.b16 %v373, %v372
  %v377 = vpack.c.b16 %v375, %v374
  %v379 = vsel %vm82, %v376, 0
  %v382 = vsel %vm82, %v377, 0
  %384 = vmatprep.subr.bf16.mxu0 0
  %385 = vmatpush1.bf16.xpose.msra.mxu0 %v212
  %386 = vmatprep.subr.bf16.mxu0 0
  %387 = vmatpush1.bf16.xpose.msra.mxu0 0
  %388 = vmatprep.subr.bf16.mxu0 0
  %389 = vmatpush1.bf16.xpose.msra.mxu0 0
  %390 = vmatprep.subr.bf16.mxu0 0
  %391 = vmatpush1.bf16.xpose.msra.mxu0 0
  %392 = vmatprep.subr.bf16.mxu0 0
  %393 = vmatpush1.bf16.xpose.msra.mxu0 0
  %394 = vmatprep.subr.bf16.mxu0 0
  %395 = vmatpush1.bf16.xpose.msra.mxu0 0
  %396 = vmatprep.subr.bf16.mxu0 0
  %397 = vmatpush1.bf16.xpose.msra.mxu0 0
  %398 = vmatprep.subr.bf16.mxu0 0
  %399 = vmatpush1.bf16.xpose.msra.mxu0 0
  %400 = vmatprep.subr.bf16.mxu0 0
  %401 = vmatpush1.bf16.xpose.msra.mxu0 0
  %402 = vmatprep.subr.bf16.mxu0 0
  %403 = vmatpush1.bf16.xpose.msra.mxu0 0
  %404 = vmatprep.subr.bf16.mxu0 0
  %405 = vmatpush1.bf16.xpose.msra.mxu0 0
  %406 = vmatprep.subr.bf16.mxu0 0
  %407 = vmatpush1.bf16.xpose.msra.mxu0 0
  %408 = vmatprep.subr.bf16.mxu0 0
  %409 = vmatpush1.bf16.xpose.msra.mxu0 0
  %410 = vmatprep.subr.bf16.mxu0 0
  %411 = vmatpush1.bf16.xpose.msra.mxu0 0
  %412 = vmatprep.subr.bf16.mxu0 0
  %413 = vmatpush1.bf16.xpose.msra.mxu0 0
  %414 = vmatprep.subr.bf16.mxu0 0
  %415 = vmatpush1.bf16.xpose.msra.mxu0 0
  %416 = vmatprep.mubr.bf16.mxu0 0
  %417 = vmatmul.mubr.bf16.gmra.mrb[0].mxu0 %v379
  %v418 = vpop.f32.mrb[0].mxu0
  %v419 = vadd.f32 %v351, %v418
  %v420 = vpop.f32.mrb[0].mxu0
  %v421 = vpop.f32.mrb[0].mxu0
  %v422 = vadd.f32 %v356, %v421
  %v423 = vpop.f32.mrb[0].mxu0
  %424 = vmatprep.mubr.bf16.mxu0 0
  %425 = vmatmul.mubr.bf16.gmra.mrb[0].mxu0 %v382
  %v426 = vpop.f32.mrb[0].mxu0
  %v427 = vadd.f32 %v361, %v426
  %v428 = vpop.f32.mrb[0].mxu0
  %v429 = vpop.f32.mrb[0].mxu0
  %v430 = vadd.f32 %v366, %v429
  %v431 = vpop.f32.mrb[0].mxu0
  %432 = vdwg.mxu0
  %433 = vxpose.xlu0.b32.start [1/16] %v249, 128
  %434 = vxpose.xlu0.b32.cont [2/16] 0.0, 128
  %435 = vxpose.xlu0.b32.cont [3/16] 0.0, 128
  %436 = vxpose.xlu0.b32.cont [4/16] 0.0, 128
  %437 = vxpose.xlu0.b32.cont [5/16] 0.0, 128
  %438 = vxpose.xlu0.b32.cont [6/16] 0.0, 128
  %439 = vxpose.xlu0.b32.cont [7/16] 0.0, 128
  %440 = vxpose.xlu0.b32.cont [8/16] 0.0, 128
  %441 = vxpose.xlu0.b32.cont [9/16] 0.0, 128
  %442 = vxpose.xlu0.b32.cont [10/16] 0.0, 128
  %443 = vxpose.xlu0.b32.cont [11/16] 0.0, 128
  %444 = vxpose.xlu0.b32.cont [12/16] 0.0, 128
  %445 = vxpose.xlu0.b32.cont [13/16] 0.0, 128
  %446 = vxpose.xlu0.b32.cont [14/16] 0.0, 128
  %447 = vxpose.xlu0.b32.cont [15/16] 0.0, 128
  %448 = vxpose.xlu0.b32.end [16/16] 0.0, 128
  %v449 = vpop.trf.xlu0
  %v450 = vpop.trf.xlu0
  %v451 = vpop.trf.xlu0
  %v452 = vpop.trf.xlu0
  %v453 = vpop.trf.xlu0
  %v454 = vpop.trf.xlu0
  %v455 = vpop.trf.xlu0
  %v456 = vpop.trf.xlu0
  %v457 = vpop.trf.xlu0
  %v458 = vpop.trf.xlu0
  %v459 = vpop.trf.xlu0
  %v460 = vpop.trf.xlu0
  %v461 = vpop.trf.xlu0
  %v462 = vpop.trf.xlu0
  %v463 = vpop.trf.xlu0
  %v464 = vpop.trf.xlu0
  %465 = vxpose.xlu0.b32.start [1/16] %v252, 128
  %466 = vxpose.xlu0.b32.cont [2/16] 0.0, 128
  %467 = vxpose.xlu0.b32.cont [3/16] 0.0, 128
  %468 = vxpose.xlu0.b32.cont [4/16] 0.0, 128
  %469 = vxpose.xlu0.b32.cont [5/16] 0.0, 128
  %470 = vxpose.xlu0.b32.cont [6/16] 0.0, 128
  %471 = vxpose.xlu0.b32.cont [7/16] 0.0, 128
  %472 = vxpose.xlu0.b32.cont [8/16] 0.0, 128
  %473 = vxpose.xlu0.b32.cont [9/16] 0.0, 128
  %474 = vxpose.xlu0.b32.cont [10/16] 0.0, 128
  %475 = vxpose.xlu0.b32.cont [11/16] 0.0, 128
  %476 = vxpose.xlu0.b32.cont [12/16] 0.0, 128
  %477 = vxpose.xlu0.b32.cont [13/16] 0.0, 128
  %478 = vxpose.xlu0.b32.cont [14/16] 0.0, 128
  %479 = vxpose.xlu0.b32.cont [15/16] 0.0, 128
  %480 = vxpose.xlu0.b32.end [16/16] 0.0, 128
  %v481 = vpop.trf.xlu0
  %v482 = vpop.trf.xlu0
  %v483 = vpop.trf.xlu0
  %v484 = vpop.trf.xlu0
  %v485 = vpop.trf.xlu0
  %v486 = vpop.trf.xlu0
  %v487 = vpop.trf.xlu0
  %v488 = vpop.trf.xlu0
  %v489 = vpop.trf.xlu0
  %v490 = vpop.trf.xlu0
  %v491 = vpop.trf.xlu0
  %v492 = vpop.trf.xlu0
  %v493 = vpop.trf.xlu0
  %v494 = vpop.trf.xlu0
  %v495 = vpop.trf.xlu0
  %v496 = vpop.trf.xlu0
  %497 = vxpose.xlu0.b32.start [1/16] %v257, 128
  %498 = vxpose.xlu0.b32.cont [2/16] 0.0, 128
  %499 = vxpose.xlu0.b32.cont [3/16] 0.0, 128
  %500 = vxpose.xlu0.b32.cont [4/16] 0.0, 128
  %501 = vxpose.xlu0.b32.cont [5/16] 0.0, 128
  %502 = vxpose.xlu0.b32.cont [6/16] 0.0, 128
  %503 = vxpose.xlu0.b32.cont [7/16] 0.0, 128
  %504 = vxpose.xlu0.b32.cont [8/16] 0.0, 128
  %505 = vxpose.xlu0.b32.cont [9/16] 0.0, 128
  %506 = vxpose.xlu0.b32.cont [10/16] 0.0, 128
  %507 = vxpose.xlu0.b32.cont [11/16] 0.0, 128
  %508 = vxpose.xlu0.b32.cont [12/16] 0.0, 128
  %509 = vxpose.xlu0.b32.cont [13/16] 0.0, 128
  %510 = vxpose.xlu0.b32.cont [14/16] 0.0, 128
  %511 = vxpose.xlu0.b32.cont [15/16] 0.0, 128
  %512 = vxpose.xlu0.b32.end [16/16] 0.0, 128
  %v513 = vpop.trf.xlu0
  %v514 = vpop.trf.xlu0
  %v515 = vpop.trf.xlu0
  %v516 = vpop.trf.xlu0
  %v517 = vpop.trf.xlu0
  %v518 = vpop.trf.xlu0
  %v519 = vpop.trf.xlu0
  %v520 = vpop.trf.xlu0
  %v521 = vpop.trf.xlu0
  %v522 = vpop.trf.xlu0
  %v523 = vpop.trf.xlu0
  %v524 = vpop.trf.xlu0
  %v525 = vpop.trf.xlu0
  %v526 = vpop.trf.xlu0
  %v527 = vpop.trf.xlu0
  %v528 = vpop.trf.xlu0
  %529 = vxpose.xlu0.b32.start [1/16] %v260, 128
  %530 = vxpose.xlu0.b32.cont [2/16] 0.0, 128
  %531 = vxpose.xlu0.b32.cont [3/16] 0.0, 128
  %532 = vxpose.xlu0.b32.cont [4/16] 0.0, 128
  %533 = vxpose.xlu0.b32.cont [5/16] 0.0, 128
  %534 = vxpose.xlu0.b32.cont [6/16] 0.0, 128
  %535 = vxpose.xlu0.b32.cont [7/16] 0.0, 128
  %536 = vxpose.xlu0.b32.cont [8/16] 0.0, 128
  %537 = vxpose.xlu0.b32.cont [9/16] 0.0, 128
  %538 = vxpose.xlu0.b32.cont [10/16] 0.0, 128
  %539 = vxpose.xlu0.b32.cont [11/16] 0.0, 128
  %540 = vxpose.xlu0.b32.cont [12/16] 0.0, 128
  %541 = vxpose.xlu0.b32.cont [13/16] 0.0, 128
  %542 = vxpose.xlu0.b32.cont [14/16] 0.0, 128
  %543 = vxpose.xlu0.b32.cont [15/16] 0.0, 128
  %544 = vxpose.xlu0.b32.end [16/16] 0.0, 128
  %v545 = vpop.trf.xlu0
  %v546 = vpop.trf.xlu0
  %v547 = vpop.trf.xlu0
  %v548 = vpop.trf.xlu0
  %v549 = vpop.trf.xlu0
  %v550 = vpop.trf.xlu0
  %v551 = vpop.trf.xlu0
  %v552 = vpop.trf.xlu0
  %v553 = vpop.trf.xlu0
  %v554 = vpop.trf.xlu0
  %v555 = vpop.trf.xlu0
  %v556 = vpop.trf.xlu0
  %v557 = vpop.trf.xlu0
  %v558 = vpop.trf.xlu0
  %v559 = vpop.trf.xlu0
  %v560 = vpop.trf.xlu0
  %v561 = vpack.c.bf16 %v449, %v449
  %v562 = vpack.c.bf16 %v481, %v481
  %v563 = vpack.c.bf16 %v513, %v513
  %v564 = vpack.c.bf16 %v545, %v545
  %v565 = vpack.c.bf16 %v334, %v334
  %v566 = vpack.c.bf16 %v337, %v337
  %v567 = vpack.c.bf16 %v342, %v342
  %v568 = vpack.c.bf16 %v345, %v345
  %v569 = vpack.c.bf16 %v419, %v419
  %v570 = vpack.c.bf16 %v422, %v422
  %v571 = vpack.c.bf16 %v427, %v427
  %v572 = vpack.c.bf16 %v430, %v430
  %vm573 = vcmask 64512
  %v575 = vsel %vm573, %v561, 0
  %vm577 = vcmask 1043456
  %v579 = vsel %vm577, %v565, 0
  %581 = vmatprep.subr.bf16.mxu0 0
  %582 = vmatpush1.bf16.msra.mxu0 %v579
  %583 = vmatprep.subr.bf16.mxu0 0
  %584 = vmatpush1.bf16.msra.mxu0 0
  %585 = vmatprep.subr.bf16.mxu0 0
  %586 = vmatpush1.bf16.msra.mxu0 0
  %587 = vmatprep.subr.bf16.mxu0 0
  %588 = vmatpush1.bf16.msra.mxu0 0
  %589 = vmatprep.subr.bf16.mxu0 0
  %590 = vmatpush1.bf16.msra.mxu0 0
  %591 = vmatprep.subr.bf16.mxu0 0
  %592 = vmatpush1.bf16.msra.mxu0 0
  %593 = vmatprep.subr.bf16.mxu0 0
  %594 = vmatpush1.bf16.msra.mxu0 0
  %595 = vmatprep.subr.bf16.mxu0 0
  %596 = vmatpush1.bf16.msra.mxu0 0
  %597 = vmatprep.subr.bf16.mxu0 0
  %598 = vmatpush1.bf16.msra.mxu0 0
  %599 = vmatprep.subr.bf16.mxu0 0
  %600 = vmatpush1.bf16.msra.mxu0 0
  %601 = vmatprep.subr.bf16.mxu0 0
  %602 = vmatpush1.bf16.msra.mxu0 0
  %603 = vmatprep.subr.bf16.mxu0 0
  %604 = vmatpush1.bf16.msra.mxu0 0
  %605 = vmatprep.subr.bf16.mxu0 0
  %606 = vmatpush1.bf16.msra.mxu0 0
  %607 = vmatprep.subr.bf16.mxu0 0
  %608 = vmatpush1.bf16.msra.mxu0 0
  %609 = vmatprep.subr.bf16.mxu0 0
  %610 = vmatpush1.bf16.msra.mxu0 0
  %611 = vmatprep.subr.bf16.mxu0 0
  %612 = vmatpush1.bf16.msra.mxu0 0
  %613 = vmatprep.mubr.bf16.mxu0 0
  %614 = vmatmul.mubr.bf16.gmra.mrb[0].mxu0 %v575
  %v615 = vpop.f32.mrb[0].mxu0
  %v616 = vadd.f32 0.0, %v615
  %v617 = vpop.f32.mrb[0].mxu0
  %v618 = vpop.f32.mrb[0].mxu0
  %v619 = vpop.f32.mrb[0].mxu0
  %620 = vdwg.mxu0
  %v622 = vsel %vm573, %v562, 0
  %v625 = vsel %vm577, %v566, 0
  %627 = vmatprep.subr.bf16.mxu0 0
  %628 = vmatpush1.bf16.msra.mxu0 %v625
  %629 = vmatprep.subr.bf16.mxu0 0
  %630 = vmatpush1.bf16.msra.mxu0 0
  %631 = vmatprep.subr.bf16.mxu0 0
  %632 = vmatpush1.bf16.msra.mxu0 0
  %633 = vmatprep.subr.bf16.mxu0 0
  %634 = vmatpush1.bf16.msra.mxu0 0
  %635 = vmatprep.subr.bf16.mxu0 0
  %636 = vmatpush1.bf16.msra.mxu0 0
  %637 = vmatprep.subr.bf16.mxu0 0
  %638 = vmatpush1.bf16.msra.mxu0 0
  %639 = vmatprep.subr.bf16.mxu0 0
  %640 = vmatpush1.bf16.msra.mxu0 0
  %641 = vmatprep.subr.bf16.mxu0 0
  %642 = vmatpush1.bf16.msra.mxu0 0
  %643 = vmatprep.subr.bf16.mxu0 0
  %644 = vmatpush1.bf16.msra.mxu0 0
  %645 = vmatprep.subr.bf16.mxu0 0
  %646 = vmatpush1.bf16.msra.mxu0 0
  %647 = vmatprep.subr.bf16.mxu0 0
  %648 = vmatpush1.bf16.msra.mxu0 0
  %649 = vmatprep.subr.bf16.mxu0 0
  %650 = vmatpush1.bf16.msra.mxu0 0
  %651 = vmatprep.subr.bf16.mxu0 0
  %652 = vmatpush1.bf16.msra.mxu0 0
  %653 = vmatprep.subr.bf16.mxu0 0
  %654 = vmatpush1.bf16.msra.mxu0 0
  %655 = vmatprep.subr.bf16.mxu0 0
  %656 = vmatpush1.bf16.msra.mxu0 0
  %657 = vmatprep.subr.bf16.mxu0 0
  %658 = vmatpush1.bf16.msra.mxu0 0
  %659 = vmatprep.mubr.bf16.mxu0 0
  %660 = vmatmul.mubr.bf16.gmra.mrb[0].mxu0 %v622
  %v661 = vpop.f32.mrb[0].mxu0
  %v662 = vadd.f32 0.0, %v661
  %v663 = vpop.f32.mrb[0].mxu0
  %v664 = vpop.f32.mrb[0].mxu0
  %v665 = vpop.f32.mrb[0].mxu0
  %666 = vdwg.mxu0
  %v668 = vsel %vm573, %v563, 0
  %v671 = vsel %vm577, %v567, 0
  %673 = vmatprep.subr.bf16.mxu0 0
  %674 = vmatpush1.bf16.msra.mxu0 %v671
  %675 = vmatprep.subr.bf16.mxu0 0
  %676 = vmatpush1.bf16.msra.mxu0 0
  %677 = vmatprep.subr.bf16.mxu0 0
  %678 = vmatpush1.bf16.msra.mxu0 0
  %679 = vmatprep.subr.bf16.mxu0 0
  %680 = vmatpush1.bf16.msra.mxu0 0
  %681 = vmatprep.subr.bf16.mxu0 0
  %682 = vmatpush1.bf16.msra.mxu0 0
  %683 = vmatprep.subr.bf16.mxu0 0
  %684 = vmatpush1.bf16.msra.mxu0 0
  %685 = vmatprep.subr.bf16.mxu0 0
  %686 = vmatpush1.bf16.msra.mxu0 0
  %687 = vmatprep.subr.bf16.mxu0 0
  %688 = vmatpush1.bf16.msra.mxu0 0
  %689 = vmatprep.subr.bf16.mxu0 0
  %690 = vmatpush1.bf16.msra.mxu0 0
  %691 = vmatprep.subr.bf16.mxu0 0
  %692 = vmatpush1.bf16.msra.mxu0 0
  %693 = vmatprep.subr.bf16.mxu0 0
  %694 = vmatpush1.bf16.msra.mxu0 0
  %695 = vmatprep.subr.bf16.mxu0 0
  %696 = vmatpush1.bf16.msra.mxu0 0
  %697 = vmatprep.subr.bf16.mxu0 0
  %698 = vmatpush1.bf16.msra.mxu0 0
  %699 = vmatprep.subr.bf16.mxu0 0
  %700 = vmatpush1.bf16.msra.mxu0 0
  %701 = vmatprep.subr.bf16.mxu0 0
  %702 = vmatpush1.bf16.msra.mxu0 0
  %703 = vmatprep.subr.bf16.mxu0 0
  %704 = vmatpush1.bf16.msra.mxu0 0
  %705 = vmatprep.mubr.bf16.mxu0 0
  %706 = vmatmul.mubr.bf16.gmra.mrb[0].mxu0 %v668
  %v707 = vpop.f32.mrb[0].mxu0
  %v708 = vadd.f32 0.0, %v707
  %v709 = vpop.f32.mrb[0].mxu0
  %v710 = vpop.f32.mrb[0].mxu0
  %v711 = vpop.f32.mrb[0].mxu0
  %712 = vdwg.mxu0
  %v714 = vsel %vm573, %v564, 0
  %v717 = vsel %vm577, %v568, 0
  %719 = vmatprep.subr.bf16.mxu0 0
  %720 = vmatpush1.bf16.msra.mxu0 %v717
  %721 = vmatprep.subr.bf16.mxu0 0
  %722 = vmatpush1.bf16.msra.mxu0 0
  %723 = vmatprep.subr.bf16.mxu0 0
  %724 = vmatpush1.bf16.msra.mxu0 0
  %725 = vmatprep.subr.bf16.mxu0 0
  %726 = vmatpush1.bf16.msra.mxu0 0
  %727 = vmatprep.subr.bf16.mxu0 0
  %728 = vmatpush1.bf16.msra.mxu0 0
  %729 = vmatprep.subr.bf16.mxu0 0
  %730 = vmatpush1.bf16.msra.mxu0 0
  %731 = vmatprep.subr.bf16.mxu0 0
  %732 = vmatpush1.bf16.msra.mxu0 0
  %733 = vmatprep.subr.bf16.mxu0 0
  %734 = vmatpush1.bf16.msra.mxu0 0
  %735 = vmatprep.subr.bf16.mxu0 0
  %736 = vmatpush1.bf16.msra.mxu0 0
  %737 = vmatprep.subr.bf16.mxu0 0
  %738 = vmatpush1.bf16.msra.mxu0 0
  %739 = vmatprep.subr.bf16.mxu0 0
  %740 = vmatpush1.bf16.msra.mxu0 0
  %741 = vmatprep.subr.bf16.mxu0 0
  %742 = vmatpush1.bf16.msra.mxu0 0
  %743 = vmatprep.subr.bf16.mxu0 0
  %744 = vmatpush1.bf16.msra.mxu0 0
  %745 = vmatprep.subr.bf16.mxu0 0
  %746 = vmatpush1.bf16.msra.mxu0 0
  %747 = vmatprep.subr.bf16.mxu0 0
  %748 = vmatpush1.bf16.msra.mxu0 0
  %749 = vmatprep.subr.bf16.mxu0 0
  %750 = vmatpush1.bf16.msra.mxu0 0
  %751 = vmatprep.mubr.bf16.mxu0 0
  %752 = vmatmul.mubr.bf16.gmra.mrb[0].mxu0 %v714
  %v753 = vpop.f32.mrb[0].mxu0
  %v754 = vadd.f32 0.0, %v753
  %v755 = vpop.f32.mrb[0].mxu0
  %v756 = vpop.f32.mrb[0].mxu0
  %v757 = vpop.f32.mrb[0].mxu0
  %758 = vdwg.mxu0
  %v759 = vmul.f32 %v616, 0.35355338
  %v760 = vmul.f32 %v662, 0.35355338
  %v761 = vmul.f32 %v708, 0.35355338
  %v762 = vmul.f32 %v754, 0.35355338
  %v763 = vlaneseq
  %v764 = vshrl.u32 %v763, 7
  %v765 = vsub.s32 0, %v764
  %v766 = vrot.slane %v126, %v765
  %v767 = vadd.f32 %v759, %v766
  %v768 = vadd.f32 %v760, %v766
  %v769 = vadd.f32 %v761, %v766
  %v770 = vadd.f32 %v762, %v766
  %v771 = vsel %vm573, %v767, -inf
  %772 = vmax.xlane.f32.xlu0 %v771
  %v773 = vpop.xlane.xlu0 %772
  %v774 = vsel %vm573, %v768, -inf
  %775 = vmax.xlane.f32.xlu0 %v774
  %v776 = vpop.xlane.xlu0 %775
  %v777 = vsel %vm573, %v769, -inf
  %778 = vmax.xlane.f32.xlu0 %v777
  %v779 = vpop.xlane.xlu0 %778
  %v780 = vsel %vm573, %v770, -inf
  %781 = vmax.xlane.f32.xlu0 %v780
  %v782 = vpop.xlane.xlu0 %781
  %v783 = vsub.f32 %v767, %v773
  %v784 = vsub.f32 %v768, %v776
  %v785 = vsub.f32 %v769, %v779
  %v786 = vsub.f32 %v770, %v782
  %v787 = vmul.f32 %v783, 1.442695
  %v788 = vpow.pop %v787
  %v789 = vmul.f32 %v784, 1.442695
  %v790 = vpow.pop %v789
  %v791 = vmul.f32 %v785, 1.442695
  %v792 = vpow.pop %v791
  %v793 = vmul.f32 %v786, 1.442695
  %v794 = vpow.pop %v793
  %v795 = vsel %vm573, %v788, 0.0
  %796 = vadd.xlane.f32.xlu0 %v795
  %v797 = vpop.xlane.xlu0 %796
  %v798 = vsel %vm573, %v790, 0.0
  %799 = vadd.xlane.f32.xlu0 %v798
  %v800 = vpop.xlane.xlu0 %799
  %v801 = vsel %vm573, %v792, 0.0
  %802 = vadd.xlane.f32.xlu0 %v801
  %v803 = vpop.xlane.xlu0 %802
  %v804 = vsel %vm573, %v794, 0.0
  %805 = vadd.xlane.f32.xlu0 %v804
  %v806 = vpop.xlane.xlu0 %805
  %v807 = vrcp.pop %v797
  %v808 = vrcp.pop %v800
  %v809 = vrcp.pop %v803
  %v810 = vrcp.pop %v806
  %v811 = vmul.f32 %v788, %v807
  %v812 = vmul.f32 %v790, %v808
  %v813 = vmul.f32 %v792, %v809
  %v814 = vmul.f32 %v794, %v810
  %v815 = vpack.c.bf16 %v811, %v811
  %v816 = vpack.c.bf16 %v812, %v812
  %v817 = vpack.c.bf16 %v813, %v813
  %v818 = vpack.c.bf16 %v814, %v814
  %v820 = vsel %vm573, %v569, 0
  %v823 = vsel %vm573, %v815, 0
  %825 = vmatprep.subr.bf16.mxu0 0
  %826 = vmatpush1.bf16.xpose.msra.mxu0 %v823
  %827 = vmatprep.subr.bf16.mxu0 0
  %828 = vmatpush1.bf16.xpose.msra.mxu0 0
  %829 = vmatprep.subr.bf16.mxu0 0
  %830 = vmatpush1.bf16.xpose.msra.mxu0 0
  %831 = vmatprep.subr.bf16.mxu0 0
  %832 = vmatpush1.bf16.xpose.msra.mxu0 0
  %833 = vmatprep.subr.bf16.mxu0 0
  %834 = vmatpush1.bf16.xpose.msra.mxu0 0
  %835 = vmatprep.subr.bf16.mxu0 0
  %836 = vmatpush1.bf16.xpose.msra.mxu0 0
  %837 = vmatprep.subr.bf16.mxu0 0
  %838 = vmatpush1.bf16.xpose.msra.mxu0 0
  %839 = vmatprep.subr.bf16.mxu0 0
  %840 = vmatpush1.bf16.xpose.msra.mxu0 0
  %841 = vmatprep.subr.bf16.mxu0 0
  %842 = vmatpush1.bf16.xpose.msra.mxu0 0
  %843 = vmatprep.subr.bf16.mxu0 0
  %844 = vmatpush1.bf16.xpose.msra.mxu0 0
  %845 = vmatprep.subr.bf16.mxu0 0
  %846 = vmatpush1.bf16.xpose.msra.mxu0 0
  %847 = vmatprep.subr.bf16.mxu0 0
  %848 = vmatpush1.bf16.xpose.msra.mxu0 0
  %849 = vmatprep.subr.bf16.mxu0 0
  %850 = vmatpush1.bf16.xpose.msra.mxu0 0
  %851 = vmatprep.subr.bf16.mxu0 0
  %852 = vmatpush1.bf16.xpose.msra.mxu0 0
  %853 = vmatprep.subr.bf16.mxu0 0
  %854 = vmatpush1.bf16.xpose.msra.mxu0 0
  %855 = vmatprep.subr.bf16.mxu0 0
  %856 = vmatpush1.bf16.xpose.msra.mxu0 0
  %857 = vmatprep.mubr.bf16.mxu0 0
  %858 = vmatmul.mubr.bf16.gmra.mrb[0].mxu0 %v820
  %v859 = vpop.f32.mrb[0].mxu0
  %v860 = vadd.f32 0.0, %v859
  %v861 = vpop.f32.mrb[0].mxu0
  %v862 = vpop.f32.mrb[0].mxu0
  %v863 = vpop.f32.mrb[0].mxu0
  %864 = vdwg.mxu0
  %v866 = vsel %vm573, %v570, 0
  %v869 = vsel %vm573, %v816, 0
  %871 = vmatprep.subr.bf16.mxu0 0
  %872 = vmatpush1.bf16.xpose.msra.mxu0 %v869
  %873 = vmatprep.subr.bf16.mxu0 0
  %874 = vmatpush1.bf16.xpose.msra.mxu0 0
  %875 = vmatprep.subr.bf16.mxu0 0
  %876 = vmatpush1.bf16.xpose.msra.mxu0 0
  %877 = vmatprep.subr.bf16.mxu0 0
  %878 = vmatpush1.bf16.xpose.msra.mxu0 0
  %879 = vmatprep.subr.bf16.mxu0 0
  %880 = vmatpush1.bf16.xpose.msra.mxu0 0
  %881 = vmatprep.subr.bf16.mxu0 0
  %882 = vmatpush1.bf16.xpose.msra.mxu0 0
  %883 = vmatprep.subr.bf16.mxu0 0
  %884 = vmatpush1.bf16.xpose.msra.mxu0 0
  %885 = vmatprep.subr.bf16.mxu0 0
  %886 = vmatpush1.bf16.xpose.msra.mxu0 0
  %887 = vmatprep.subr.bf16.mxu0 0
  %888 = vmatpush1.bf16.xpose.msra.mxu0 0
  %889 = vmatprep.subr.bf16.mxu0 0
  %890 = vmatpush1.bf16.xpose.msra.mxu0 0
  %891 = vmatprep.subr.bf16.mxu0 0
  %892 = vmatpush1.bf16.xpose.msra.mxu0 0
  %893 = vmatprep.subr.bf16.mxu0 0
  %894 = vmatpush1.bf16.xpose.msra.mxu0 0
  %895 = vmatprep.subr.bf16.mxu0 0
  %896 = vmatpush1.bf16.xpose.msra.mxu0 0
  %897 = vmatprep.subr.bf16.mxu0 0
  %898 = vmatpush1.bf16.xpose.msra.mxu0 0
  %899 = vmatprep.subr.bf16.mxu0 0
  %900 = vmatpush1.bf16.xpose.msra.mxu0 0
  %901 = vmatprep.subr.bf16.mxu0 0
  %902 = vmatpush1.bf16.xpose.msra.mxu0 0
  %903 = vmatprep.mubr.bf16.mxu0 0
  %904 = vmatmul.mubr.bf16.gmra.mrb[0].mxu0 %v866
  %v905 = vpop.f32.mrb[0].mxu0
  %v906 = vadd.f32 0.0, %v905
  %v907 = vpop.f32.mrb[0].mxu0
  %v908 = vpop.f32.mrb[0].mxu0
  %v909 = vpop.f32.mrb[0].mxu0
  %910 = vdwg.mxu0
  %v912 = vsel %vm573, %v571, 0
  %v915 = vsel %vm573, %v817, 0
  %917 = vmatprep.subr.bf16.mxu0 0
  %918 = vmatpush1.bf16.xpose.msra.mxu0 %v915
  %919 = vmatprep.subr.bf16.mxu0 0
  %920 = vmatpush1.bf16.xpose.msra.mxu0 0
  %921 = vmatprep.subr.bf16.mxu0 0
  %922 = vmatpush1.bf16.xpose.msra.mxu0 0
  %923 = vmatprep.subr.bf16.mxu0 0
  %924 = vmatpush1.bf16.xpose.msra.mxu0 0
  %925 = vmatprep.subr.bf16.mxu0 0
  %926 = vmatpush1.bf16.xpose.msra.mxu0 0
  %927 = vmatprep.subr.bf16.mxu0 0
  %928 = vmatpush1.bf16.xpose.msra.mxu0 0
  %929 = vmatprep.subr.bf16.mxu0 0
  %930 = vmatpush1.bf16.xpose.msra.mxu0 0
  %931 = vmatprep.subr.bf16.mxu0 0
  %932 = vmatpush1.bf16.xpose.msra.mxu0 0
  %933 = vmatprep.subr.bf16.mxu0 0
  %934 = vmatpush1.bf16.xpose.msra.mxu0 0
  %935 = vmatprep.subr.bf16.mxu0 0
  %936 = vmatpush1.bf16.xpose.msra.mxu0 0
  %937 = vmatprep.subr.bf16.mxu0 0
  %938 = vmatpush1.bf16.xpose.msra.mxu0 0
  %939 = vmatprep.subr.bf16.mxu0 0
  %940 = vmatpush1.bf16.xpose.msra.mxu0 0
  %941 = vmatprep.subr.bf16.mxu0 0
  %942 = vmatpush1.bf16.xpose.msra.mxu0 0
  %943 = vmatprep.subr.bf16.mxu0 0
  %944 = vmatpush1.bf16.xpose.msra.mxu0 0
  %945 = vmatprep.subr.bf16.mxu0 0
  %946 = vmatpush1.bf16.xpose.msra.mxu0 0
  %947 = vmatprep.subr.bf16.mxu0 0
  %948 = vmatpush1.bf16.xpose.msra.mxu0 0
  %949 = vmatprep.mubr.bf16.mxu0 0
  %950 = vmatmul.mubr.bf16.gmra.mrb[0].mxu0 %v912
  %v951 = vpop.f32.mrb[0].mxu0
  %v952 = vadd.f32 0.0, %v951
  %v953 = vpop.f32.mrb[0].mxu0
  %v954 = vpop.f32.mrb[0].mxu0
  %v955 = vpop.f32.mrb[0].mxu0
  %956 = vdwg.mxu0
  %v958 = vsel %vm573, %v572, 0
  %v961 = vsel %vm573, %v818, 0
  %963 = vmatprep.subr.bf16.mxu0 0
  %964 = vmatpush1.bf16.xpose.msra.mxu0 %v961
  %965 = vmatprep.subr.bf16.mxu0 0
  %966 = vmatpush1.bf16.xpose.msra.mxu0 0
  %967 = vmatprep.subr.bf16.mxu0 0
  %968 = vmatpush1.bf16.xpose.msra.mxu0 0
  %969 = vmatprep.subr.bf16.mxu0 0
  %970 = vmatpush1.bf16.xpose.msra.mxu0 0
  %971 = vmatprep.subr.bf16.mxu0 0
  %972 = vmatpush1.bf16.xpose.msra.mxu0 0
  %973 = vmatprep.subr.bf16.mxu0 0
  %974 = vmatpush1.bf16.xpose.msra.mxu0 0
  %975 = vmatprep.subr.bf16.mxu0 0
  %976 = vmatpush1.bf16.xpose.msra.mxu0 0
  %977 = vmatprep.subr.bf16.mxu0 0
  %978 = vmatpush1.bf16.xpose.msra.mxu0 0
  %979 = vmatprep.subr.bf16.mxu0 0
  %980 = vmatpush1.bf16.xpose.msra.mxu0 0
  %981 = vmatprep.subr.bf16.mxu0 0
  %982 = vmatpush1.bf16.xpose.msra.mxu0 0
  %983 = vmatprep.subr.bf16.mxu0 0
  %984 = vmatpush1.bf16.xpose.msra.mxu0 0
  %985 = vmatprep.subr.bf16.mxu0 0
  %986 = vmatpush1.bf16.xpose.msra.mxu0 0
  %987 = vmatprep.subr.bf16.mxu0 0
  %988 = vmatpush1.bf16.xpose.msra.mxu0 0
  %989 = vmatprep.subr.bf16.mxu0 0
  %990 = vmatpush1.bf16.xpose.msra.mxu0 0
  %991 = vmatprep.subr.bf16.mxu0 0
  %992 = vmatpush1.bf16.xpose.msra.mxu0 0
  %993 = vmatprep.subr.bf16.mxu0 0
  %994 = vmatpush1.bf16.xpose.msra.mxu0 0
  %995 = vmatprep.mubr.bf16.mxu0 0
  %996 = vmatmul.mubr.bf16.gmra.mrb[0].mxu0 %v958
  %v997 = vpop.f32.mrb[0].mxu0
  %v998 = vadd.f32 0.0, %v997
  %v999 = vpop.f32.mrb[0].mxu0
  %v1000 = vpop.f32.mrb[0].mxu0
  %v1001 = vpop.f32.mrb[0].mxu0
  %1002 = vdwg.mxu0
  %v1003 = vpack.c.bf16 %v906, %v860
  %v1004 = vpack.c.bf16 %v998, %v952
  %v1006 = vlaneseq
  %v1007 = vshrl.u32 %v1006, 7
  %v1008 = vsub.s32 0, %v1007
  %v1009 = vrot.slane %v155, %v1008
  %1011 = vxpose.xlu0.c.b16.start [1/8] %v1003, 128
  %1012 = vxpose.xlu0.c.b16.cont [2/8] %v1004, 128
  %1013 = vxpose.xlu0.c.b16.cont [3/8] 0, 128
  %1014 = vxpose.xlu0.c.b16.cont [4/8] 0, 128
  %1015 = vxpose.xlu0.c.b16.cont [5/8] 0, 128
  %1016 = vxpose.xlu0.c.b16.cont [6/8] 0, 128
  %1017 = vxpose.xlu0.c.b16.cont [7/8] 0, 128
  %1018 = vxpose.xlu0.c.b16.end [8/8] 0, 128
  %v1019 = vpop.trf.xlu0
  %v1020 = vpop.trf.xlu0
  %v1021 = vpop.trf.xlu0
  %v1022 = vpop.trf.xlu0
  %v1023 = vpop.trf.xlu0
  %v1024 = vpop.trf.xlu0
  %v1025 = vpop.trf.xlu0
  %v1026 = vpop.trf.xlu0
  %v1031 = vunpack.c.l.b16 %v151
  %v1032 = vunpack.c.l.b16 %v152
  %v1033 = vunpack.c.l.b16 %v153
  %v1034 = vunpack.c.l.b16 %v154
  %v1035 = vpack.c.b16 %v1032, %v1031
  %v1036 = vpack.c.b16 %v1034, %v1033
  %v1040 = vsel %vm82, %v1019, 0
  %1042 = vmatprep.subr.bf16.mxu0 0
  %1043 = vmatpush1.bf16.msra.mxu0 %v1035
  %1044 = vmatprep.subr.bf16.mxu0 0
  %1045 = vmatpush1.bf16.msra.mxu0 %v1036
  %1046 = vmatprep.subr.bf16.mxu0 0
  %1047 = vmatpush1.bf16.msra.mxu0 0
  %1048 = vmatprep.subr.bf16.mxu0 0
  %1049 = vmatpush1.bf16.msra.mxu0 0
  %1050 = vmatprep.subr.bf16.mxu0 0
  %1051 = vmatpush1.bf16.msra.mxu0 0
  %1052 = vmatprep.subr.bf16.mxu0 0
  %1053 = vmatpush1.bf16.msra.mxu0 0
  %1054 = vmatprep.subr.bf16.mxu0 0
  %1055 = vmatpush1.bf16.msra.mxu0 0
  %1056 = vmatprep.subr.bf16.mxu0 0
  %1057 = vmatpush1.bf16.msra.mxu0 0
  %1058 = vmatprep.subr.bf16.mxu0 0
  %1059 = vmatpush1.bf16.msra.mxu0 0
  %1060 = vmatprep.subr.bf16.mxu0 0
  %1061 = vmatpush1.bf16.msra.mxu0 0
  %1062 = vmatprep.subr.bf16.mxu0 0
  %1063 = vmatpush1.bf16.msra.mxu0 0
  %1064 = vmatprep.subr.bf16.mxu0 0
  %1065 = vmatpush1.bf16.msra.mxu0 0
  %1066 = vmatprep.subr.bf16.mxu0 0
  %1067 = vmatpush1.bf16.msra.mxu0 0
  %1068 = vmatprep.subr.bf16.mxu0 0
  %1069 = vmatpush1.bf16.msra.mxu0 0
  %1070 = vmatprep.subr.bf16.mxu0 0
  %1071 = vmatpush1.bf16.msra.mxu0 0
  %1072 = vmatprep.subr.bf16.mxu0 0
  %1073 = vmatpush1.bf16.msra.mxu0 0
  %1074 = vmatprep.mubr.bf16.mxu0 0
  %1075 = vmatmul.mubr.bf16.gmra.mrb[0].mxu0 %v1040
  %v1076 = vpop.f32.mrb[0].mxu0
  %v1077 = vadd.f32 %v1009, %v1076
  %v1078 = vpop.f32.mrb[0].mxu0
  %v1079 = vpop.f32.mrb[0].mxu0
  %v1080 = vpop.f32.mrb[0].mxu0
  %1081 = vdwg.mxu0
  %v1082 = vpack.c.bf16 %v125, %v125
  %v1084 = vsel %vm82, %v1082, 0
  %1086 = vmatprep.subr.bf16.mxu0 0
  %1087 = vmatpush1.bf16.xpose.msra.mxu0 %v1084
  %1088 = vmatprep.subr.bf16.mxu0 0
  %1089 = vmatpush1.bf16.xpose.msra.mxu0 0
  %1090 = vmatprep.subr.bf16.mxu0 0
  %1091 = vmatpush1.bf16.xpose.msra.mxu0 0
  %1092 = vmatprep.subr.bf16.mxu0 0
  %1093 = vmatpush1.bf16.xpose.msra.mxu0 0
  %1094 = vmatprep.subr.bf16.mxu0 0
  %1095 = vmatpush1.bf16.xpose.msra.mxu0 0
  %1096 = vmatprep.subr.bf16.mxu0 0
  %1097 = vmatpush1.bf16.xpose.msra.mxu0 0
  %1098 = vmatprep.subr.bf16.mxu0 0
  %1099 = vmatpush1.bf16.xpose.msra.mxu0 0
  %1100 = vmatprep.subr.bf16.mxu0 0
  %1101 = vmatpush1.bf16.xpose.msra.mxu0 0
  %1102 = vmatprep.subr.bf16.mxu0 0
  %1103 = vmatpush1.bf16.xpose.msra.mxu0 0
  %1104 = vmatprep.subr.bf16.mxu0 0
  %1105 = vmatpush1.bf16.xpose.msra.mxu0 0
  %1106 = vmatprep.subr.bf16.mxu0 0
  %1107 = vmatpush1.bf16.xpose.msra.mxu0 0
  %1108 = vmatprep.subr.bf16.mxu0 0
  %1109 = vmatpush1.bf16.xpose.msra.mxu0 0
  %1110 = vmatprep.subr.bf16.mxu0 0
  %1111 = vmatpush1.bf16.xpose.msra.mxu0 0
  %1112 = vmatprep.subr.bf16.mxu0 0
  %1113 = vmatpush1.bf16.xpose.msra.mxu0 0
  %1114 = vmatprep.subr.bf16.mxu0 0
  %1115 = vmatpush1.bf16.xpose.msra.mxu0 0
  %1116 = vmatprep.subr.bf16.mxu0 0
  %1117 = vmatpush1.bf16.xpose.msra.mxu0 0
  %1118 = vmatprep.mubr.bf16.mxu0 0
  %1119 = vmatmul.mubr.bf16.gmra.mrb[0].mxu0 %v206
  %v1120 = vpop.f32.mrb[0].mxu0
  %v1121 = vadd.f32 %v178, %v1120
  %v1122 = vpop.f32.mrb[0].mxu0
  %v1123 = vpop.f32.mrb[0].mxu0
  %v1124 = vadd.f32 %v183, %v1123
  %v1125 = vpop.f32.mrb[0].mxu0
  %1126 = vmatprep.mubr.bf16.mxu0 0
  %1127 = vmatmul.mubr.bf16.gmra.mrb[0].mxu0 %v209
  %v1128 = vpop.f32.mrb[0].mxu0
  %v1129 = vadd.f32 %v188, %v1128
  %v1130 = vpop.f32.mrb[0].mxu0
  %v1131 = vpop.f32.mrb[0].mxu0
  %v1132 = vadd.f32 %v193, %v1131
  %v1133 = vpop.f32.mrb[0].mxu0
  %1134 = vdwg.mxu0
  %1135 = vmatprep.subr.bf16.mxu0 0
  %1136 = vmatpush1.bf16.xpose.msra.mxu0 %v1084
  %1137 = vmatprep.subr.bf16.mxu0 0
  %1138 = vmatpush1.bf16.xpose.msra.mxu0 0
  %1139 = vmatprep.subr.bf16.mxu0 0
  %1140 = vmatpush1.bf16.xpose.msra.mxu0 0
  %1141 = vmatprep.subr.bf16.mxu0 0
  %1142 = vmatpush1.bf16.xpose.msra.mxu0 0
  %1143 = vmatprep.subr.bf16.mxu0 0
  %1144 = vmatpush1.bf16.xpose.msra.mxu0 0
  %1145 = vmatprep.subr.bf16.mxu0 0
  %1146 = vmatpush1.bf16.xpose.msra.mxu0 0
  %1147 = vmatprep.subr.bf16.mxu0 0
  %1148 = vmatpush1.bf16.xpose.msra.mxu0 0
  %1149 = vmatprep.subr.bf16.mxu0 0
  %1150 = vmatpush1.bf16.xpose.msra.mxu0 0
  %1151 = vmatprep.subr.bf16.mxu0 0
  %1152 = vmatpush1.bf16.xpose.msra.mxu0 0
  %1153 = vmatprep.subr.bf16.mxu0 0
  %1154 = vmatpush1.bf16.xpose.msra.mxu0 0
  %1155 = vmatprep.subr.bf16.mxu0 0
  %1156 = vmatpush1.bf16.xpose.msra.mxu0 0
  %1157 = vmatprep.subr.bf16.mxu0 0
  %1158 = vmatpush1.bf16.xpose.msra.mxu0 0
  %1159 = vmatprep.subr.bf16.mxu0 0
  %1160 = vmatpush1.bf16.xpose.msra.mxu0 0
  %1161 = vmatprep.subr.bf16.mxu0 0
  %1162 = vmatpush1.bf16.xpose.msra.mxu0 0
  %1163 = vmatprep.subr.bf16.mxu0 0
  %1164 = vmatpush1.bf16.xpose.msra.mxu0 0
  %1165 = vmatprep.subr.bf16.mxu0 0
  %1166 = vmatpush1.bf16.xpose.msra.mxu0 0
  %1167 = vmatprep.mubr.bf16.mxu0 0
  %1168 = vmatmul.mubr.bf16.gmra.mrb[0].mxu0 %v294
  %v1169 = vpop.f32.mrb[0].mxu0
  %v1170 = vadd.f32 %v266, %v1169
  %v1171 = vpop.f32.mrb[0].mxu0
  %v1172 = vpop.f32.mrb[0].mxu0
  %v1173 = vadd.f32 %v271, %v1172
  %v1174 = vpop.f32.mrb[0].mxu0
  %1175 = vmatprep.mubr.bf16.mxu0 0
  %1176 = vmatmul.mubr.bf16.gmra.mrb[0].mxu0 %v297
  %v1177 = vpop.f32.mrb[0].mxu0
  %v1178 = vadd.f32 %v276, %v1177
  %v1179 = vpop.f32.mrb[0].mxu0
  %v1180 = vpop.f32.mrb[0].mxu0
  %v1181 = vadd.f32 %v281, %v1180
  %v1182 = vpop.f32.mrb[0].mxu0
  %1183 = vdwg.mxu0
  %1184 = vmatprep.subr.bf16.mxu0 0
  %1185 = vmatpush1.bf16.xpose.msra.mxu0 %v1084
  %1186 = vmatprep.subr.bf16.mxu0 0
  %1187 = vmatpush1.bf16.xpose.msra.mxu0 0
  %1188 = vmatprep.subr.bf16.mxu0 0
  %1189 = vmatpush1.bf16.xpose.msra.mxu0 0
  %1190 = vmatprep.subr.bf16.mxu0 0
  %1191 = vmatpush1.bf16.xpose.msra.mxu0 0
  %1192 = vmatprep.subr.bf16.mxu0 0
  %1193 = vmatpush1.bf16.xpose.msra.mxu0 0
  %1194 = vmatprep.subr.bf16.mxu0 0
  %1195 = vmatpush1.bf16.xpose.msra.mxu0 0
  %1196 = vmatprep.subr.bf16.mxu0 0
  %1197 = vmatpush1.bf16.xpose.msra.mxu0 0
  %1198 = vmatprep.subr.bf16.mxu0 0
  %1199 = vmatpush1.bf16.xpose.msra.mxu0 0
  %1200 = vmatprep.subr.bf16.mxu0 0
  %1201 = vmatpush1.bf16.xpose.msra.mxu0 0
  %1202 = vmatprep.subr.bf16.mxu0 0
  %1203 = vmatpush1.bf16.xpose.msra.mxu0 0
  %1204 = vmatprep.subr.bf16.mxu0 0
  %1205 = vmatpush1.bf16.xpose.msra.mxu0 0
  %1206 = vmatprep.subr.bf16.mxu0 0
  %1207 = vmatpush1.bf16.xpose.msra.mxu0 0
  %1208 = vmatprep.subr.bf16.mxu0 0
  %1209 = vmatpush1.bf16.xpose.msra.mxu0 0
  %1210 = vmatprep.subr.bf16.mxu0 0
  %1211 = vmatpush1.bf16.xpose.msra.mxu0 0
  %1212 = vmatprep.subr.bf16.mxu0 0
  %1213 = vmatpush1.bf16.xpose.msra.mxu0 0
  %1214 = vmatprep.subr.bf16.mxu0 0
  %1215 = vmatpush1.bf16.xpose.msra.mxu0 0
  %1216 = vmatprep.mubr.bf16.mxu0 0
  %1217 = vmatmul.mubr.bf16.gmra.mrb[0].mxu0 %v379
  %v1218 = vpop.f32.mrb[0].mxu0
  %v1219 = vadd.f32 %v351, %v1218
  %v1220 = vpop.f32.mrb[0].mxu0
  %v1221 = vpop.f32.mrb[0].mxu0
  %v1222 = vadd.f32 %v356, %v1221
  %v1223 = vpop.f32.mrb[0].mxu0
  %1224 = vmatprep.mubr.bf16.mxu0 0
  %1225 = vmatmul.mubr.bf16.gmra.mrb[0].mxu0 %v382
  %v1226 = vpop.f32.mrb[0].mxu0
  %v1227 = vadd.f32 %v361, %v1226
  %v1228 = vpop.f32.mrb[0].mxu0
  %v1229 = vpop.f32.mrb[0].mxu0
  %v1230 = vadd.f32 %v366, %v1229
  %v1231 = vpop.f32.mrb[0].mxu0
  %1232 = vdwg.mxu0
  %1233 = vxpose.xlu0.b32.start [1/16] %v1121, 128
  %1234 = vxpose.xlu0.b32.cont [2/16] 0.0, 128
  %1235 = vxpose.xlu0.b32.cont [3/16] 0.0, 128
  %1236 = vxpose.xlu0.b32.cont [4/16] 0.0, 128
  %1237 = vxpose.xlu0.b32.cont [5/16] 0.0, 128
  %1238 = vxpose.xlu0.b32.cont [6/16] 0.0, 128
  %1239 = vxpose.xlu0.b32.cont [7/16] 0.0, 128
  %1240 = vxpose.xlu0.b32.cont [8/16] 0.0, 128
  %1241 = vxpose.xlu0.b32.cont [9/16] 0.0, 128
  %1242 = vxpose.xlu0.b32.cont [10/16] 0.0, 128
  %1243 = vxpose.xlu0.b32.cont [11/16] 0.0, 128
  %1244 = vxpose.xlu0.b32.cont [12/16] 0.0, 128
  %1245 = vxpose.xlu0.b32.cont [13/16] 0.0, 128
  %1246 = vxpose.xlu0.b32.cont [14/16] 0.0, 128
  %1247 = vxpose.xlu0.b32.cont [15/16] 0.0, 128
  %1248 = vxpose.xlu0.b32.end [16/16] 0.0, 128
  %v1249 = vpop.trf.xlu0
  %v1250 = vpop.trf.xlu0
  %v1251 = vpop.trf.xlu0
  %v1252 = vpop.trf.xlu0
  %v1253 = vpop.trf.xlu0
  %v1254 = vpop.trf.xlu0
  %v1255 = vpop.trf.xlu0
  %v1256 = vpop.trf.xlu0
  %v1257 = vpop.trf.xlu0
  %v1258 = vpop.trf.xlu0
  %v1259 = vpop.trf.xlu0
  %v1260 = vpop.trf.xlu0
  %v1261 = vpop.trf.xlu0
  %v1262 = vpop.trf.xlu0
  %v1263 = vpop.trf.xlu0
  %v1264 = vpop.trf.xlu0
  %1265 = vxpose.xlu0.b32.start [1/16] %v1124, 128
  %1266 = vxpose.xlu0.b32.cont [2/16] 0.0, 128
  %1267 = vxpose.xlu0.b32.cont [3/16] 0.0, 128
  %1268 = vxpose.xlu0.b32.cont [4/16] 0.0, 128
  %1269 = vxpose.xlu0.b32.cont [5/16] 0.0, 128
  %1270 = vxpose.xlu0.b32.cont [6/16] 0.0, 128
  %1271 = vxpose.xlu0.b32.cont [7/16] 0.0, 128
  %1272 = vxpose.xlu0.b32.cont [8/16] 0.0, 128
  %1273 = vxpose.xlu0.b32.cont [9/16] 0.0, 128
  %1274 = vxpose.xlu0.b32.cont [10/16] 0.0, 128
  %1275 = vxpose.xlu0.b32.cont [11/16] 0.0, 128
  %1276 = vxpose.xlu0.b32.cont [12/16] 0.0, 128
  %1277 = vxpose.xlu0.b32.cont [13/16] 0.0, 128
  %1278 = vxpose.xlu0.b32.cont [14/16] 0.0, 128
  %1279 = vxpose.xlu0.b32.cont [15/16] 0.0, 128
  %1280 = vxpose.xlu0.b32.end [16/16] 0.0, 128
  %v1281 = vpop.trf.xlu0
  %v1282 = vpop.trf.xlu0
  %v1283 = vpop.trf.xlu0
  %v1284 = vpop.trf.xlu0
  %v1285 = vpop.trf.xlu0
  %v1286 = vpop.trf.xlu0
  %v1287 = vpop.trf.xlu0
  %v1288 = vpop.trf.xlu0
  %v1289 = vpop.trf.xlu0
  %v1290 = vpop.trf.xlu0
  %v1291 = vpop.trf.xlu0
  %v1292 = vpop.trf.xlu0
  %v1293 = vpop.trf.xlu0
  %v1294 = vpop.trf.xlu0
  %v1295 = vpop.trf.xlu0
  %v1296 = vpop.trf.xlu0
  %1297 = vxpose.xlu0.b32.start [1/16] %v1129, 128
  %1298 = vxpose.xlu0.b32.cont [2/16] 0.0, 128
  %1299 = vxpose.xlu0.b32.cont [3/16] 0.0, 128
  %1300 = vxpose.xlu0.b32.cont [4/16] 0.0, 128
  %1301 = vxpose.xlu0.b32.cont [5/16] 0.0, 128
  %1302 = vxpose.xlu0.b32.cont [6/16] 0.0, 128
  %1303 = vxpose.xlu0.b32.cont [7/16] 0.0, 128
  %1304 = vxpose.xlu0.b32.cont [8/16] 0.0, 128
  %1305 = vxpose.xlu0.b32.cont [9/16] 0.0, 128
  %1306 = vxpose.xlu0.b32.cont [10/16] 0.0, 128
  %1307 = vxpose.xlu0.b32.cont [11/16] 0.0, 128
  %1308 = vxpose.xlu0.b32.cont [12/16] 0.0, 128
  %1309 = vxpose.xlu0.b32.cont [13/16] 0.0, 128
  %1310 = vxpose.xlu0.b32.cont [14/16] 0.0, 128
  %1311 = vxpose.xlu0.b32.cont [15/16] 0.0, 128
  %1312 = vxpose.xlu0.b32.end [16/16] 0.0, 128
  %v1313 = vpop.trf.xlu0
  %v1314 = vpop.trf.xlu0
  %v1315 = vpop.trf.xlu0
  %v1316 = vpop.trf.xlu0
  %v1317 = vpop.trf.xlu0
  %v1318 = vpop.trf.xlu0
  %v1319 = vpop.trf.xlu0
  %v1320 = vpop.trf.xlu0
  %v1321 = vpop.trf.xlu0
  %v1322 = vpop.trf.xlu0
  %v1323 = vpop.trf.xlu0
  %v1324 = vpop.trf.xlu0
  %v1325 = vpop.trf.xlu0
  %v1326 = vpop.trf.xlu0
  %v1327 = vpop.trf.xlu0
  %v1328 = vpop.trf.xlu0
  %1329 = vxpose.xlu0.b32.start [1/16] %v1132, 128
  %1330 = vxpose.xlu0.b32.cont [2/16] 0.0, 128
  %1331 = vxpose.xlu0.b32.cont [3/16] 0.0, 128
  %1332 = vxpose.xlu0.b32.cont [4/16] 0.0, 128
  %1333 = vxpose.xlu0.b32.cont [5/16] 0.0, 128
  %1334 = vxpose.xlu0.b32.cont [6/16] 0.0, 128
  %1335 = vxpose.xlu0.b32.cont [7/16] 0.0, 128
  %1336 = vxpose.xlu0.b32.cont [8/16] 0.0, 128
  %1337 = vxpose.xlu0.b32.cont [9/16] 0.0, 128
  %1338 = vxpose.xlu0.b32.cont [10/16] 0.0, 128
  %1339 = vxpose.xlu0.b32.cont [11/16] 0.0, 128
  %1340 = vxpose.xlu0.b32.cont [12/16] 0.0, 128
  %1341 = vxpose.xlu0.b32.cont [13/16] 0.0, 128
  %1342 = vxpose.xlu0.b32.cont [14/16] 0.0, 128
  %1343 = vxpose.xlu0.b32.cont [15/16] 0.0, 128
  %1344 = vxpose.xlu0.b32.end [16/16] 0.0, 128
  %v1345 = vpop.trf.xlu0
  %v1346 = vpop.trf.xlu0
  %v1347 = vpop.trf.xlu0
  %v1348 = vpop.trf.xlu0
  %v1349 = vpop.trf.xlu0
  %v1350 = vpop.trf.xlu0
  %v1351 = vpop.trf.xlu0
  %v1352 = vpop.trf.xlu0
  %v1353 = vpop.trf.xlu0
  %v1354 = vpop.trf.xlu0
  %v1355 = vpop.trf.xlu0
  %v1356 = vpop.trf.xlu0
  %v1357 = vpop.trf.xlu0
  %v1358 = vpop.trf.xlu0
  %v1359 = vpop.trf.xlu0
  %v1360 = vpop.trf.xlu0
  %v1361 = vpack.c.bf16 %v1249, %v1249
  %v1362 = vpack.c.bf16 %v1281, %v1281
  %v1363 = vpack.c.bf16 %v1313, %v1313
  %v1364 = vpack.c.bf16 %v1345, %v1345
  %v1365 = vpack.c.bf16 %v1170, %v1170
  %v1366 = vpack.c.bf16 %v1173, %v1173
  %v1367 = vpack.c.bf16 %v1178, %v1178
  %v1368 = vpack.c.bf16 %v1181, %v1181
  %v1369 = vpack.c.bf16 %v1219, %v1219
  %v1370 = vpack.c.bf16 %v1222, %v1222
  %v1371 = vpack.c.bf16 %v1227, %v1227
  %v1372 = vpack.c.bf16 %v1230, %v1230
  %v1374 = vsel %vm573, %v1361, 0
  %v1377 = vsel %vm577, %v1365, 0
  %1379 = vmatprep.subr.bf16.mxu0 0
  %1380 = vmatpush1.bf16.msra.mxu0 %v1377
  %1381 = vmatprep.subr.bf16.mxu0 0
  %1382 = vmatpush1.bf16.msra.mxu0 0
  %1383 = vmatprep.subr.bf16.mxu0 0
  %1384 = vmatpush1.bf16.msra.mxu0 0
  %1385 = vmatprep.subr.bf16.mxu0 0
  %1386 = vmatpush1.bf16.msra.mxu0 0
  %1387 = vmatprep.subr.bf16.mxu0 0
  %1388 = vmatpush1.bf16.msra.mxu0 0
  %1389 = vmatprep.subr.bf16.mxu0 0
  %1390 = vmatpush1.bf16.msra.mxu0 0
  %1391 = vmatprep.subr.bf16.mxu0 0
  %1392 = vmatpush1.bf16.msra.mxu0 0
  %1393 = vmatprep.subr.bf16.mxu0 0
  %1394 = vmatpush1.bf16.msra.mxu0 0
  %1395 = vmatprep.subr.bf16.mxu0 0
  %1396 = vmatpush1.bf16.msra.mxu0 0
  %1397 = vmatprep.subr.bf16.mxu0 0
  %1398 = vmatpush1.bf16.msra.mxu0 0
  %1399 = vmatprep.subr.bf16.mxu0 0
  %1400 = vmatpush1.bf16.msra.mxu0 0
  %1401 = vmatprep.subr.bf16.mxu0 0
  %1402 = vmatpush1.bf16.msra.mxu0 0
  %1403 = vmatprep.subr.bf16.mxu0 0
  %1404 = vmatpush1.bf16.msra.mxu0 0
  %1405 = vmatprep.subr.bf16.mxu0 0
  %1406 = vmatpush1.bf16.msra.mxu0 0
  %1407 = vmatprep.subr.bf16.mxu0 0
  %1408 = vmatpush1.bf16.msra.mxu0 0
  %1409 = vmatprep.subr.bf16.mxu0 0
  %1410 = vmatpush1.bf16.msra.mxu0 0
  %1411 = vmatprep.mubr.bf16.mxu0 0
  %1412 = vmatmul.mubr.bf16.gmra.mrb[0].mxu0 %v1374
  %v1413 = vpop.f32.mrb[0].mxu0
  %v1414 = vadd.f32 0.0, %v1413
  %v1415 = vpop.f32.mrb[0].mxu0
  %v1416 = vpop.f32.mrb[0].mxu0
  %v1417 = vpop.f32.mrb[0].mxu0
  %1418 = vdwg.mxu0
  %v1420 = vsel %vm573, %v1362, 0
  %v1423 = vsel %vm577, %v1366, 0
  %1425 = vmatprep.subr.bf16.mxu0 0
  %1426 = vmatpush1.bf16.msra.mxu0 %v1423
  %1427 = vmatprep.subr.bf16.mxu0 0
  %1428 = vmatpush1.bf16.msra.mxu0 0
  %1429 = vmatprep.subr.bf16.mxu0 0
  %1430 = vmatpush1.bf16.msra.mxu0 0
  %1431 = vmatprep.subr.bf16.mxu0 0
  %1432 = vmatpush1.bf16.msra.mxu0 0
  %1433 = vmatprep.subr.bf16.mxu0 0
  %1434 = vmatpush1.bf16.msra.mxu0 0
  %1435 = vmatprep.subr.bf16.mxu0 0
  %1436 = vmatpush1.bf16.msra.mxu0 0
  %1437 = vmatprep.subr.bf16.mxu0 0
  %1438 = vmatpush1.bf16.msra.mxu0 0
  %1439 = vmatprep.subr.bf16.mxu0 0
  %1440 = vmatpush1.bf16.msra.mxu0 0
  %1441 = vmatprep.subr.bf16.mxu0 0
  %1442 = vmatpush1.bf16.msra.mxu0 0
  %1443 = vmatprep.subr.bf16.mxu0 0
  %1444 = vmatpush1.bf16.msra.mxu0 0
  %1445 = vmatprep.subr.bf16.mxu0 0
  %1446 = vmatpush1.bf16.msra.mxu0 0
  %1447 = vmatprep.subr.bf16.mxu0 0
  %1448 = vmatpush1.bf16.msra.mxu0 0
  %1449 = vmatprep.subr.bf16.mxu0 0
  %1450 = vmatpush1.bf16.msra.mxu0 0
  %1451 = vmatprep.subr.bf16.mxu0 0
  %1452 = vmatpush1.bf16.msra.mxu0 0
  %1453 = vmatprep.subr.bf16.mxu0 0
  %1454 = vmatpush1.bf16.msra.mxu0 0
  %1455 = vmatprep.subr.bf16.mxu0 0
  %1456 = vmatpush1.bf16.msra.mxu0 0
  %1457 = vmatprep.mubr.bf16.mxu0 0
  %1458 = vmatmul.mubr.bf16.gmra.mrb[0].mxu0 %v1420
  %v1459 = vpop.f32.mrb[0].mxu0
  %v1460 = vadd.f32 0.0, %v1459
  %v1461 = vpop.f32.mrb[0].mxu0
  %v1462 = vpop.f32.mrb[0].mxu0
  %v1463 = vpop.f32.mrb[0].mxu0
  %1464 = vdwg.mxu0
  %v1466 = vsel %vm573, %v1363, 0
  %v1469 = vsel %vm577, %v1367, 0
  %1471 = vmatprep.subr.bf16.mxu0 0
  %1472 = vmatpush1.bf16.msra.mxu0 %v1469
  %1473 = vmatprep.subr.bf16.mxu0 0
  %1474 = vmatpush1.bf16.msra.mxu0 0
  %1475 = vmatprep.subr.bf16.mxu0 0
  %1476 = vmatpush1.bf16.msra.mxu0 0
  %1477 = vmatprep.subr.bf16.mxu0 0
  %1478 = vmatpush1.bf16.msra.mxu0 0
  %1479 = vmatprep.subr.bf16.mxu0 0
  %1480 = vmatpush1.bf16.msra.mxu0 0
  %1481 = vmatprep.subr.bf16.mxu0 0
  %1482 = vmatpush1.bf16.msra.mxu0 0
  %1483 = vmatprep.subr.bf16.mxu0 0
  %1484 = vmatpush1.bf16.msra.mxu0 0
  %1485 = vmatprep.subr.bf16.mxu0 0
  %1486 = vmatpush1.bf16.msra.mxu0 0
  %1487 = vmatprep.subr.bf16.mxu0 0
  %1488 = vmatpush1.bf16.msra.mxu0 0
  %1489 = vmatprep.subr.bf16.mxu0 0
  %1490 = vmatpush1.bf16.msra.mxu0 0
  %1491 = vmatprep.subr.bf16.mxu0 0
  %1492 = vmatpush1.bf16.msra.mxu0 0
  %1493 = vmatprep.subr.bf16.mxu0 0
  %1494 = vmatpush1.bf16.msra.mxu0 0
  %1495 = vmatprep.subr.bf16.mxu0 0
  %1496 = vmatpush1.bf16.msra.mxu0 0
  %1497 = vmatprep.subr.bf16.mxu0 0
  %1498 = vmatpush1.bf16.msra.mxu0 0
  %1499 = vmatprep.subr.bf16.mxu0 0
  %1500 = vmatpush1.bf16.msra.mxu0 0
  %1501 = vmatprep.subr.bf16.mxu0 0
  %1502 = vmatpush1.bf16.msra.mxu0 0
  %1503 = vmatprep.mubr.bf16.mxu0 0
  %1504 = vmatmul.mubr.bf16.gmra.mrb[0].mxu0 %v1466
  %v1505 = vpop.f32.mrb[0].mxu0
  %v1506 = vadd.f32 0.0, %v1505
  %v1507 = vpop.f32.mrb[0].mxu0
  %v1508 = vpop.f32.mrb[0].mxu0
  %v1509 = vpop.f32.mrb[0].mxu0
  %1510 = vdwg.mxu0
  %v1512 = vsel %vm573, %v1364, 0
  %v1515 = vsel %vm577, %v1368, 0
  %1517 = vmatprep.subr.bf16.mxu0 0
  %1518 = vmatpush1.bf16.msra.mxu0 %v1515
  %1519 = vmatprep.subr.bf16.mxu0 0
  %1520 = vmatpush1.bf16.msra.mxu0 0
  %1521 = vmatprep.subr.bf16.mxu0 0
  %1522 = vmatpush1.bf16.msra.mxu0 0
  %1523 = vmatprep.subr.bf16.mxu0 0
  %1524 = vmatpush1.bf16.msra.mxu0 0
  %1525 = vmatprep.subr.bf16.mxu0 0
  %1526 = vmatpush1.bf16.msra.mxu0 0
  %1527 = vmatprep.subr.bf16.mxu0 0
  %1528 = vmatpush1.bf16.msra.mxu0 0
  %1529 = vmatprep.subr.bf16.mxu0 0
  %1530 = vmatpush1.bf16.msra.mxu0 0
  %1531 = vmatprep.subr.bf16.mxu0 0
  %1532 = vmatpush1.bf16.msra.mxu0 0
  %1533 = vmatprep.subr.bf16.mxu0 0
  %1534 = vmatpush1.bf16.msra.mxu0 0
  %1535 = vmatprep.subr.bf16.mxu0 0
  %1536 = vmatpush1.bf16.msra.mxu0 0
  %1537 = vmatprep.subr.bf16.mxu0 0
  %1538 = vmatpush1.bf16.msra.mxu0 0
  %1539 = vmatprep.subr.bf16.mxu0 0
  %1540 = vmatpush1.bf16.msra.mxu0 0
  %1541 = vmatprep.subr.bf16.mxu0 0
  %1542 = vmatpush1.bf16.msra.mxu0 0
  %1543 = vmatprep.subr.bf16.mxu0 0
  %1544 = vmatpush1.bf16.msra.mxu0 0
  %1545 = vmatprep.subr.bf16.mxu0 0
  %1546 = vmatpush1.bf16.msra.mxu0 0
  %1547 = vmatprep.subr.bf16.mxu0 0
  %1548 = vmatpush1.bf16.msra.mxu0 0
  %1549 = vmatprep.mubr.bf16.mxu0 0
  %1550 = vmatmul.mubr.bf16.gmra.mrb[0].mxu0 %v1512
  %v1551 = vpop.f32.mrb[0].mxu0
  %v1552 = vadd.f32 0.0, %v1551
  %v1553 = vpop.f32.mrb[0].mxu0
  %v1554 = vpop.f32.mrb[0].mxu0
  %v1555 = vpop.f32.mrb[0].mxu0
  %1556 = vdwg.mxu0
  %v1557 = vmul.f32 %v1414, 0.35355338
  %v1558 = vmul.f32 %v1460, 0.35355338
  %v1559 = vmul.f32 %v1506, 0.35355338
  %v1560 = vmul.f32 %v1552, 0.35355338
  %v1561 = vlaneseq
  %v1562 = vshrl.u32 %v1561, 7
  %v1563 = vsub.s32 1, %v1562
  %v1564 = vrot.slane %v126, %v1563
  %v1565 = vadd.f32 %v1557, %v1564
  %v1566 = vadd.f32 %v1558, %v1564
  %v1567 = vadd.f32 %v1559, %v1564
  %v1568 = vadd.f32 %v1560, %v1564
  %v1569 = vsel %vm573, %v1565, -inf
  %1570 = vmax.xlane.f32.xlu0 %v1569
  %v1571 = vpop.xlane.xlu0 %1570
  %v1572 = vsel %vm573, %v1566, -inf
  %1573 = vmax.xlane.f32.xlu0 %v1572
  %v1574 = vpop.xlane.xlu0 %1573
  %v1575 = vsel %vm573, %v1567, -inf
  %1576 = vmax.xlane.f32.xlu0 %v1575
  %v1577 = vpop.xlane.xlu0 %1576
  %v1578 = vsel %vm573, %v1568, -inf
  %1579 = vmax.xlane.f32.xlu0 %v1578
  %v1580 = vpop.xlane.xlu0 %1579
  %v1581 = vsub.f32 %v1565, %v1571
  %v1582 = vsub.f32 %v1566, %v1574
  %v1583 = vsub.f32 %v1567, %v1577
  %v1584 = vsub.f32 %v1568, %v1580
  %v1585 = vmul.f32 %v1581, 1.442695
  %v1586 = vpow.pop %v1585
  %v1587 = vmul.f32 %v1582, 1.442695
  %v1588 = vpow.pop %v1587
  %v1589 = vmul.f32 %v1583, 1.442695
  %v1590 = vpow.pop %v1589
  %v1591 = vmul.f32 %v1584, 1.442695
  %v1592 = vpow.pop %v1591
  %v1593 = vsel %vm573, %v1586, 0.0
  %1594 = vadd.xlane.f32.xlu0 %v1593
  %v1595 = vpop.xlane.xlu0 %1594
  %v1596 = vsel %vm573, %v1588, 0.0
  %1597 = vadd.xlane.f32.xlu0 %v1596
  %v1598 = vpop.xlane.xlu0 %1597
  %v1599 = vsel %vm573, %v1590, 0.0
  %1600 = vadd.xlane.f32.xlu0 %v1599
  %v1601 = vpop.xlane.xlu0 %1600
  %v1602 = vsel %vm573, %v1592, 0.0
  %1603 = vadd.xlane.f32.xlu0 %v1602
  %v1604 = vpop.xlane.xlu0 %1603
  %v1605 = vrcp.pop %v1595
  %v1606 = vrcp.pop %v1598
  %v1607 = vrcp.pop %v1601
  %v1608 = vrcp.pop %v1604
  %v1609 = vmul.f32 %v1586, %v1605
  %v1610 = vmul.f32 %v1588, %v1606
  %v1611 = vmul.f32 %v1590, %v1607
  %v1612 = vmul.f32 %v1592, %v1608
  %v1613 = vpack.c.bf16 %v1609, %v1609
  %v1614 = vpack.c.bf16 %v1610, %v1610
  %v1615 = vpack.c.bf16 %v1611, %v1611
  %v1616 = vpack.c.bf16 %v1612, %v1612
  %v1618 = vsel %vm573, %v1369, 0
  %v1621 = vsel %vm573, %v1613, 0
  %1623 = vmatprep.subr.bf16.mxu0 0
  %1624 = vmatpush1.bf16.xpose.msra.mxu0 %v1621
  %1625 = vmatprep.subr.bf16.mxu0 0
  %1626 = vmatpush1.bf16.xpose.msra.mxu0 0
  %1627 = vmatprep.subr.bf16.mxu0 0
  %1628 = vmatpush1.bf16.xpose.msra.mxu0 0
  %1629 = vmatprep.subr.bf16.mxu0 0
  %1630 = vmatpush1.bf16.xpose.msra.mxu0 0
  %1631 = vmatprep.subr.bf16.mxu0 0
  %1632 = vmatpush1.bf16.xpose.msra.mxu0 0
  %1633 = vmatprep.subr.bf16.mxu0 0
  %1634 = vmatpush1.bf16.xpose.msra.mxu0 0
  %1635 = vmatprep.subr.bf16.mxu0 0
  %1636 = vmatpush1.bf16.xpose.msra.mxu0 0
  %1637 = vmatprep.subr.bf16.mxu0 0
  %1638 = vmatpush1.bf16.xpose.msra.mxu0 0
  %1639 = vmatprep.subr.bf16.mxu0 0
  %1640 = vmatpush1.bf16.xpose.msra.mxu0 0
  %1641 = vmatprep.subr.bf16.mxu0 0
  %1642 = vmatpush1.bf16.xpose.msra.mxu0 0
  %1643 = vmatprep.subr.bf16.mxu0 0
  %1644 = vmatpush1.bf16.xpose.msra.mxu0 0
  %1645 = vmatprep.subr.bf16.mxu0 0
  %1646 = vmatpush1.bf16.xpose.msra.mxu0 0
  %1647 = vmatprep.subr.bf16.mxu0 0
  %1648 = vmatpush1.bf16.xpose.msra.mxu0 0
  %1649 = vmatprep.subr.bf16.mxu0 0
  %1650 = vmatpush1.bf16.xpose.msra.mxu0 0
  %1651 = vmatprep.subr.bf16.mxu0 0
  %1652 = vmatpush1.bf16.xpose.msra.mxu0 0
  %1653 = vmatprep.subr.bf16.mxu0 0
  %1654 = vmatpush1.bf16.xpose.msra.mxu0 0
  %1655 = vmatprep.mubr.bf16.mxu0 0
  %1656 = vmatmul.mubr.bf16.gmra.mrb[0].mxu0 %v1618
  %v1657 = vpop.f32.mrb[0].mxu0
  %v1658 = vadd.f32 0.0, %v1657
  %v1659 = vpop.f32.mrb[0].mxu0
  %v1660 = vpop.f32.mrb[0].mxu0
  %v1661 = vpop.f32.mrb[0].mxu0
  %1662 = vdwg.mxu0
  %v1664 = vsel %vm573, %v1370, 0
  %v1667 = vsel %vm573, %v1614, 0
  %1669 = vmatprep.subr.bf16.mxu0 0
  %1670 = vmatpush1.bf16.xpose.msra.mxu0 %v1667
  %1671 = vmatprep.subr.bf16.mxu0 0
  %1672 = vmatpush1.bf16.xpose.msra.mxu0 0
  %1673 = vmatprep.subr.bf16.mxu0 0
  %1674 = vmatpush1.bf16.xpose.msra.mxu0 0
  %1675 = vmatprep.subr.bf16.mxu0 0
  %1676 = vmatpush1.bf16.xpose.msra.mxu0 0
  %1677 = vmatprep.subr.bf16.mxu0 0
  %1678 = vmatpush1.bf16.xpose.msra.mxu0 0
  %1679 = vmatprep.subr.bf16.mxu0 0
  %1680 = vmatpush1.bf16.xpose.msra.mxu0 0
  %1681 = vmatprep.subr.bf16.mxu0 0
  %1682 = vmatpush1.bf16.xpose.msra.mxu0 0
  %1683 = vmatprep.subr.bf16.mxu0 0
  %1684 = vmatpush1.bf16.xpose.msra.mxu0 0
  %1685 = vmatprep.subr.bf16.mxu0 0
  %1686 = vmatpush1.bf16.xpose.msra.mxu0 0
  %1687 = vmatprep.subr.bf16.mxu0 0
  %1688 = vmatpush1.bf16.xpose.msra.mxu0 0
  %1689 = vmatprep.subr.bf16.mxu0 0
  %1690 = vmatpush1.bf16.xpose.msra.mxu0 0
  %1691 = vmatprep.subr.bf16.mxu0 0
  %1692 = vmatpush1.bf16.xpose.msra.mxu0 0
  %1693 = vmatprep.subr.bf16.mxu0 0
  %1694 = vmatpush1.bf16.xpose.msra.mxu0 0
  %1695 = vmatprep.subr.bf16.mxu0 0
  %1696 = vmatpush1.bf16.xpose.msra.mxu0 0
  %1697 = vmatprep.subr.bf16.mxu0 0
  %1698 = vmatpush1.bf16.xpose.msra.mxu0 0
  %1699 = vmatprep.subr.bf16.mxu0 0
  %1700 = vmatpush1.bf16.xpose.msra.mxu0 0
  %1701 = vmatprep.mubr.bf16.mxu0 0
  %1702 = vmatmul.mubr.bf16.gmra.mrb[0].mxu0 %v1664
  %v1703 = vpop.f32.mrb[0].mxu0
  %v1704 = vadd.f32 0.0, %v1703
  %v1705 = vpop.f32.mrb[0].mxu0
  %v1706 = vpop.f32.mrb[0].mxu0
  %v1707 = vpop.f32.mrb[0].mxu0
  %1708 = vdwg.mxu0
  %v1710 = vsel %vm573, %v1371, 0
  %v1713 = vsel %vm573, %v1615, 0
  %1715 = vmatprep.subr.bf16.mxu0 0
  %1716 = vmatpush1.bf16.xpose.msra.mxu0 %v1713
  %1717 = vmatprep.subr.bf16.mxu0 0
  %1718 = vmatpush1.bf16.xpose.msra.mxu0 0
  %1719 = vmatprep.subr.bf16.mxu0 0
  %1720 = vmatpush1.bf16.xpose.msra.mxu0 0
  %1721 = vmatprep.subr.bf16.mxu0 0
  %1722 = vmatpush1.bf16.xpose.msra.mxu0 0
  %1723 = vmatprep.subr.bf16.mxu0 0
  %1724 = vmatpush1.bf16.xpose.msra.mxu0 0
  %1725 = vmatprep.subr.bf16.mxu0 0
  %1726 = vmatpush1.bf16.xpose.msra.mxu0 0
  %1727 = vmatprep.subr.bf16.mxu0 0
  %1728 = vmatpush1.bf16.xpose.msra.mxu0 0
  %1729 = vmatprep.subr.bf16.mxu0 0
  %1730 = vmatpush1.bf16.xpose.msra.mxu0 0
  %1731 = vmatprep.subr.bf16.mxu0 0
  %1732 = vmatpush1.bf16.xpose.msra.mxu0 0
  %1733 = vmatprep.subr.bf16.mxu0 0
  %1734 = vmatpush1.bf16.xpose.msra.mxu0 0
  %1735 = vmatprep.subr.bf16.mxu0 0
  %1736 = vmatpush1.bf16.xpose.msra.mxu0 0
  %1737 = vmatprep.subr.bf16.mxu0 0
  %1738 = vmatpush1.bf16.xpose.msra.mxu0 0
  %1739 = vmatprep.subr.bf16.mxu0 0
  %1740 = vmatpush1.bf16.xpose.msra.mxu0 0
  %1741 = vmatprep.subr.bf16.mxu0 0
  %1742 = vmatpush1.bf16.xpose.msra.mxu0 0
  %1743 = vmatprep.subr.bf16.mxu0 0
  %1744 = vmatpush1.bf16.xpose.msra.mxu0 0
  %1745 = vmatprep.subr.bf16.mxu0 0
  %1746 = vmatpush1.bf16.xpose.msra.mxu0 0
  %1747 = vmatprep.mubr.bf16.mxu0 0
  %1748 = vmatmul.mubr.bf16.gmra.mrb[0].mxu0 %v1710
  %v1749 = vpop.f32.mrb[0].mxu0
  %v1750 = vadd.f32 0.0, %v1749
  %v1751 = vpop.f32.mrb[0].mxu0
  %v1752 = vpop.f32.mrb[0].mxu0
  %v1753 = vpop.f32.mrb[0].mxu0
  %1754 = vdwg.mxu0
  %v1756 = vsel %vm573, %v1372, 0
  %v1759 = vsel %vm573, %v1616, 0
  %1761 = vmatprep.subr.bf16.mxu0 0
  %1762 = vmatpush1.bf16.xpose.msra.mxu0 %v1759
  %1763 = vmatprep.subr.bf16.mxu0 0
  %1764 = vmatpush1.bf16.xpose.msra.mxu0 0
  %1765 = vmatprep.subr.bf16.mxu0 0
  %1766 = vmatpush1.bf16.xpose.msra.mxu0 0
  %1767 = vmatprep.subr.bf16.mxu0 0
  %1768 = vmatpush1.bf16.xpose.msra.mxu0 0
  %1769 = vmatprep.subr.bf16.mxu0 0
  %1770 = vmatpush1.bf16.xpose.msra.mxu0 0
  %1771 = vmatprep.subr.bf16.mxu0 0
  %1772 = vmatpush1.bf16.xpose.msra.mxu0 0
  %1773 = vmatprep.subr.bf16.mxu0 0
  %1774 = vmatpush1.bf16.xpose.msra.mxu0 0
  %1775 = vmatprep.subr.bf16.mxu0 0
  %1776 = vmatpush1.bf16.xpose.msra.mxu0 0
  %1777 = vmatprep.subr.bf16.mxu0 0
  %1778 = vmatpush1.bf16.xpose.msra.mxu0 0
  %1779 = vmatprep.subr.bf16.mxu0 0
  %1780 = vmatpush1.bf16.xpose.msra.mxu0 0
  %1781 = vmatprep.subr.bf16.mxu0 0
  %1782 = vmatpush1.bf16.xpose.msra.mxu0 0
  %1783 = vmatprep.subr.bf16.mxu0 0
  %1784 = vmatpush1.bf16.xpose.msra.mxu0 0
  %1785 = vmatprep.subr.bf16.mxu0 0
  %1786 = vmatpush1.bf16.xpose.msra.mxu0 0
  %1787 = vmatprep.subr.bf16.mxu0 0
  %1788 = vmatpush1.bf16.xpose.msra.mxu0 0
  %1789 = vmatprep.subr.bf16.mxu0 0
  %1790 = vmatpush1.bf16.xpose.msra.mxu0 0
  %1791 = vmatprep.subr.bf16.mxu0 0
  %1792 = vmatpush1.bf16.xpose.msra.mxu0 0
  %1793 = vmatprep.mubr.bf16.mxu0 0
  %1794 = vmatmul.mubr.bf16.gmra.mrb[0].mxu0 %v1756
  %v1795 = vpop.f32.mrb[0].mxu0
  %v1796 = vadd.f32 0.0, %v1795
  %v1797 = vpop.f32.mrb[0].mxu0
  %v1798 = vpop.f32.mrb[0].mxu0
  %v1799 = vpop.f32.mrb[0].mxu0
  %1800 = vdwg.mxu0
  %v1801 = vpack.c.bf16 %v1704, %v1658
  %v1802 = vpack.c.bf16 %v1796, %v1750
  %1803 = vxpose.xlu0.c.b16.start [1/8] %v1801, 128
  %1804 = vxpose.xlu0.c.b16.cont [2/8] %v1802, 128
  %1805 = vxpose.xlu0.c.b16.cont [3/8] 0, 128
  %1806 = vxpose.xlu0.c.b16.cont [4/8] 0, 128
  %1807 = vxpose.xlu0.c.b16.cont [5/8] 0, 128
  %1808 = vxpose.xlu0.c.b16.cont [6/8] 0, 128
  %1809 = vxpose.xlu0.c.b16.cont [7/8] 0, 128
  %1810 = vxpose.xlu0.c.b16.end [8/8] 0, 128
  %v1811 = vpop.trf.xlu0
  %v1812 = vpop.trf.xlu0
  %v1813 = vpop.trf.xlu0
  %v1814 = vpop.trf.xlu0
  %v1815 = vpop.trf.xlu0
  %v1816 = vpop.trf.xlu0
  %v1817 = vpop.trf.xlu0
  %v1818 = vpop.trf.xlu0
  %v1820 = vsel %vm82, %v1811, 0
  %1822 = vmatprep.subr.bf16.mxu0 0
  %1823 = vmatpush1.bf16.msra.mxu0 %v1035
  %1824 = vmatprep.subr.bf16.mxu0 0
  %1825 = vmatpush1.bf16.msra.mxu0 %v1036
  %1826 = vmatprep.subr.bf16.mxu0 0
  %1827 = vmatpush1.bf16.msra.mxu0 0
  %1828 = vmatprep.subr.bf16.mxu0 0
  %1829 = vmatpush1.bf16.msra.mxu0 0
  %1830 = vmatprep.subr.bf16.mxu0 0
  %1831 = vmatpush1.bf16.msra.mxu0 0
  %1832 = vmatprep.subr.bf16.mxu0 0
  %1833 = vmatpush1.bf16.msra.mxu0 0
  %1834 = vmatprep.subr.bf16.mxu0 0
  %1835 = vmatpush1.bf16.msra.mxu0 0
  %1836 = vmatprep.subr.bf16.mxu0 0
  %1837 = vmatpush1.bf16.msra.mxu0 0
  %1838 = vmatprep.subr.bf16.mxu0 0
  %1839 = vmatpush1.bf16.msra.mxu0 0
  %1840 = vmatprep.subr.bf16.mxu0 0
  %1841 = vmatpush1.bf16.msra.mxu0 0
  %1842 = vmatprep.subr.bf16.mxu0 0
  %1843 = vmatpush1.bf16.msra.mxu0 0
  %1844 = vmatprep.subr.bf16.mxu0 0
  %1845 = vmatpush1.bf16.msra.mxu0 0
  %1846 = vmatprep.subr.bf16.mxu0 0
  %1847 = vmatpush1.bf16.msra.mxu0 0
  %1848 = vmatprep.subr.bf16.mxu0 0
  %1849 = vmatpush1.bf16.msra.mxu0 0
  %1850 = vmatprep.subr.bf16.mxu0 0
  %1851 = vmatpush1.bf16.msra.mxu0 0
  %1852 = vmatprep.subr.bf16.mxu0 0
  %1853 = vmatpush1.bf16.msra.mxu0 0
  %1854 = vmatprep.mubr.bf16.mxu0 0
  %1855 = vmatmul.mubr.bf16.gmra.mrb[0].mxu0 %v1820
  %v1856 = vpop.f32.mrb[0].mxu0
  %v1857 = vadd.f32 %v1009, %v1856
  %v1858 = vpop.f32.mrb[0].mxu0
  %v1859 = vpop.f32.mrb[0].mxu0
  %v1860 = vpop.f32.mrb[0].mxu0
  %1861 = vdwg.mxu0
  %v1862 = vadd.f32 %v124, %v1077
  %v1863 = vadd.f32 %v125, %v1857
  %v1864 = vsel %vm82, %v1862, 0.0
  %1865 = vadd.xlane.f32.xlu0 %v1864
  %v1866 = vpop.xlane.xlu0 %1865
  %v1867 = vsel %vm82, %v1863, 0.0
  %1868 = vadd.xlane.f32.xlu0 %v1867
  %v1869 = vpop.xlane.xlu0 %1868
  %v1870 = vmul.f32 %v1866, %v89
  %v1871 = vmul.f32 %v1869, %v89
  %v1872 = vsub.f32 %v1862, %v1870
  %v1873 = vsub.f32 %v1863, %v1871
  %v1874 = vmul.f32 %v1872, %v1872
  %v1875 = vmul.f32 %v1873, %v1873
  %v1876 = vsel %vm82, %v1874, 0.0
  %1877 = vadd.xlane.f32.xlu0 %v1876
  %v1878 = vpop.xlane.xlu0 %1877
  %v1879 = vsel %vm82, %v1875, 0.0
  %1880 = vadd.xlane.f32.xlu0 %v1879
  %v1881 = vpop.xlane.xlu0 %1880
  %v1882 = vmul.f32 %v1878, %v89
  %v1883 = vmul.f32 %v1881, %v89
  %v1884 = vadd.f32 %v1882, 1e-05
  %v1885 = vadd.f32 %v1883, 1e-05
  %v1886 = vrsqrt.pop %v1884
  %v1887 = vrsqrt.pop %v1885
  %v1888 = vmul.f32 %v1872, %v1886
  %v1889 = vmul.f32 %v1873, %v1887
  %v1891 = vlaneseq
  %v1892 = vshrl.u32 %v1891, 7
  %v1893 = vsub.s32 0, %v1892
  %v1894 = vrot.slane %v156, %v1893
  %v1896 = vmul.f32 %v1888, %v1894
  %v1897 = vmul.f32 %v1889, %v1894
  %v1899 = vlaneseq
  %v1900 = vshrl.u32 %v1899, 7
  %v1901 = vsub.s32 0, %v1900
  %v1902 = vrot.slane %v157, %v1901
  %v1904 = vadd.f32 %v1896, %v1902
  %v1905 = vadd.f32 %v1897, %v1902
  %v1906 = vpack.c.bf16 %v1905, %v1904
  %v1908 = vlaneseq
  %v1909 = vshrl.u32 %v1908, 7
  %v1910 = vsub.s32 0, %v1909
  %v1911 = vrot.slane %v162, %v1910
  %v1917 = vunpack.c.l.b16 %v158
  %v1918 = vunpack.c.l.b16 %v159
  %v1919 = vunpack.c.l.b16 %v160
  %v1920 = vunpack.c.l.b16 %v161
  %v1921 = vpack.c.b16 %v1918, %v1917
  %v1922 = vpack.c.b16 %v1920, %v1919
  %v1926 = vsel %vm82, %v1906, 0
  %1928 = vmatprep.subr.bf16.mxu0 0
  %1929 = vmatpush1.bf16.msra.mxu0 %v1921
  %1930 = vmatprep.subr.bf16.mxu0 0
  %1931 = vmatpush1.bf16.msra.mxu0 %v1922
  %1932 = vmatprep.subr.bf16.mxu0 0
  %1933 = vmatpush1.bf16.msra.mxu0 0
  %1934 = vmatprep.subr.bf16.mxu0 0
  %1935 = vmatpush1.bf16.msra.mxu0 0
  %1936 = vmatprep.subr.bf16.mxu0 0
  %1937 = vmatpush1.bf16.msra.mxu0 0
  %1938 = vmatprep.subr.bf16.mxu0 0
  %1939 = vmatpush1.bf16.msra.mxu0 0
  %1940 = vmatprep.subr.bf16.mxu0 0
  %1941 = vmatpush1.bf16.msra.mxu0 0
  %1942 = vmatprep.subr.bf16.mxu0 0
  %1943 = vmatpush1.bf16.msra.mxu0 0
  %1944 = vmatprep.subr.bf16.mxu0 0
  %1945 = vmatpush1.bf16.msra.mxu0 0
  %1946 = vmatprep.subr.bf16.mxu0 0
  %1947 = vmatpush1.bf16.msra.mxu0 0
  %1948 = vmatprep.subr.bf16.mxu0 0
  %1949 = vmatpush1.bf16.msra.mxu0 0
  %1950 = vmatprep.subr.bf16.mxu0 0
  %1951 = vmatpush1.bf16.msra.mxu0 0
  %1952 = vmatprep.subr.bf16.mxu0 0
  %1953 = vmatpush1.bf16.msra.mxu0 0
  %1954 = vmatprep.subr.bf16.mxu0 0
  %1955 = vmatpush1.bf16.msra.mxu0 0
  %1956 = vmatprep.subr.bf16.mxu0 0
  %1957 = vmatpush1.bf16.msra.mxu0 0
  %1958 = vmatprep.subr.bf16.mxu0 0
  %1959 = vmatpush1.bf16.msra.mxu0 0
  %1960 = vmatprep.mubr.bf16.mxu0 0
  %1961 = vmatmul.mubr.bf16.gmra.mrb[0].mxu0 %v1926
  %v1962 = vpop.f32.mrb[0].mxu0
  %v1963 = vadd.f32 %v1911, %v1962
  %v1964 = vpop.f32.mrb[0].mxu0
  %v1965 = vpop.f32.mrb[0].mxu0
  %v1966 = vadd.f32 %v1911, %v1965
  %v1967 = vpop.f32.mrb[0].mxu0
  %1968 = vdwg.mxu0
  %v1969 = vmul.f32 %v1963, 0.5
  %v1970 = vmul.f32 %v1966, 0.5
  %v1971 = vmul.f32 %v1963, 0.044715
  %v1972 = vmul.f32 %v1966, 0.044715
  %v1973 = vmul.f32 %v1971, %v1963
  %v1974 = vmul.f32 %v1972, %v1966
  %v1975 = vmul.f32 %v1973, %v1963
  %v1976 = vmul.f32 %v1974, %v1966
  %v1977 = vadd.f32 %v1963, %v1975
  %v1978 = vadd.f32 %v1966, %v1976
  %v1979 = vmul.f32 %v1977, 0.7978846
  %v1980 = vmul.f32 %v1978, 0.7978846
  %v1981 = vtanh.pop %v1979
  %v1982 = vtanh.pop %v1980
  %v1983 = vadd.f32 %v1981, 1.0
  %v1984 = vadd.f32 %v1982, 1.0
  %v1985 = vmul.f32 %v1969, %v1983
  %v1986 = vmul.f32 %v1970, %v1984
  %v1987 = vpack.c.bf16 %v1986, %v1985
  %v1989 = vlaneseq
  %v1990 = vshrl.u32 %v1989, 7
  %v1991 = vsub.s32 0, %v1990
  %v1992 = vrot.slane %v171, %v1991
  %v2002 = vunpack.c.l.b16 %v163
  %v2003 = vunpack.c.l.b16 %v164
  %v2004 = vunpack.c.l.b16 %v165
  %v2005 = vunpack.c.l.b16 %v166
  %v2006 = vunpack.c.l.b16 %v167
  %v2007 = vunpack.c.l.b16 %v168
  %v2008 = vunpack.c.l.b16 %v169
  %v2009 = vunpack.c.l.b16 %v170
  %v2010 = vpack.c.b16 %v2003, %v2002
  %v2011 = vpack.c.b16 %v2005, %v2004
  %v2012 = vpack.c.b16 %v2007, %v2006
  %v2013 = vpack.c.b16 %v2009, %v2008
  %vm2018 = vcmask 523264
  %v2020 = vsel %vm2018, %v1987, 0
  %2022 = vmatprep.subr.bf16.mxu0 0
  %2023 = vmatpush1.bf16.msra.mxu0 %v2010
  %2024 = vmatprep.subr.bf16.mxu0 0
  %2025 = vmatpush1.bf16.msra.mxu0 %v2011
  %2026 = vmatprep.subr.bf16.mxu0 0
  %2027 = vmatpush1.bf16.msra.mxu0 %v2012
  %2028 = vmatprep.subr.bf16.mxu0 0
  %2029 = vmatpush1.bf16.msra.mxu0 %v2013
  %2030 = vmatprep.subr.bf16.mxu0 0
  %2031 = vmatpush1.bf16.msra.mxu0 0
  %2032 = vmatprep.subr.bf16.mxu0 0
  %2033 = vmatpush1.bf16.msra.mxu0 0
  %2034 = vmatprep.subr.bf16.mxu0 0
  %2035 = vmatpush1.bf16.msra.mxu0 0
  %2036 = vmatprep.subr.bf16.mxu0 0
  %2037 = vmatpush1.bf16.msra.mxu0 0
  %2038 = vmatprep.subr.bf16.mxu0 0
  %2039 = vmatpush1.bf16.msra.mxu0 0
  %2040 = vmatprep.subr.bf16.mxu0 0
  %2041 = vmatpush1.bf16.msra.mxu0 0
  %2042 = vmatprep.subr.bf16.mxu0 0
  %2043 = vmatpush1.bf16.msra.mxu0 0
  %2044 = vmatprep.subr.bf16.mxu0 0
  %2045 = vmatpush1.bf16.msra.mxu0 0
  %2046 = vmatprep.subr.bf16.mxu0 0
  %2047 = vmatpush1.bf16.msra.mxu0 0
  %2048 = vmatprep.subr.bf16.mxu0 0
  %2049 = vmatpush1.bf16.msra.mxu0 0
  %2050 = vmatprep.subr.bf16.mxu0 0
  %2051 = vmatpush1.bf16.msra.mxu0 0
  %2052 = vmatprep.subr.bf16.mxu0 0
  %2053 = vmatpush1.bf16.msra.mxu0 0
  %2054 = vmatprep.mubr.bf16.mxu0 0
  %2055 = vmatmul.mubr.bf16.gmra.mrb[0].mxu0 %v2020
  %v2056 = vpop.f32.mrb[0].mxu0
  %v2057 = vadd.f32 %v1992, %v2056
  %v2058 = vpop.f32.mrb[0].mxu0
  %v2059 = vpop.f32.mrb[0].mxu0
  %v2060 = vadd.f32 %v1992, %v2059
  %v2061 = vpop.f32.mrb[0].mxu0
  %2062 = vdwg.mxu0
  %v2063 = vadd.f32 %v1904, %v2057
  %v2064 = vadd.f32 %v1905, %v2060
  %v2065 = vsel %vm82, %v2063, 0.0
  %2066 = vadd.xlane.f32.xlu0 %v2065
  %v2067 = vpop.xlane.xlu0 %2066
  %v2068 = vsel %vm82, %v2064, 0.0
  %2069 = vadd.xlane.f32.xlu0 %v2068
  %v2070 = vpop.xlane.xlu0 %2069
  %v2071 = vmul.f32 %v2067, %v89
  %v2072 = vmul.f32 %v2070, %v89
  %v2073 = vsub.f32 %v2063, %v2071
  %v2074 = vsub.f32 %v2064, %v2072
  %v2075 = vmul.f32 %v2073, %v2073
  %v2076 = vmul.f32 %v2074, %v2074
  %v2077 = vsel %vm82, %v2075, 0.0
  %2078 = vadd.xlane.f32.xlu0 %v2077
  %v2079 = vpop.xlane.xlu0 %2078
  %v2080 = vsel %vm82, %v2076, 0.0
  %2081 = vadd.xlane.f32.xlu0 %v2080
  %v2082 = vpop.xlane.xlu0 %2081
  %v2083 = vmul.f32 %v2079, %v89
  %v2084 = vmul.f32 %v2082, %v89
  %v2085 = vadd.f32 %v2083, 1e-05
  %v2086 = vadd.f32 %v2084, 1e-05
  %v2087 = vrsqrt.pop %v2085
  %v2088 = vrsqrt.pop %v2086
  %v2089 = vmul.f32 %v2073, %v2087
  %v2090 = vmul.f32 %v2074, %v2088
  %v2092 = vlaneseq
  %v2093 = vshrl.u32 %v2092, 7
  %v2094 = vsub.s32 0, %v2093
  %v2095 = vrot.slane %v172, %v2094
  %v2097 = vmul.f32 %v2089, %v2095
  %v2098 = vmul.f32 %v2090, %v2095
  %v2100 = vlaneseq
  %v2101 = vshrl.u32 %v2100, 7
  %v2102 = vsub.s32 0, %v2101
  %v2103 = vrot.slane %v173, %v2102
  %v2105 = vadd.f32 %v2097, %v2103
  %v2106 = vadd.f32 %v2098, %v2103
  %s2107 = scalar_lea.vmem %s4, 16
  %v2108 = vld [vmem:[%s2107] sm:$0xf]
  %v2109 = vld [vmem:[%s2107 + $0x4] sm:$0xf]
  %v2110 = vld [vmem:[%s2107 + $0x8] sm:$0xf]
  %v2111 = vld [vmem:[%s2107 + $0xc] sm:$0xf]
  %s2112 = scalar_lea.vmem %s5, 32
  %v2113 = vld [vmem:[%s2112] sm:$0xff]
  %v2114 = vld [vmem:[%s2112 + $0x8] sm:$0xff]
  %v2115 = vld [vmem:[%s2112 + $0x10] sm:$0xff]
  %v2116 = vld [vmem:[%s2112 + $0x18] sm:$0xff]
  %s2117 = scalar_lea.vmem %s6, 16
  %v2118 = vld [vmem:[%s2117] sm:$0xf]
  %v2119 = vld [vmem:[%s2117 + $0x4] sm:$0xf]
  %v2120 = vld [vmem:[%s2117 + $0x8] sm:$0xf]
  %v2121 = vld [vmem:[%s2117 + $0xc] sm:$0xf]
  %s2122 = scalar_lea.vmem %s7, 32
  %v2123 = vld [vmem:[%s2122] sm:$0xff]
  %v2124 = vld [vmem:[%s2122 + $0x8] sm:$0xff]
  %v2125 = vld [vmem:[%s2122 + $0x10] sm:$0xff]
  %v2126 = vld [vmem:[%s2122 + $0x18] sm:$0xff]
  %s2127 = scalar_lea.vmem %s8, 16
  %v2128 = vld [vmem:[%s2127] sm:$0xf]
  %v2129 = vld [vmem:[%s2127 + $0x4] sm:$0xf]
  %v2130 = vld [vmem:[%s2127 + $0x8] sm:$0xf]
  %v2131 = vld [vmem:[%s2127 + $0xc] sm:$0xf]
  %s2132 = scalar_lea.vmem %s9, 32
  %v2133 = vld [vmem:[%s2132] sm:$0xff]
  %v2134 = vld [vmem:[%s2132 + $0x8] sm:$0xff]
  %v2135 = vld [vmem:[%s2132 + $0x10] sm:$0xff]
  %v2136 = vld [vmem:[%s2132 + $0x18] sm:$0xff]
  %s2137 = scalar_lea.vmem %s10, 16
  %v2138 = vld [vmem:[%s2137] sm:$0xf]
  %v2139 = vld [vmem:[%s2137 + $0x4] sm:$0xf]
  %v2140 = vld [vmem:[%s2137 + $0x8] sm:$0xf]
  %v2141 = vld [vmem:[%s2137 + $0xc] sm:$0xf]
  %s2142 = scalar_lea.vmem %s11, 1
  %v2143 = vld [vmem:[%s2142] sm:$0x1]
  %s2144 = scalar_lea.vmem %s12, 1
  %v2145 = vld [vmem:[%s2144] sm:$0x1]
  %s2146 = scalar_lea.vmem %s13, 1
  %v2147 = vld [vmem:[%s2146] sm:$0x1]
  %s2148 = scalar_lea.vmem %s14, 16
  %v2149 = vld [vmem:[%s2148] sm:$0xf]
  %v2150 = vld [vmem:[%s2148 + $0x4] sm:$0xf]
  %v2151 = vld [vmem:[%s2148 + $0x8] sm:$0xf]
  %v2152 = vld [vmem:[%s2148 + $0xc] sm:$0xf]
  %s2153 = scalar_lea.vmem %s15, 1
  %v2154 = vld [vmem:[%s2153] sm:$0x1]
  %s2155 = scalar_lea.vmem %s16, 32
  %v2156 = vld [vmem:[%s2155] sm:$0xf]
  %v2157 = vld [vmem:[%s2155 + $0x4] sm:$0xf]
  %v2158 = vld [vmem:[%s2155 + $0x8] sm:$0xf]
  %v2159 = vld [vmem:[%s2155 + $0xc] sm:$0xf]
  %v2160 = vld [vmem:[%s2155 + $0x10] sm:$0xf]
  %v2161 = vld [vmem:[%s2155 + $0x14] sm:$0xf]
  %v2162 = vld [vmem:[%s2155 + $0x18] sm:$0xf]
  %v2163 = vld [vmem:[%s2155 + $0x1c] sm:$0xf]
  %s2164 = scalar_lea.vmem %s17, 1
  %v2165 = vld [vmem:[%s2164] sm:$0x1]
  %s2166 = scalar_lea.vmem %s18, 1
  %v2167 = vld [vmem:[%s2166] sm:$0x1]
  %s2168 = scalar_lea.vmem %s19, 1
  %v2169 = vld [vmem:[%s2168] sm:$0x1]
  %v2170 = vpack.c.bf16 %v2105, %v2105
  %2172 = vset.pattern.permute.xlu0 0
  %2173 = vperm.xlu0 %2172, %v2113
  %v2174 = vpop.permute.xlu0 %2173
  %2177 = vset.pattern.permute.xlu0 0
  %2178 = vperm.xlu0 %2177, %v2114
  %v2179 = vpop.permute.xlu0 %2178
  %2182 = vset.pattern.permute.xlu0 0
  %2183 = vperm.xlu0 %2182, %v2115
  %v2184 = vpop.permute.xlu0 %2183
  %2187 = vset.pattern.permute.xlu0 0
  %2188 = vperm.xlu0 %2187, %v2116
  %v2189 = vpop.permute.xlu0 %2188
  %v2195 = vunpack.c.l.b16 %v2108
  %v2196 = vunpack.c.l.b16 %v2109
  %v2197 = vunpack.c.l.b16 %v2110
  %v2198 = vunpack.c.l.b16 %v2111
  %v2199 = vpack.c.b16 %v2196, %v2195
  %v2200 = vpack.c.b16 %v2198, %v2197
  %v2202 = vsel %vm82, %v2199, 0
  %v2205 = vsel %vm82, %v2200, 0
  %v2208 = vsel %vm82, %v2170, 0
  %2210 = vmatprep.subr.bf16.mxu0 0
  %2211 = vmatpush1.bf16.xpose.msra.mxu0 %v2208
  %2212 = vmatprep.subr.bf16.mxu0 0
  %2213 = vmatpush1.bf16.xpose.msra.mxu0 0
  %2214 = vmatprep.subr.bf16.mxu0 0
  %2215 = vmatpush1.bf16.xpose.msra.mxu0 0
  %2216 = vmatprep.subr.bf16.mxu0 0
  %2217 = vmatpush1.bf16.xpose.msra.mxu0 0
  %2218 = vmatprep.subr.bf16.mxu0 0
  %2219 = vmatpush1.bf16.xpose.msra.mxu0 0
  %2220 = vmatprep.subr.bf16.mxu0 0
  %2221 = vmatpush1.bf16.xpose.msra.mxu0 0
  %2222 = vmatprep.subr.bf16.mxu0 0
  %2223 = vmatpush1.bf16.xpose.msra.mxu0 0
  %2224 = vmatprep.subr.bf16.mxu0 0
  %2225 = vmatpush1.bf16.xpose.msra.mxu0 0
  %2226 = vmatprep.subr.bf16.mxu0 0
  %2227 = vmatpush1.bf16.xpose.msra.mxu0 0
  %2228 = vmatprep.subr.bf16.mxu0 0
  %2229 = vmatpush1.bf16.xpose.msra.mxu0 0
  %2230 = vmatprep.subr.bf16.mxu0 0
  %2231 = vmatpush1.bf16.xpose.msra.mxu0 0
  %2232 = vmatprep.subr.bf16.mxu0 0
  %2233 = vmatpush1.bf16.xpose.msra.mxu0 0
  %2234 = vmatprep.subr.bf16.mxu0 0
  %2235 = vmatpush1.bf16.xpose.msra.mxu0 0
  %2236 = vmatprep.subr.bf16.mxu0 0
  %2237 = vmatpush1.bf16.xpose.msra.mxu0 0
  %2238 = vmatprep.subr.bf16.mxu0 0
  %2239 = vmatpush1.bf16.xpose.msra.mxu0 0
  %2240 = vmatprep.subr.bf16.mxu0 0
  %2241 = vmatpush1.bf16.xpose.msra.mxu0 0
  %2242 = vmatprep.mubr.bf16.mxu0 0
  %2243 = vmatmul.mubr.bf16.gmra.mrb[0].mxu0 %v2202
  %v2244 = vpop.f32.mrb[0].mxu0
  %v2245 = vadd.f32 %v2174, %v2244
  %v2246 = vpop.f32.mrb[0].mxu0
  %v2247 = vpop.f32.mrb[0].mxu0
  %v2248 = vadd.f32 %v2179, %v2247
  %v2249 = vpop.f32.mrb[0].mxu0
  %2250 = vmatprep.mubr.bf16.mxu0 0
  %2251 = vmatmul.mubr.bf16.gmra.mrb[0].mxu0 %v2205
  %v2252 = vpop.f32.mrb[0].mxu0
  %v2253 = vadd.f32 %v2184, %v2252
  %v2254 = vpop.f32.mrb[0].mxu0
  %v2255 = vpop.f32.mrb[0].mxu0
  %v2256 = vadd.f32 %v2189, %v2255
  %v2257 = vpop.f32.mrb[0].mxu0
  %2258 = vdwg.mxu0
  %2260 = vset.pattern.permute.xlu0 0
  %2261 = vperm.xlu0 %2260, %v2123
  %v2262 = vpop.permute.xlu0 %2261
  %2265 = vset.pattern.permute.xlu0 0
  %2266 = vperm.xlu0 %2265, %v2124
  %v2267 = vpop.permute.xlu0 %2266
  %2270 = vset.pattern.permute.xlu0 0
  %2271 = vperm.xlu0 %2270, %v2125
  %v2272 = vpop.permute.xlu0 %2271
  %2275 = vset.pattern.permute.xlu0 0
  %2276 = vperm.xlu0 %2275, %v2126
  %v2277 = vpop.permute.xlu0 %2276
  %v2283 = vunpack.c.l.b16 %v2118
  %v2284 = vunpack.c.l.b16 %v2119
  %v2285 = vunpack.c.l.b16 %v2120
  %v2286 = vunpack.c.l.b16 %v2121
  %v2287 = vpack.c.b16 %v2284, %v2283
  %v2288 = vpack.c.b16 %v2286, %v2285
  %v2290 = vsel %vm82, %v2287, 0
  %v2293 = vsel %vm82, %v2288, 0
  %2295 = vmatprep.subr.bf16.mxu0 0
  %2296 = vmatpush1.bf16.xpose.msra.mxu0 %v2208
  %2297 = vmatprep.subr.bf16.mxu0 0
  %2298 = vmatpush1.bf16.xpose.msra.mxu0 0
  %2299 = vmatprep.subr.bf16.mxu0 0
  %2300 = vmatpush1.bf16.xpose.msra.mxu0 0
  %2301 = vmatprep.subr.bf16.mxu0 0
  %2302 = vmatpush1.bf16.xpose.msra.mxu0 0
  %2303 = vmatprep.subr.bf16.mxu0 0
  %2304 = vmatpush1.bf16.xpose.msra.mxu0 0
  %2305 = vmatprep.subr.bf16.mxu0 0
  %2306 = vmatpush1.bf16.xpose.msra.mxu0 0
  %2307 = vmatprep.subr.bf16.mxu0 0
  %2308 = vmatpush1.bf16.xpose.msra.mxu0 0
  %2309 = vmatprep.subr.bf16.mxu0 0
  %2310 = vmatpush1.bf16.xpose.msra.mxu0 0
  %2311 = vmatprep.subr.bf16.mxu0 0
  %2312 = vmatpush1.bf16.xpose.msra.mxu0 0
  %2313 = vmatprep.subr.bf16.mxu0 0
  %2314 = vmatpush1.bf16.xpose.msra.mxu0 0
  %2315 = vmatprep.subr.bf16.mxu0 0
  %2316 = vmatpush1.bf16.xpose.msra.mxu0 0
  %2317 = vmatprep.subr.bf16.mxu0 0
  %2318 = vmatpush1.bf16.xpose.msra.mxu0 0
  %2319 = vmatprep.subr.bf16.mxu0 0
  %2320 = vmatpush1.bf16.xpose.msra.mxu0 0
  %2321 = vmatprep.subr.bf16.mxu0 0
  %2322 = vmatpush1.bf16.xpose.msra.mxu0 0
  %2323 = vmatprep.subr.bf16.mxu0 0
  %2324 = vmatpush1.bf16.xpose.msra.mxu0 0
  %2325 = vmatprep.subr.bf16.mxu0 0
  %2326 = vmatpush1.bf16.xpose.msra.mxu0 0
  %2327 = vmatprep.mubr.bf16.mxu0 0
  %2328 = vmatmul.mubr.bf16.gmra.mrb[0].mxu0 %v2290
  %v2329 = vpop.f32.mrb[0].mxu0
  %v2330 = vadd.f32 %v2262, %v2329
  %v2331 = vpop.f32.mrb[0].mxu0
  %v2332 = vpop.f32.mrb[0].mxu0
  %v2333 = vadd.f32 %v2267, %v2332
  %v2334 = vpop.f32.mrb[0].mxu0
  %2335 = vmatprep.mubr.bf16.mxu0 0
  %2336 = vmatmul.mubr.bf16.gmra.mrb[0].mxu0 %v2293
  %v2337 = vpop.f32.mrb[0].mxu0
  %v2338 = vadd.f32 %v2272, %v2337
  %v2339 = vpop.f32.mrb[0].mxu0
  %v2340 = vpop.f32.mrb[0].mxu0
  %v2341 = vadd.f32 %v2277, %v2340
  %v2342 = vpop.f32.mrb[0].mxu0
  %2343 = vdwg.mxu0
  %2345 = vset.pattern.permute.xlu0 0
  %2346 = vperm.xlu0 %2345, %v2133
  %v2347 = vpop.permute.xlu0 %2346
  %2350 = vset.pattern.permute.xlu0 0
  %2351 = vperm.xlu0 %2350, %v2134
  %v2352 = vpop.permute.xlu0 %2351
  %2355 = vset.pattern.permute.xlu0 0
  %2356 = vperm.xlu0 %2355, %v2135
  %v2357 = vpop.permute.xlu0 %2356
  %2360 = vset.pattern.permute.xlu0 0
  %2361 = vperm.xlu0 %2360, %v2136
  %v2362 = vpop.permute.xlu0 %2361
  %v2368 = vunpack.c.l.b16 %v2128
  %v2369 = vunpack.c.l.b16 %v2129
  %v2370 = vunpack.c.l.b16 %v2130
  %v2371 = vunpack.c.l.b16 %v2131
  %v2372 = vpack.c.b16 %v2369, %v2368
  %v2373 = vpack.c.b16 %v2371, %v2370
  %v2375 = vsel %vm82, %v2372, 0
  %v2378 = vsel %vm82, %v2373, 0
  %2380 = vmatprep.subr.bf16.mxu0 0
  %2381 = vmatpush1.bf16.xpose.msra.mxu0 %v2208
  %2382 = vmatprep.subr.bf16.mxu0 0
  %2383 = vmatpush1.bf16.xpose.msra.mxu0 0
  %2384 = vmatprep.subr.bf16.mxu0 0
  %2385 = vmatpush1.bf16.xpose.msra.mxu0 0
  %2386 = vmatprep.subr.bf16.mxu0 0
  %2387 = vmatpush1.bf16.xpose.msra.mxu0 0
  %2388 = vmatprep.subr.bf16.mxu0 0
  %2389 = vmatpush1.bf16.xpose.msra.mxu0 0
  %2390 = vmatprep.subr.bf16.mxu0 0
  %2391 = vmatpush1.bf16.xpose.msra.mxu0 0
  %2392 = vmatprep.subr.bf16.mxu0 0
  %2393 = vmatpush1.bf16.xpose.msra.mxu0 0
  %2394 = vmatprep.subr.bf16.mxu0 0
  %2395 = vmatpush1.bf16.xpose.msra.mxu0 0
  %2396 = vmatprep.subr.bf16.mxu0 0
  %2397 = vmatpush1.bf16.xpose.msra.mxu0 0
  %2398 = vmatprep.subr.bf16.mxu0 0
  %2399 = vmatpush1.bf16.xpose.msra.mxu0 0
  %2400 = vmatprep.subr.bf16.mxu0 0
  %2401 = vmatpush1.bf16.xpose.msra.mxu0 0
  %2402 = vmatprep.subr.bf16.mxu0 0
  %2403 = vmatpush1.bf16.xpose.msra.mxu0 0
  %2404 = vmatprep.subr.bf16.mxu0 0
  %2405 = vmatpush1.bf16.xpose.msra.mxu0 0
  %2406 = vmatprep.subr.bf16.mxu0 0
  %2407 = vmatpush1.bf16.xpose.msra.mxu0 0
  %2408 = vmatprep.subr.bf16.mxu0 0
  %2409 = vmatpush1.bf16.xpose.msra.mxu0 0
  %2410 = vmatprep.subr.bf16.mxu0 0
  %2411 = vmatpush1.bf16.xpose.msra.mxu0 0
  %2412 = vmatprep.mubr.bf16.mxu0 0
  %2413 = vmatmul.mubr.bf16.gmra.mrb[0].mxu0 %v2375
  %v2414 = vpop.f32.mrb[0].mxu0
  %v2415 = vadd.f32 %v2347, %v2414
  %v2416 = vpop.f32.mrb[0].mxu0
  %v2417 = vpop.f32.mrb[0].mxu0
  %v2418 = vadd.f32 %v2352, %v2417
  %v2419 = vpop.f32.mrb[0].mxu0
  %2420 = vmatprep.mubr.bf16.mxu0 0
  %2421 = vmatmul.mubr.bf16.gmra.mrb[0].mxu0 %v2378
  %v2422 = vpop.f32.mrb[0].mxu0
  %v2423 = vadd.f32 %v2357, %v2422
  %v2424 = vpop.f32.mrb[0].mxu0
  %v2425 = vpop.f32.mrb[0].mxu0
  %v2426 = vadd.f32 %v2362, %v2425
  %v2427 = vpop.f32.mrb[0].mxu0
  %2428 = vdwg.mxu0
  %2429 = vxpose.xlu0.b32.start [1/16] %v2245, 128
  %2430 = vxpose.xlu0.b32.cont [2/16] 0.0, 128
  %2431 = vxpose.xlu0.b32.cont [3/16] 0.0, 128
  %2432 = vxpose.xlu0.b32.cont [4/16] 0.0, 128
  %2433 = vxpose.xlu0.b32.cont [5/16] 0.0, 128
  %2434 = vxpose.xlu0.b32.cont [6/16] 0.0, 128
  %2435 = vxpose.xlu0.b32.cont [7/16] 0.0, 128
  %2436 = vxpose.xlu0.b32.cont [8/16] 0.0, 128
  %2437 = vxpose.xlu0.b32.cont [9/16] 0.0, 128
  %2438 = vxpose.xlu0.b32.cont [10/16] 0.0, 128
  %2439 = vxpose.xlu0.b32.cont [11/16] 0.0, 128
  %2440 = vxpose.xlu0.b32.cont [12/16] 0.0, 128
  %2441 = vxpose.xlu0.b32.cont [13/16] 0.0, 128
  %2442 = vxpose.xlu0.b32.cont [14/16] 0.0, 128
  %2443 = vxpose.xlu0.b32.cont [15/16] 0.0, 128
  %2444 = vxpose.xlu0.b32.end [16/16] 0.0, 128
  %v2445 = vpop.trf.xlu0
  %v2446 = vpop.trf.xlu0
  %v2447 = vpop.trf.xlu0
  %v2448 = vpop.trf.xlu0
  %v2449 = vpop.trf.xlu0
  %v2450 = vpop.trf.xlu0
  %v2451 = vpop.trf.xlu0
  %v2452 = vpop.trf.xlu0
  %v2453 = vpop.trf.xlu0
  %v2454 = vpop.trf.xlu0
  %v2455 = vpop.trf.xlu0
  %v2456 = vpop.trf.xlu0
  %v2457 = vpop.trf.xlu0
  %v2458 = vpop.trf.xlu0
  %v2459 = vpop.trf.xlu0
  %v2460 = vpop.trf.xlu0
  %2461 = vxpose.xlu0.b32.start [1/16] %v2248, 128
  %2462 = vxpose.xlu0.b32.cont [2/16] 0.0, 128
  %2463 = vxpose.xlu0.b32.cont [3/16] 0.0, 128
  %2464 = vxpose.xlu0.b32.cont [4/16] 0.0, 128
  %2465 = vxpose.xlu0.b32.cont [5/16] 0.0, 128
  %2466 = vxpose.xlu0.b32.cont [6/16] 0.0, 128
  %2467 = vxpose.xlu0.b32.cont [7/16] 0.0, 128
  %2468 = vxpose.xlu0.b32.cont [8/16] 0.0, 128
  %2469 = vxpose.xlu0.b32.cont [9/16] 0.0, 128
  %2470 = vxpose.xlu0.b32.cont [10/16] 0.0, 128
  %2471 = vxpose.xlu0.b32.cont [11/16] 0.0, 128
  %2472 = vxpose.xlu0.b32.cont [12/16] 0.0, 128
  %2473 = vxpose.xlu0.b32.cont [13/16] 0.0, 128
  %2474 = vxpose.xlu0.b32.cont [14/16] 0.0, 128
  %2475 = vxpose.xlu0.b32.cont [15/16] 0.0, 128
  %2476 = vxpose.xlu0.b32.end [16/16] 0.0, 128
  %v2477 = vpop.trf.xlu0
  %v2478 = vpop.trf.xlu0
  %v2479 = vpop.trf.xlu0
  %v2480 = vpop.trf.xlu0
  %v2481 = vpop.trf.xlu0
  %v2482 = vpop.trf.xlu0
  %v2483 = vpop.trf.xlu0
  %v2484 = vpop.trf.xlu0
  %v2485 = vpop.trf.xlu0
  %v2486 = vpop.trf.xlu0
  %v2487 = vpop.trf.xlu0
  %v2488 = vpop.trf.xlu0
  %v2489 = vpop.trf.xlu0
  %v2490 = vpop.trf.xlu0
  %v2491 = vpop.trf.xlu0
  %v2492 = vpop.trf.xlu0
  %2493 = vxpose.xlu0.b32.start [1/16] %v2253, 128
  %2494 = vxpose.xlu0.b32.cont [2/16] 0.0, 128
  %2495 = vxpose.xlu0.b32.cont [3/16] 0.0, 128
  %2496 = vxpose.xlu0.b32.cont [4/16] 0.0, 128
  %2497 = vxpose.xlu0.b32.cont [5/16] 0.0, 128
  %2498 = vxpose.xlu0.b32.cont [6/16] 0.0, 128
  %2499 = vxpose.xlu0.b32.cont [7/16] 0.0, 128
  %2500 = vxpose.xlu0.b32.cont [8/16] 0.0, 128
  %2501 = vxpose.xlu0.b32.cont [9/16] 0.0, 128
  %2502 = vxpose.xlu0.b32.cont [10/16] 0.0, 128
  %2503 = vxpose.xlu0.b32.cont [11/16] 0.0, 128
  %2504 = vxpose.xlu0.b32.cont [12/16] 0.0, 128
  %2505 = vxpose.xlu0.b32.cont [13/16] 0.0, 128
  %2506 = vxpose.xlu0.b32.cont [14/16] 0.0, 128
  %2507 = vxpose.xlu0.b32.cont [15/16] 0.0, 128
  %2508 = vxpose.xlu0.b32.end [16/16] 0.0, 128
  %v2509 = vpop.trf.xlu0
  %v2510 = vpop.trf.xlu0
  %v2511 = vpop.trf.xlu0
  %v2512 = vpop.trf.xlu0
  %v2513 = vpop.trf.xlu0
  %v2514 = vpop.trf.xlu0
  %v2515 = vpop.trf.xlu0
  %v2516 = vpop.trf.xlu0
  %v2517 = vpop.trf.xlu0
  %v2518 = vpop.trf.xlu0
  %v2519 = vpop.trf.xlu0
  %v2520 = vpop.trf.xlu0
  %v2521 = vpop.trf.xlu0
  %v2522 = vpop.trf.xlu0
  %v2523 = vpop.trf.xlu0
  %v2524 = vpop.trf.xlu0
  %2525 = vxpose.xlu0.b32.start [1/16] %v2256, 128
  %2526 = vxpose.xlu0.b32.cont [2/16] 0.0, 128
  %2527 = vxpose.xlu0.b32.cont [3/16] 0.0, 128
  %2528 = vxpose.xlu0.b32.cont [4/16] 0.0, 128
  %2529 = vxpose.xlu0.b32.cont [5/16] 0.0, 128
  %2530 = vxpose.xlu0.b32.cont [6/16] 0.0, 128
  %2531 = vxpose.xlu0.b32.cont [7/16] 0.0, 128
  %2532 = vxpose.xlu0.b32.cont [8/16] 0.0, 128
  %2533 = vxpose.xlu0.b32.cont [9/16] 0.0, 128
  %2534 = vxpose.xlu0.b32.cont [10/16] 0.0, 128
  %2535 = vxpose.xlu0.b32.cont [11/16] 0.0, 128
  %2536 = vxpose.xlu0.b32.cont [12/16] 0.0, 128
  %2537 = vxpose.xlu0.b32.cont [13/16] 0.0, 128
  %2538 = vxpose.xlu0.b32.cont [14/16] 0.0, 128
  %2539 = vxpose.xlu0.b32.cont [15/16] 0.0, 128
  %2540 = vxpose.xlu0.b32.end [16/16] 0.0, 128
  %v2541 = vpop.trf.xlu0
  %v2542 = vpop.trf.xlu0
  %v2543 = vpop.trf.xlu0
  %v2544 = vpop.trf.xlu0
  %v2545 = vpop.trf.xlu0
  %v2546 = vpop.trf.xlu0
  %v2547 = vpop.trf.xlu0
  %v2548 = vpop.trf.xlu0
  %v2549 = vpop.trf.xlu0
  %v2550 = vpop.trf.xlu0
  %v2551 = vpop.trf.xlu0
  %v2552 = vpop.trf.xlu0
  %v2553 = vpop.trf.xlu0
  %v2554 = vpop.trf.xlu0
  %v2555 = vpop.trf.xlu0
  %v2556 = vpop.trf.xlu0
  %v2557 = vpack.c.bf16 %v2445, %v2445
  %v2558 = vpack.c.bf16 %v2477, %v2477
  %v2559 = vpack.c.bf16 %v2509, %v2509
  %v2560 = vpack.c.bf16 %v2541, %v2541
  %v2561 = vpack.c.bf16 %v2330, %v2330
  %v2562 = vpack.c.bf16 %v2333, %v2333
  %v2563 = vpack.c.bf16 %v2338, %v2338
  %v2564 = vpack.c.bf16 %v2341, %v2341
  %v2565 = vpack.c.bf16 %v2415, %v2415
  %v2566 = vpack.c.bf16 %v2418, %v2418
  %v2567 = vpack.c.bf16 %v2423, %v2423
  %v2568 = vpack.c.bf16 %v2426, %v2426
  %v2570 = vsel %vm573, %v2557, 0
  %v2573 = vsel %vm577, %v2561, 0
  %2575 = vmatprep.subr.bf16.mxu0 0
  %2576 = vmatpush1.bf16.msra.mxu0 %v2573
  %2577 = vmatprep.subr.bf16.mxu0 0
  %2578 = vmatpush1.bf16.msra.mxu0 0
  %2579 = vmatprep.subr.bf16.mxu0 0
  %2580 = vmatpush1.bf16.msra.mxu0 0
  %2581 = vmatprep.subr.bf16.mxu0 0
  %2582 = vmatpush1.bf16.msra.mxu0 0
  %2583 = vmatprep.subr.bf16.mxu0 0
  %2584 = vmatpush1.bf16.msra.mxu0 0
  %2585 = vmatprep.subr.bf16.mxu0 0
  %2586 = vmatpush1.bf16.msra.mxu0 0
  %2587 = vmatprep.subr.bf16.mxu0 0
  %2588 = vmatpush1.bf16.msra.mxu0 0
  %2589 = vmatprep.subr.bf16.mxu0 0
  %2590 = vmatpush1.bf16.msra.mxu0 0
  %2591 = vmatprep.subr.bf16.mxu0 0
  %2592 = vmatpush1.bf16.msra.mxu0 0
  %2593 = vmatprep.subr.bf16.mxu0 0
  %2594 = vmatpush1.bf16.msra.mxu0 0
  %2595 = vmatprep.subr.bf16.mxu0 0
  %2596 = vmatpush1.bf16.msra.mxu0 0
  %2597 = vmatprep.subr.bf16.mxu0 0
  %2598 = vmatpush1.bf16.msra.mxu0 0
  %2599 = vmatprep.subr.bf16.mxu0 0
  %2600 = vmatpush1.bf16.msra.mxu0 0
  %2601 = vmatprep.subr.bf16.mxu0 0
  %2602 = vmatpush1.bf16.msra.mxu0 0
  %2603 = vmatprep.subr.bf16.mxu0 0
  %2604 = vmatpush1.bf16.msra.mxu0 0
  %2605 = vmatprep.subr.bf16.mxu0 0
  %2606 = vmatpush1.bf16.msra.mxu0 0
  %2607 = vmatprep.mubr.bf16.mxu0 0
  %2608 = vmatmul.mubr.bf16.gmra.mrb[0].mxu0 %v2570
  %v2609 = vpop.f32.mrb[0].mxu0
  %v2610 = vadd.f32 0.0, %v2609
  %v2611 = vpop.f32.mrb[0].mxu0
  %v2612 = vpop.f32.mrb[0].mxu0
  %v2613 = vpop.f32.mrb[0].mxu0
  %2614 = vdwg.mxu0
  %v2616 = vsel %vm573, %v2558, 0
  %v2619 = vsel %vm577, %v2562, 0
  %2621 = vmatprep.subr.bf16.mxu0 0
  %2622 = vmatpush1.bf16.msra.mxu0 %v2619
  %2623 = vmatprep.subr.bf16.mxu0 0
  %2624 = vmatpush1.bf16.msra.mxu0 0
  %2625 = vmatprep.subr.bf16.mxu0 0
  %2626 = vmatpush1.bf16.msra.mxu0 0
  %2627 = vmatprep.subr.bf16.mxu0 0
  %2628 = vmatpush1.bf16.msra.mxu0 0
  %2629 = vmatprep.subr.bf16.mxu0 0
  %2630 = vmatpush1.bf16.msra.mxu0 0
  %2631 = vmatprep.subr.bf16.mxu0 0
  %2632 = vmatpush1.bf16.msra.mxu0 0
  %2633 = vmatprep.subr.bf16.mxu0 0
  %2634 = vmatpush1.bf16.msra.mxu0 0
  %2635 = vmatprep.subr.bf16.mxu0 0
  %2636 = vmatpush1.bf16.msra.mxu0 0
  %2637 = vmatprep.subr.bf16.mxu0 0
  %2638 = vmatpush1.bf16.msra.mxu0 0
  %2639 = vmatprep.subr.bf16.mxu0 0
  %2640 = vmatpush1.bf16.msra.mxu0 0
  %2641 = vmatprep.subr.bf16.mxu0 0
  %2642 = vmatpush1.bf16.msra.mxu0 0
  %2643 = vmatprep.subr.bf16.mxu0 0
  %2644 = vmatpush1.bf16.msra.mxu0 0
  %2645 = vmatprep.subr.bf16.mxu0 0
  %2646 = vmatpush1.bf16.msra.mxu0 0
  %2647 = vmatprep.subr.bf16.mxu0 0
  %2648 = vmatpush1.bf16.msra.mxu0 0
  %2649 = vmatprep.subr.bf16.mxu0 0
  %2650 = vmatpush1.bf16.msra.mxu0 0
  %2651 = vmatprep.subr.bf16.mxu0 0
  %2652 = vmatpush1.bf16.msra.mxu0 0
  %2653 = vmatprep.mubr.bf16.mxu0 0
  %2654 = vmatmul.mubr.bf16.gmra.mrb[0].mxu0 %v2616
  %v2655 = vpop.f32.mrb[0].mxu0
  %v2656 = vadd.f32 0.0, %v2655
  %v2657 = vpop.f32.mrb[0].mxu0
  %v2658 = vpop.f32.mrb[0].mxu0
  %v2659 = vpop.f32.mrb[0].mxu0
  %2660 = vdwg.mxu0
  %v2662 = vsel %vm573, %v2559, 0
  %v2665 = vsel %vm577, %v2563, 0
  %2667 = vmatprep.subr.bf16.mxu0 0
  %2668 = vmatpush1.bf16.msra.mxu0 %v2665
  %2669 = vmatprep.subr.bf16.mxu0 0
  %2670 = vmatpush1.bf16.msra.mxu0 0
  %2671 = vmatprep.subr.bf16.mxu0 0
  %2672 = vmatpush1.bf16.msra.mxu0 0
  %2673 = vmatprep.subr.bf16.mxu0 0
  %2674 = vmatpush1.bf16.msra.mxu0 0
  %2675 = vmatprep.subr.bf16.mxu0 0
  %2676 = vmatpush1.bf16.msra.mxu0 0
  %2677 = vmatprep.subr.bf16.mxu0 0
  %2678 = vmatpush1.bf16.msra.mxu0 0
  %2679 = vmatprep.subr.bf16.mxu0 0
  %2680 = vmatpush1.bf16.msra.mxu0 0
  %2681 = vmatprep.subr.bf16.mxu0 0
  %2682 = vmatpush1.bf16.msra.mxu0 0
  %2683 = vmatprep.subr.bf16.mxu0 0
  %2684 = vmatpush1.bf16.msra.mxu0 0
  %2685 = vmatprep.subr.bf16.mxu0 0
  %2686 = vmatpush1.bf16.msra.mxu0 0
  %2687 = vmatprep.subr.bf16.mxu0 0
  %2688 = vmatpush1.bf16.msra.mxu0 0
  %2689 = vmatprep.subr.bf16.mxu0 0
  %2690 = vmatpush1.bf16.msra.mxu0 0
  %2691 = vmatprep.subr.bf16.mxu0 0
  %2692 = vmatpush1.bf16.msra.mxu0 0
  %2693 = vmatprep.subr.bf16.mxu0 0
  %2694 = vmatpush1.bf16.msra.mxu0 0
  %2695 = vmatprep.subr.bf16.mxu0 0
  %2696 = vmatpush1.bf16.msra.mxu0 0
  %2697 = vmatprep.subr.bf16.mxu0 0
  %2698 = vmatpush1.bf16.msra.mxu0 0
  %2699 = vmatprep.mubr.bf16.mxu0 0
  %2700 = vmatmul.mubr.bf16.gmra.mrb[0].mxu0 %v2662
  %v2701 = vpop.f32.mrb[0].mxu0
  %v2702 = vadd.f32 0.0, %v2701
  %v2703 = vpop.f32.mrb[0].mxu0
  %v2704 = vpop.f32.mrb[0].mxu0
  %v2705 = vpop.f32.mrb[0].mxu0
  %2706 = vdwg.mxu0
  %v2708 = vsel %vm573, %v2560, 0
  %v2711 = vsel %vm577, %v2564, 0
  %2713 = vmatprep.subr.bf16.mxu0 0
  %2714 = vmatpush1.bf16.msra.mxu0 %v2711
  %2715 = vmatprep.subr.bf16.mxu0 0
  %2716 = vmatpush1.bf16.msra.mxu0 0
  %2717 = vmatprep.subr.bf16.mxu0 0
  %2718 = vmatpush1.bf16.msra.mxu0 0
  %2719 = vmatprep.subr.bf16.mxu0 0
  %2720 = vmatpush1.bf16.msra.mxu0 0
  %2721 = vmatprep.subr.bf16.mxu0 0
  %2722 = vmatpush1.bf16.msra.mxu0 0
  %2723 = vmatprep.subr.bf16.mxu0 0
  %2724 = vmatpush1.bf16.msra.mxu0 0
  %2725 = vmatprep.subr.bf16.mxu0 0
  %2726 = vmatpush1.bf16.msra.mxu0 0
  %2727 = vmatprep.subr.bf16.mxu0 0
  %2728 = vmatpush1.bf16.msra.mxu0 0
  %2729 = vmatprep.subr.bf16.mxu0 0
  %2730 = vmatpush1.bf16.msra.mxu0 0
  %2731 = vmatprep.subr.bf16.mxu0 0
  %2732 = vmatpush1.bf16.msra.mxu0 0
  %2733 = vmatprep.subr.bf16.mxu0 0
  %2734 = vmatpush1.bf16.msra.mxu0 0
  %2735 = vmatprep.subr.bf16.mxu0 0
  %2736 = vmatpush1.bf16.msra.mxu0 0
  %2737 = vmatprep.subr.bf16.mxu0 0
  %2738 = vmatpush1.bf16.msra.mxu0 0
  %2739 = vmatprep.subr.bf16.mxu0 0
  %2740 = vmatpush1.bf16.msra.mxu0 0
  %2741 = vmatprep.subr.bf16.mxu0 0
  %2742 = vmatpush1.bf16.msra.mxu0 0
  %2743 = vmatprep.subr.bf16.mxu0 0
  %2744 = vmatpush1.bf16.msra.mxu0 0
  %2745 = vmatprep.mubr.bf16.mxu0 0
  %2746 = vmatmul.mubr.bf16.gmra.mrb[0].mxu0 %v2708
  %v2747 = vpop.f32.mrb[0].mxu0
  %v2748 = vadd.f32 0.0, %v2747
  %v2749 = vpop.f32.mrb[0].mxu0
  %v2750 = vpop.f32.mrb[0].mxu0
  %v2751 = vpop.f32.mrb[0].mxu0
  %2752 = vdwg.mxu0
  %v2753 = vmul.f32 %v2610, 0.35355338
  %v2754 = vmul.f32 %v2656, 0.35355338
  %v2755 = vmul.f32 %v2702, 0.35355338
  %v2756 = vmul.f32 %v2748, 0.35355338
  %v2757 = vadd.f32 %v2753, %v766
  %v2758 = vadd.f32 %v2754, %v766
  %v2759 = vadd.f32 %v2755, %v766
  %v2760 = vadd.f32 %v2756, %v766
  %v2761 = vsel %vm573, %v2757, -inf
  %2762 = vmax.xlane.f32.xlu0 %v2761
  %v2763 = vpop.xlane.xlu0 %2762
  %v2764 = vsel %vm573, %v2758, -inf
  %2765 = vmax.xlane.f32.xlu0 %v2764
  %v2766 = vpop.xlane.xlu0 %2765
  %v2767 = vsel %vm573, %v2759, -inf
  %2768 = vmax.xlane.f32.xlu0 %v2767
  %v2769 = vpop.xlane.xlu0 %2768
  %v2770 = vsel %vm573, %v2760, -inf
  %2771 = vmax.xlane.f32.xlu0 %v2770
  %v2772 = vpop.xlane.xlu0 %2771
  %v2773 = vsub.f32 %v2757, %v2763
  %v2774 = vsub.f32 %v2758, %v2766
  %v2775 = vsub.f32 %v2759, %v2769
  %v2776 = vsub.f32 %v2760, %v2772
  %v2777 = vmul.f32 %v2773, 1.442695
  %v2778 = vpow.pop %v2777
  %v2779 = vmul.f32 %v2774, 1.442695
  %v2780 = vpow.pop %v2779
  %v2781 = vmul.f32 %v2775, 1.442695
  %v2782 = vpow.pop %v2781
  %v2783 = vmul.f32 %v2776, 1.442695
  %v2784 = vpow.pop %v2783
  %v2785 = vsel %vm573, %v2778, 0.0
  %2786 = vadd.xlane.f32.xlu0 %v2785
  %v2787 = vpop.xlane.xlu0 %2786
  %v2788 = vsel %vm573, %v2780, 0.0
  %2789 = vadd.xlane.f32.xlu0 %v2788
  %v2790 = vpop.xlane.xlu0 %2789
  %v2791 = vsel %vm573, %v2782, 0.0
  %2792 = vadd.xlane.f32.xlu0 %v2791
  %v2793 = vpop.xlane.xlu0 %2792
  %v2794 = vsel %vm573, %v2784, 0.0
  %2795 = vadd.xlane.f32.xlu0 %v2794
  %v2796 = vpop.xlane.xlu0 %2795
  %v2797 = vrcp.pop %v2787
  %v2798 = vrcp.pop %v2790
  %v2799 = vrcp.pop %v2793
  %v2800 = vrcp.pop %v2796
  %v2801 = vmul.f32 %v2778, %v2797
  %v2802 = vmul.f32 %v2780, %v2798
  %v2803 = vmul.f32 %v2782, %v2799
  %v2804 = vmul.f32 %v2784, %v2800
  %v2805 = vpack.c.bf16 %v2801, %v2801
  %v2806 = vpack.c.bf16 %v2802, %v2802
  %v2807 = vpack.c.bf16 %v2803, %v2803
  %v2808 = vpack.c.bf16 %v2804, %v2804
  %v2810 = vsel %vm573, %v2565, 0
  %v2813 = vsel %vm573, %v2805, 0
  %2815 = vmatprep.subr.bf16.mxu0 0
  %2816 = vmatpush1.bf16.xpose.msra.mxu0 %v2813
  %2817 = vmatprep.subr.bf16.mxu0 0
  %2818 = vmatpush1.bf16.xpose.msra.mxu0 0
  %2819 = vmatprep.subr.bf16.mxu0 0
  %2820 = vmatpush1.bf16.xpose.msra.mxu0 0
  %2821 = vmatprep.subr.bf16.mxu0 0
  %2822 = vmatpush1.bf16.xpose.msra.mxu0 0
  %2823 = vmatprep.subr.bf16.mxu0 0
  %2824 = vmatpush1.bf16.xpose.msra.mxu0 0
  %2825 = vmatprep.subr.bf16.mxu0 0
  %2826 = vmatpush1.bf16.xpose.msra.mxu0 0
  %2827 = vmatprep.subr.bf16.mxu0 0
  %2828 = vmatpush1.bf16.xpose.msra.mxu0 0
  %2829 = vmatprep.subr.bf16.mxu0 0
  %2830 = vmatpush1.bf16.xpose.msra.mxu0 0
  %2831 = vmatprep.subr.bf16.mxu0 0
  %2832 = vmatpush1.bf16.xpose.msra.mxu0 0
  %2833 = vmatprep.subr.bf16.mxu0 0
  %2834 = vmatpush1.bf16.xpose.msra.mxu0 0
  %2835 = vmatprep.subr.bf16.mxu0 0
  %2836 = vmatpush1.bf16.xpose.msra.mxu0 0
  %2837 = vmatprep.subr.bf16.mxu0 0
  %2838 = vmatpush1.bf16.xpose.msra.mxu0 0
  %2839 = vmatprep.subr.bf16.mxu0 0
  %2840 = vmatpush1.bf16.xpose.msra.mxu0 0
  %2841 = vmatprep.subr.bf16.mxu0 0
  %2842 = vmatpush1.bf16.xpose.msra.mxu0 0
  %2843 = vmatprep.subr.bf16.mxu0 0
  %2844 = vmatpush1.bf16.xpose.msra.mxu0 0
  %2845 = vmatprep.subr.bf16.mxu0 0
  %2846 = vmatpush1.bf16.xpose.msra.mxu0 0
  %2847 = vmatprep.mubr.bf16.mxu0 0
  %2848 = vmatmul.mubr.bf16.gmra.mrb[0].mxu0 %v2810
  %v2849 = vpop.f32.mrb[0].mxu0
  %v2850 = vadd.f32 0.0, %v2849
  %v2851 = vpop.f32.mrb[0].mxu0
  %v2852 = vpop.f32.mrb[0].mxu0
  %v2853 = vpop.f32.mrb[0].mxu0
  %2854 = vdwg.mxu0
  %v2856 = vsel %vm573, %v2566, 0
  %v2859 = vsel %vm573, %v2806, 0
  %2861 = vmatprep.subr.bf16.mxu0 0
  %2862 = vmatpush1.bf16.xpose.msra.mxu0 %v2859
  %2863 = vmatprep.subr.bf16.mxu0 0
  %2864 = vmatpush1.bf16.xpose.msra.mxu0 0
  %2865 = vmatprep.subr.bf16.mxu0 0
  %2866 = vmatpush1.bf16.xpose.msra.mxu0 0
  %2867 = vmatprep.subr.bf16.mxu0 0
  %2868 = vmatpush1.bf16.xpose.msra.mxu0 0
  %2869 = vmatprep.subr.bf16.mxu0 0
  %2870 = vmatpush1.bf16.xpose.msra.mxu0 0
  %2871 = vmatprep.subr.bf16.mxu0 0
  %2872 = vmatpush1.bf16.xpose.msra.mxu0 0
  %2873 = vmatprep.subr.bf16.mxu0 0
  %2874 = vmatpush1.bf16.xpose.msra.mxu0 0
  %2875 = vmatprep.subr.bf16.mxu0 0
  %2876 = vmatpush1.bf16.xpose.msra.mxu0 0
  %2877 = vmatprep.subr.bf16.mxu0 0
  %2878 = vmatpush1.bf16.xpose.msra.mxu0 0
  %2879 = vmatprep.subr.bf16.mxu0 0
  %2880 = vmatpush1.bf16.xpose.msra.mxu0 0
  %2881 = vmatprep.subr.bf16.mxu0 0
  %2882 = vmatpush1.bf16.xpose.msra.mxu0 0
  %2883 = vmatprep.subr.bf16.mxu0 0
  %2884 = vmatpush1.bf16.xpose.msra.mxu0 0
  %2885 = vmatprep.subr.bf16.mxu0 0
  %2886 = vmatpush1.bf16.xpose.msra.mxu0 0
  %2887 = vmatprep.subr.bf16.mxu0 0
  %2888 = vmatpush1.bf16.xpose.msra.mxu0 0
  %2889 = vmatprep.subr.bf16.mxu0 0
  %2890 = vmatpush1.bf16.xpose.msra.mxu0 0
  %2891 = vmatprep.subr.bf16.mxu0 0
  %2892 = vmatpush1.bf16.xpose.msra.mxu0 0
  %2893 = vmatprep.mubr.bf16.mxu0 0
  %2894 = vmatmul.mubr.bf16.gmra.mrb[0].mxu0 %v2856
  %v2895 = vpop.f32.mrb[0].mxu0
  %v2896 = vadd.f32 0.0, %v2895
  %v2897 = vpop.f32.mrb[0].mxu0
  %v2898 = vpop.f32.mrb[0].mxu0
  %v2899 = vpop.f32.mrb[0].mxu0
  %2900 = vdwg.mxu0
  %v2902 = vsel %vm573, %v2567, 0
  %v2905 = vsel %vm573, %v2807, 0
  %2907 = vmatprep.subr.bf16.mxu0 0
  %2908 = vmatpush1.bf16.xpose.msra.mxu0 %v2905
  %2909 = vmatprep.subr.bf16.mxu0 0
  %2910 = vmatpush1.bf16.xpose.msra.mxu0 0
  %2911 = vmatprep.subr.bf16.mxu0 0
  %2912 = vmatpush1.bf16.xpose.msra.mxu0 0
  %2913 = vmatprep.subr.bf16.mxu0 0
  %2914 = vmatpush1.bf16.xpose.msra.mxu0 0
  %2915 = vmatprep.subr.bf16.mxu0 0
  %2916 = vmatpush1.bf16.xpose.msra.mxu0 0
  %2917 = vmatprep.subr.bf16.mxu0 0
  %2918 = vmatpush1.bf16.xpose.msra.mxu0 0
  %2919 = vmatprep.subr.bf16.mxu0 0
  %2920 = vmatpush1.bf16.xpose.msra.mxu0 0
  %2921 = vmatprep.subr.bf16.mxu0 0
  %2922 = vmatpush1.bf16.xpose.msra.mxu0 0
  %2923 = vmatprep.subr.bf16.mxu0 0
  %2924 = vmatpush1.bf16.xpose.msra.mxu0 0
  %2925 = vmatprep.subr.bf16.mxu0 0
  %2926 = vmatpush1.bf16.xpose.msra.mxu0 0
  %2927 = vmatprep.subr.bf16.mxu0 0
  %2928 = vmatpush1.bf16.xpose.msra.mxu0 0
  %2929 = vmatprep.subr.bf16.mxu0 0
  %2930 = vmatpush1.bf16.xpose.msra.mxu0 0
  %2931 = vmatprep.subr.bf16.mxu0 0
  %2932 = vmatpush1.bf16.xpose.msra.mxu0 0
  %2933 = vmatprep.subr.bf16.mxu0 0
  %2934 = vmatpush1.bf16.xpose.msra.mxu0 0
  %2935 = vmatprep.subr.bf16.mxu0 0
  %2936 = vmatpush1.bf16.xpose.msra.mxu0 0
  %2937 = vmatprep.subr.bf16.mxu0 0
  %2938 = vmatpush1.bf16.xpose.msra.mxu0 0
  %2939 = vmatprep.mubr.bf16.mxu0 0
  %2940 = vmatmul.mubr.bf16.gmra.mrb[0].mxu0 %v2902
  %v2941 = vpop.f32.mrb[0].mxu0
  %v2942 = vadd.f32 0.0, %v2941
  %v2943 = vpop.f32.mrb[0].mxu0
  %v2944 = vpop.f32.mrb[0].mxu0
  %v2945 = vpop.f32.mrb[0].mxu0
  %2946 = vdwg.mxu0
  %v2948 = vsel %vm573, %v2568, 0
  %v2951 = vsel %vm573, %v2808, 0
  %2953 = vmatprep.subr.bf16.mxu0 0
  %2954 = vmatpush1.bf16.xpose.msra.mxu0 %v2951
  %2955 = vmatprep.subr.bf16.mxu0 0
  %2956 = vmatpush1.bf16.xpose.msra.mxu0 0
  %2957 = vmatprep.subr.bf16.mxu0 0
  %2958 = vmatpush1.bf16.xpose.msra.mxu0 0
  %2959 = vmatprep.subr.bf16.mxu0 0
  %2960 = vmatpush1.bf16.xpose.msra.mxu0 0
  %2961 = vmatprep.subr.bf16.mxu0 0
  %2962 = vmatpush1.bf16.xpose.msra.mxu0 0
  %2963 = vmatprep.subr.bf16.mxu0 0
  %2964 = vmatpush1.bf16.xpose.msra.mxu0 0
  %2965 = vmatprep.subr.bf16.mxu0 0
  %2966 = vmatpush1.bf16.xpose.msra.mxu0 0
  %2967 = vmatprep.subr.bf16.mxu0 0
  %2968 = vmatpush1.bf16.xpose.msra.mxu0 0
  %2969 = vmatprep.subr.bf16.mxu0 0
  %2970 = vmatpush1.bf16.xpose.msra.mxu0 0
  %2971 = vmatprep.subr.bf16.mxu0 0
  %2972 = vmatpush1.bf16.xpose.msra.mxu0 0
  %2973 = vmatprep.subr.bf16.mxu0 0
  %2974 = vmatpush1.bf16.xpose.msra.mxu0 0
  %2975 = vmatprep.subr.bf16.mxu0 0
  %2976 = vmatpush1.bf16.xpose.msra.mxu0 0
  %2977 = vmatprep.subr.bf16.mxu0 0
  %2978 = vmatpush1.bf16.xpose.msra.mxu0 0
  %2979 = vmatprep.subr.bf16.mxu0 0
  %2980 = vmatpush1.bf16.xpose.msra.mxu0 0
  %2981 = vmatprep.subr.bf16.mxu0 0
  %2982 = vmatpush1.bf16.xpose.msra.mxu0 0
  %2983 = vmatprep.subr.bf16.mxu0 0
  %2984 = vmatpush1.bf16.xpose.msra.mxu0 0
  %2985 = vmatprep.mubr.bf16.mxu0 0
  %2986 = vmatmul.mubr.bf16.gmra.mrb[0].mxu0 %v2948
  %v2987 = vpop.f32.mrb[0].mxu0
  %v2988 = vadd.f32 0.0, %v2987
  %v2989 = vpop.f32.mrb[0].mxu0
  %v2990 = vpop.f32.mrb[0].mxu0
  %v2991 = vpop.f32.mrb[0].mxu0
  %2992 = vdwg.mxu0
  %v2993 = vpack.c.bf16 %v2896, %v2850
  %v2994 = vpack.c.bf16 %v2988, %v2942
  %v2996 = vlaneseq
  %v2997 = vshrl.u32 %v2996, 7
  %v2998 = vsub.s32 0, %v2997
  %v2999 = vrot.slane %v2143, %v2998
  %3001 = vxpose.xlu0.c.b16.start [1/8] %v2993, 128
  %3002 = vxpose.xlu0.c.b16.cont [2/8] %v2994, 128
  %3003 = vxpose.xlu0.c.b16.cont [3/8] 0, 128
  %3004 = vxpose.xlu0.c.b16.cont [4/8] 0, 128
  %3005 = vxpose.xlu0.c.b16.cont [5/8] 0, 128
  %3006 = vxpose.xlu0.c.b16.cont [6/8] 0, 128
  %3007 = vxpose.xlu0.c.b16.cont [7/8] 0, 128
  %3008 = vxpose.xlu0.c.b16.end [8/8] 0, 128
  %v3009 = vpop.trf.xlu0
  %v3010 = vpop.trf.xlu0
  %v3011 = vpop.trf.xlu0
  %v3012 = vpop.trf.xlu0
  %v3013 = vpop.trf.xlu0
  %v3014 = vpop.trf.xlu0
  %v3015 = vpop.trf.xlu0
  %v3016 = vpop.trf.xlu0
  %v3021 = vunpack.c.l.b16 %v2138
  %v3022 = vunpack.c.l.b16 %v2139
  %v3023 = vunpack.c.l.b16 %v2140
  %v3024 = vunpack.c.l.b16 %v2141
  %v3025 = vpack.c.b16 %v3022, %v3021
  %v3026 = vpack.c.b16 %v3024, %v3023
  %v3030 = vsel %vm82, %v3009, 0
  %3032 = vmatprep.subr.bf16.mxu0 0
  %3033 = vmatpush1.bf16.msra.mxu0 %v3025
  %3034 = vmatprep.subr.bf16.mxu0 0
  %3035 = vmatpush1.bf16.msra.mxu0 %v3026
  %3036 = vmatprep.subr.bf16.mxu0 0
  %3037 = vmatpush1.bf16.msra.mxu0 0
  %3038 = vmatprep.subr.bf16.mxu0 0
  %3039 = vmatpush1.bf16.msra.mxu0 0
  %3040 = vmatprep.subr.bf16.mxu0 0
  %3041 = vmatpush1.bf16.msra.mxu0 0
  %3042 = vmatprep.subr.bf16.mxu0 0
  %3043 = vmatpush1.bf16.msra.mxu0 0
  %3044 = vmatprep.subr.bf16.mxu0 0
  %3045 = vmatpush1.bf16.msra.mxu0 0
  %3046 = vmatprep.subr.bf16.mxu0 0
  %3047 = vmatpush1.bf16.msra.mxu0 0
  %3048 = vmatprep.subr.bf16.mxu0 0
  %3049 = vmatpush1.bf16.msra.mxu0 0
  %3050 = vmatprep.subr.bf16.mxu0 0
  %3051 = vmatpush1.bf16.msra.mxu0 0
  %3052 = vmatprep.subr.bf16.mxu0 0
  %3053 = vmatpush1.bf16.msra.mxu0 0
  %3054 = vmatprep.subr.bf16.mxu0 0
  %3055 = vmatpush1.bf16.msra.mxu0 0
  %3056 = vmatprep.subr.bf16.mxu0 0
  %3057 = vmatpush1.bf16.msra.mxu0 0
  %3058 = vmatprep.subr.bf16.mxu0 0
  %3059 = vmatpush1.bf16.msra.mxu0 0
  %3060 = vmatprep.subr.bf16.mxu0 0
  %3061 = vmatpush1.bf16.msra.mxu0 0
  %3062 = vmatprep.subr.bf16.mxu0 0
  %3063 = vmatpush1.bf16.msra.mxu0 0
  %3064 = vmatprep.mubr.bf16.mxu0 0
  %3065 = vmatmul.mubr.bf16.gmra.mrb[0].mxu0 %v3030
  %v3066 = vpop.f32.mrb[0].mxu0
  %v3067 = vadd.f32 %v2999, %v3066
  %v3068 = vpop.f32.mrb[0].mxu0
  %v3069 = vpop.f32.mrb[0].mxu0
  %v3070 = vpop.f32.mrb[0].mxu0
  %3071 = vdwg.mxu0
  %v3072 = vpack.c.bf16 %v2106, %v2106
  %v3074 = vsel %vm82, %v3072, 0
  %3076 = vmatprep.subr.bf16.mxu0 0
  %3077 = vmatpush1.bf16.xpose.msra.mxu0 %v3074
  %3078 = vmatprep.subr.bf16.mxu0 0
  %3079 = vmatpush1.bf16.xpose.msra.mxu0 0
  %3080 = vmatprep.subr.bf16.mxu0 0
  %3081 = vmatpush1.bf16.xpose.msra.mxu0 0
  %3082 = vmatprep.subr.bf16.mxu0 0
  %3083 = vmatpush1.bf16.xpose.msra.mxu0 0
  %3084 = vmatprep.subr.bf16.mxu0 0
  %3085 = vmatpush1.bf16.xpose.msra.mxu0 0
  %3086 = vmatprep.subr.bf16.mxu0 0
  %3087 = vmatpush1.bf16.xpose.msra.mxu0 0
  %3088 = vmatprep.subr.bf16.mxu0 0
  %3089 = vmatpush1.bf16.xpose.msra.mxu0 0
  %3090 = vmatprep.subr.bf16.mxu0 0
  %3091 = vmatpush1.bf16.xpose.msra.mxu0 0
  %3092 = vmatprep.subr.bf16.mxu0 0
  %3093 = vmatpush1.bf16.xpose.msra.mxu0 0
  %3094 = vmatprep.subr.bf16.mxu0 0
  %3095 = vmatpush1.bf16.xpose.msra.mxu0 0
  %3096 = vmatprep.subr.bf16.mxu0 0
  %3097 = vmatpush1.bf16.xpose.msra.mxu0 0
  %3098 = vmatprep.subr.bf16.mxu0 0
  %3099 = vmatpush1.bf16.xpose.msra.mxu0 0
  %3100 = vmatprep.subr.bf16.mxu0 0
  %3101 = vmatpush1.bf16.xpose.msra.mxu0 0
  %3102 = vmatprep.subr.bf16.mxu0 0
  %3103 = vmatpush1.bf16.xpose.msra.mxu0 0
  %3104 = vmatprep.subr.bf16.mxu0 0
  %3105 = vmatpush1.bf16.xpose.msra.mxu0 0
  %3106 = vmatprep.subr.bf16.mxu0 0
  %3107 = vmatpush1.bf16.xpose.msra.mxu0 0
  %3108 = vmatprep.mubr.bf16.mxu0 0
  %3109 = vmatmul.mubr.bf16.gmra.mrb[0].mxu0 %v2202
  %v3110 = vpop.f32.mrb[0].mxu0
  %v3111 = vadd.f32 %v2174, %v3110
  %v3112 = vpop.f32.mrb[0].mxu0
  %v3113 = vpop.f32.mrb[0].mxu0
  %v3114 = vadd.f32 %v2179, %v3113
  %v3115 = vpop.f32.mrb[0].mxu0
  %3116 = vmatprep.mubr.bf16.mxu0 0
  %3117 = vmatmul.mubr.bf16.gmra.mrb[0].mxu0 %v2205
  %v3118 = vpop.f32.mrb[0].mxu0
  %v3119 = vadd.f32 %v2184, %v3118
  %v3120 = vpop.f32.mrb[0].mxu0
  %v3121 = vpop.f32.mrb[0].mxu0
  %v3122 = vadd.f32 %v2189, %v3121
  %v3123 = vpop.f32.mrb[0].mxu0
  %3124 = vdwg.mxu0
  %3125 = vmatprep.subr.bf16.mxu0 0
  %3126 = vmatpush1.bf16.xpose.msra.mxu0 %v3074
  %3127 = vmatprep.subr.bf16.mxu0 0
  %3128 = vmatpush1.bf16.xpose.msra.mxu0 0
  %3129 = vmatprep.subr.bf16.mxu0 0
  %3130 = vmatpush1.bf16.xpose.msra.mxu0 0
  %3131 = vmatprep.subr.bf16.mxu0 0
  %3132 = vmatpush1.bf16.xpose.msra.mxu0 0
  %3133 = vmatprep.subr.bf16.mxu0 0
  %3134 = vmatpush1.bf16.xpose.msra.mxu0 0
  %3135 = vmatprep.subr.bf16.mxu0 0
  %3136 = vmatpush1.bf16.xpose.msra.mxu0 0
  %3137 = vmatprep.subr.bf16.mxu0 0
  %3138 = vmatpush1.bf16.xpose.msra.mxu0 0
  %3139 = vmatprep.subr.bf16.mxu0 0
  %3140 = vmatpush1.bf16.xpose.msra.mxu0 0
  %3141 = vmatprep.subr.bf16.mxu0 0
  %3142 = vmatpush1.bf16.xpose.msra.mxu0 0
  %3143 = vmatprep.subr.bf16.mxu0 0
  %3144 = vmatpush1.bf16.xpose.msra.mxu0 0
  %3145 = vmatprep.subr.bf16.mxu0 0
  %3146 = vmatpush1.bf16.xpose.msra.mxu0 0
  %3147 = vmatprep.subr.bf16.mxu0 0
  %3148 = vmatpush1.bf16.xpose.msra.mxu0 0
  %3149 = vmatprep.subr.bf16.mxu0 0
  %3150 = vmatpush1.bf16.xpose.msra.mxu0 0
  %3151 = vmatprep.subr.bf16.mxu0 0
  %3152 = vmatpush1.bf16.xpose.msra.mxu0 0
  %3153 = vmatprep.subr.bf16.mxu0 0
  %3154 = vmatpush1.bf16.xpose.msra.mxu0 0
  %3155 = vmatprep.subr.bf16.mxu0 0
  %3156 = vmatpush1.bf16.xpose.msra.mxu0 0
  %3157 = vmatprep.mubr.bf16.mxu0 0
  %3158 = vmatmul.mubr.bf16.gmra.mrb[0].mxu0 %v2290
  %v3159 = vpop.f32.mrb[0].mxu0
  %v3160 = vadd.f32 %v2262, %v3159
  %v3161 = vpop.f32.mrb[0].mxu0
  %v3162 = vpop.f32.mrb[0].mxu0
  %v3163 = vadd.f32 %v2267, %v3162
  %v3164 = vpop.f32.mrb[0].mxu0
  %3165 = vmatprep.mubr.bf16.mxu0 0
  %3166 = vmatmul.mubr.bf16.gmra.mrb[0].mxu0 %v2293
  %v3167 = vpop.f32.mrb[0].mxu0
  %v3168 = vadd.f32 %v2272, %v3167
  %v3169 = vpop.f32.mrb[0].mxu0
  %v3170 = vpop.f32.mrb[0].mxu0
  %v3171 = vadd.f32 %v2277, %v3170
  %v3172 = vpop.f32.mrb[0].mxu0
  %3173 = vdwg.mxu0
  %3174 = vmatprep.subr.bf16.mxu0 0
  %3175 = vmatpush1.bf16.xpose.msra.mxu0 %v3074
  %3176 = vmatprep.subr.bf16.mxu0 0
  %3177 = vmatpush1.bf16.xpose.msra.mxu0 0
  %3178 = vmatprep.subr.bf16.mxu0 0
  %3179 = vmatpush1.bf16.xpose.msra.mxu0 0
  %3180 = vmatprep.subr.bf16.mxu0 0
  %3181 = vmatpush1.bf16.xpose.msra.mxu0 0
  %3182 = vmatprep.subr.bf16.mxu0 0
  %3183 = vmatpush1.bf16.xpose.msra.mxu0 0
  %3184 = vmatprep.subr.bf16.mxu0 0
  %3185 = vmatpush1.bf16.xpose.msra.mxu0 0
  %3186 = vmatprep.subr.bf16.mxu0 0
  %3187 = vmatpush1.bf16.xpose.msra.mxu0 0
  %3188 = vmatprep.subr.bf16.mxu0 0
  %3189 = vmatpush1.bf16.xpose.msra.mxu0 0
  %3190 = vmatprep.subr.bf16.mxu0 0
  %3191 = vmatpush1.bf16.xpose.msra.mxu0 0
  %3192 = vmatprep.subr.bf16.mxu0 0
  %3193 = vmatpush1.bf16.xpose.msra.mxu0 0
  %3194 = vmatprep.subr.bf16.mxu0 0
  %3195 = vmatpush1.bf16.xpose.msra.mxu0 0
  %3196 = vmatprep.subr.bf16.mxu0 0
  %3197 = vmatpush1.bf16.xpose.msra.mxu0 0
  %3198 = vmatprep.subr.bf16.mxu0 0
  %3199 = vmatpush1.bf16.xpose.msra.mxu0 0
  %3200 = vmatprep.subr.bf16.mxu0 0
  %3201 = vmatpush1.bf16.xpose.msra.mxu0 0
  %3202 = vmatprep.subr.bf16.mxu0 0
  %3203 = vmatpush1.bf16.xpose.msra.mxu0 0
  %3204 = vmatprep.subr.bf16.mxu0 0
  %3205 = vmatpush1.bf16.xpose.msra.mxu0 0
  %3206 = vmatprep.mubr.bf16.mxu0 0
  %3207 = vmatmul.mubr.bf16.gmra.mrb[0].mxu0 %v2375
  %v3208 = vpop.f32.mrb[0].mxu0
  %v3209 = vadd.f32 %v2347, %v3208
  %v3210 = vpop.f32.mrb[0].mxu0
  %v3211 = vpop.f32.mrb[0].mxu0
  %v3212 = vadd.f32 %v2352, %v3211
  %v3213 = vpop.f32.mrb[0].mxu0
  %3214 = vmatprep.mubr.bf16.mxu0 0
  %3215 = vmatmul.mubr.bf16.gmra.mrb[0].mxu0 %v2378
  %v3216 = vpop.f32.mrb[0].mxu0
  %v3217 = vadd.f32 %v2357, %v3216
  %v3218 = vpop.f32.mrb[0].mxu0
  %v3219 = vpop.f32.mrb[0].mxu0
  %v3220 = vadd.f32 %v2362, %v3219
  %v3221 = vpop.f32.mrb[0].mxu0
  %3222 = vdwg.mxu0
  %3223 = vxpose.xlu0.b32.start [1/16] %v3111, 128
  %3224 = vxpose.xlu0.b32.cont [2/16] 0.0, 128
  %3225 = vxpose.xlu0.b32.cont [3/16] 0.0, 128
  %3226 = vxpose.xlu0.b32.cont [4/16] 0.0, 128
  %3227 = vxpose.xlu0.b32.cont [5/16] 0.0, 128
  %3228 = vxpose.xlu0.b32.cont [6/16] 0.0, 128
  %3229 = vxpose.xlu0.b32.cont [7/16] 0.0, 128
  %3230 = vxpose.xlu0.b32.cont [8/16] 0.0, 128
  %3231 = vxpose.xlu0.b32.cont [9/16] 0.0, 128
  %3232 = vxpose.xlu0.b32.cont [10/16] 0.0, 128
  %3233 = vxpose.xlu0.b32.cont [11/16] 0.0, 128
  %3234 = vxpose.xlu0.b32.cont [12/16] 0.0, 128
  %3235 = vxpose.xlu0.b32.cont [13/16] 0.0, 128
  %3236 = vxpose.xlu0.b32.cont [14/16] 0.0, 128
  %3237 = vxpose.xlu0.b32.cont [15/16] 0.0, 128
  %3238 = vxpose.xlu0.b32.end [16/16] 0.0, 128
  %v3239 = vpop.trf.xlu0
  %v3240 = vpop.trf.xlu0
  %v3241 = vpop.trf.xlu0
  %v3242 = vpop.trf.xlu0
  %v3243 = vpop.trf.xlu0
  %v3244 = vpop.trf.xlu0
  %v3245 = vpop.trf.xlu0
  %v3246 = vpop.trf.xlu0
  %v3247 = vpop.trf.xlu0
  %v3248 = vpop.trf.xlu0
  %v3249 = vpop.trf.xlu0
  %v3250 = vpop.trf.xlu0
  %v3251 = vpop.trf.xlu0
  %v3252 = vpop.trf.xlu0
  %v3253 = vpop.trf.xlu0
  %v3254 = vpop.trf.xlu0
  %3255 = vxpose.xlu0.b32.start [1/16] %v3114, 128
  %3256 = vxpose.xlu0.b32.cont [2/16] 0.0, 128
  %3257 = vxpose.xlu0.b32.cont [3/16] 0.0, 128
  %3258 = vxpose.xlu0.b32.cont [4/16] 0.0, 128
  %3259 = vxpose.xlu0.b32.cont [5/16] 0.0, 128
  %3260 = vxpose.xlu0.b32.cont [6/16] 0.0, 128
  %3261 = vxpose.xlu0.b32.cont [7/16] 0.0, 128
  %3262 = vxpose.xlu0.b32.cont [8/16] 0.0, 128
  %3263 = vxpose.xlu0.b32.cont [9/16] 0.0, 128
  %3264 = vxpose.xlu0.b32.cont [10/16] 0.0, 128
  %3265 = vxpose.xlu0.b32.cont [11/16] 0.0, 128
  %3266 = vxpose.xlu0.b32.cont [12/16] 0.0, 128
  %3267 = vxpose.xlu0.b32.cont [13/16] 0.0, 128
  %3268 = vxpose.xlu0.b32.cont [14/16] 0.0, 128
  %3269 = vxpose.xlu0.b32.cont [15/16] 0.0, 128
  %3270 = vxpose.xlu0.b32.end [16/16] 0.0, 128
  %v3271 = vpop.trf.xlu0
  %v3272 = vpop.trf.xlu0
  %v3273 = vpop.trf.xlu0
  %v3274 = vpop.trf.xlu0
  %v3275 = vpop.trf.xlu0
  %v3276 = vpop.trf.xlu0
  %v3277 = vpop.trf.xlu0
  %v3278 = vpop.trf.xlu0
  %v3279 = vpop.trf.xlu0
  %v3280 = vpop.trf.xlu0
  %v3281 = vpop.trf.xlu0
  %v3282 = vpop.trf.xlu0
  %v3283 = vpop.trf.xlu0
  %v3284 = vpop.trf.xlu0
  %v3285 = vpop.trf.xlu0
  %v3286 = vpop.trf.xlu0
  %3287 = vxpose.xlu0.b32.start [1/16] %v3119, 128
  %3288 = vxpose.xlu0.b32.cont [2/16] 0.0, 128
  %3289 = vxpose.xlu0.b32.cont [3/16] 0.0, 128
  %3290 = vxpose.xlu0.b32.cont [4/16] 0.0, 128
  %3291 = vxpose.xlu0.b32.cont [5/16] 0.0, 128
  %3292 = vxpose.xlu0.b32.cont [6/16] 0.0, 128
  %3293 = vxpose.xlu0.b32.cont [7/16] 0.0, 128
  %3294 = vxpose.xlu0.b32.cont [8/16] 0.0, 128
  %3295 = vxpose.xlu0.b32.cont [9/16] 0.0, 128
  %3296 = vxpose.xlu0.b32.cont [10/16] 0.0, 128
  %3297 = vxpose.xlu0.b32.cont [11/16] 0.0, 128
  %3298 = vxpose.xlu0.b32.cont [12/16] 0.0, 128
  %3299 = vxpose.xlu0.b32.cont [13/16] 0.0, 128
  %3300 = vxpose.xlu0.b32.cont [14/16] 0.0, 128
  %3301 = vxpose.xlu0.b32.cont [15/16] 0.0, 128
  %3302 = vxpose.xlu0.b32.end [16/16] 0.0, 128
  %v3303 = vpop.trf.xlu0
  %v3304 = vpop.trf.xlu0
  %v3305 = vpop.trf.xlu0
  %v3306 = vpop.trf.xlu0
  %v3307 = vpop.trf.xlu0
  %v3308 = vpop.trf.xlu0
  %v3309 = vpop.trf.xlu0
  %v3310 = vpop.trf.xlu0
  %v3311 = vpop.trf.xlu0
  %v3312 = vpop.trf.xlu0
  %v3313 = vpop.trf.xlu0
  %v3314 = vpop.trf.xlu0
  %v3315 = vpop.trf.xlu0
  %v3316 = vpop.trf.xlu0
  %v3317 = vpop.trf.xlu0
  %v3318 = vpop.trf.xlu0
  %3319 = vxpose.xlu0.b32.start [1/16] %v3122, 128
  %3320 = vxpose.xlu0.b32.cont [2/16] 0.0, 128
  %3321 = vxpose.xlu0.b32.cont [3/16] 0.0, 128
  %3322 = vxpose.xlu0.b32.cont [4/16] 0.0, 128
  %3323 = vxpose.xlu0.b32.cont [5/16] 0.0, 128
  %3324 = vxpose.xlu0.b32.cont [6/16] 0.0, 128
  %3325 = vxpose.xlu0.b32.cont [7/16] 0.0, 128
  %3326 = vxpose.xlu0.b32.cont [8/16] 0.0, 128
  %3327 = vxpose.xlu0.b32.cont [9/16] 0.0, 128
  %3328 = vxpose.xlu0.b32.cont [10/16] 0.0, 128
  %3329 = vxpose.xlu0.b32.cont [11/16] 0.0, 128
  %3330 = vxpose.xlu0.b32.cont [12/16] 0.0, 128
  %3331 = vxpose.xlu0.b32.cont [13/16] 0.0, 128
  %3332 = vxpose.xlu0.b32.cont [14/16] 0.0, 128
  %3333 = vxpose.xlu0.b32.cont [15/16] 0.0, 128
  %3334 = vxpose.xlu0.b32.end [16/16] 0.0, 128
  %v3335 = vpop.trf.xlu0
  %v3336 = vpop.trf.xlu0
  %v3337 = vpop.trf.xlu0
  %v3338 = vpop.trf.xlu0
  %v3339 = vpop.trf.xlu0
  %v3340 = vpop.trf.xlu0
  %v3341 = vpop.trf.xlu0
  %v3342 = vpop.trf.xlu0
  %v3343 = vpop.trf.xlu0
  %v3344 = vpop.trf.xlu0
  %v3345 = vpop.trf.xlu0
  %v3346 = vpop.trf.xlu0
  %v3347 = vpop.trf.xlu0
  %v3348 = vpop.trf.xlu0
  %v3349 = vpop.trf.xlu0
  %v3350 = vpop.trf.xlu0
  %v3351 = vpack.c.bf16 %v3239, %v3239
  %v3352 = vpack.c.bf16 %v3271, %v3271
  %v3353 = vpack.c.bf16 %v3303, %v3303
  %v3354 = vpack.c.bf16 %v3335, %v3335
  %v3355 = vpack.c.bf16 %v3160, %v3160
  %v3356 = vpack.c.bf16 %v3163, %v3163
  %v3357 = vpack.c.bf16 %v3168, %v3168
  %v3358 = vpack.c.bf16 %v3171, %v3171
  %v3359 = vpack.c.bf16 %v3209, %v3209
  %v3360 = vpack.c.bf16 %v3212, %v3212
  %v3361 = vpack.c.bf16 %v3217, %v3217
  %v3362 = vpack.c.bf16 %v3220, %v3220
  %v3364 = vsel %vm573, %v3351, 0
  %v3367 = vsel %vm577, %v3355, 0
  %3369 = vmatprep.subr.bf16.mxu0 0
  %3370 = vmatpush1.bf16.msra.mxu0 %v3367
  %3371 = vmatprep.subr.bf16.mxu0 0
  %3372 = vmatpush1.bf16.msra.mxu0 0
  %3373 = vmatprep.subr.bf16.mxu0 0
  %3374 = vmatpush1.bf16.msra.mxu0 0
  %3375 = vmatprep.subr.bf16.mxu0 0
  %3376 = vmatpush1.bf16.msra.mxu0 0
  %3377 = vmatprep.subr.bf16.mxu0 0
  %3378 = vmatpush1.bf16.msra.mxu0 0
  %3379 = vmatprep.subr.bf16.mxu0 0
  %3380 = vmatpush1.bf16.msra.mxu0 0
  %3381 = vmatprep.subr.bf16.mxu0 0
  %3382 = vmatpush1.bf16.msra.mxu0 0
  %3383 = vmatprep.subr.bf16.mxu0 0
  %3384 = vmatpush1.bf16.msra.mxu0 0
  %3385 = vmatprep.subr.bf16.mxu0 0
  %3386 = vmatpush1.bf16.msra.mxu0 0
  %3387 = vmatprep.subr.bf16.mxu0 0
  %3388 = vmatpush1.bf16.msra.mxu0 0
  %3389 = vmatprep.subr.bf16.mxu0 0
  %3390 = vmatpush1.bf16.msra.mxu0 0
  %3391 = vmatprep.subr.bf16.mxu0 0
  %3392 = vmatpush1.bf16.msra.mxu0 0
  %3393 = vmatprep.subr.bf16.mxu0 0
  %3394 = vmatpush1.bf16.msra.mxu0 0
  %3395 = vmatprep.subr.bf16.mxu0 0
  %3396 = vmatpush1.bf16.msra.mxu0 0
  %3397 = vmatprep.subr.bf16.mxu0 0
  %3398 = vmatpush1.bf16.msra.mxu0 0
  %3399 = vmatprep.subr.bf16.mxu0 0
  %3400 = vmatpush1.bf16.msra.mxu0 0
  %3401 = vmatprep.mubr.bf16.mxu0 0
  %3402 = vmatmul.mubr.bf16.gmra.mrb[0].mxu0 %v3364
  %v3403 = vpop.f32.mrb[0].mxu0
  %v3404 = vadd.f32 0.0, %v3403
  %v3405 = vpop.f32.mrb[0].mxu0
  %v3406 = vpop.f32.mrb[0].mxu0
  %v3407 = vpop.f32.mrb[0].mxu0
  %3408 = vdwg.mxu0
  %v3410 = vsel %vm573, %v3352, 0
  %v3413 = vsel %vm577, %v3356, 0
  %3415 = vmatprep.subr.bf16.mxu0 0
  %3416 = vmatpush1.bf16.msra.mxu0 %v3413
  %3417 = vmatprep.subr.bf16.mxu0 0
  %3418 = vmatpush1.bf16.msra.mxu0 0
  %3419 = vmatprep.subr.bf16.mxu0 0
  %3420 = vmatpush1.bf16.msra.mxu0 0
  %3421 = vmatprep.subr.bf16.mxu0 0
  %3422 = vmatpush1.bf16.msra.mxu0 0
  %3423 = vmatprep.subr.bf16.mxu0 0
  %3424 = vmatpush1.bf16.msra.mxu0 0
  %3425 = vmatprep.subr.bf16.mxu0 0
  %3426 = vmatpush1.bf16.msra.mxu0 0
  %3427 = vmatprep.subr.bf16.mxu0 0
  %3428 = vmatpush1.bf16.msra.mxu0 0
  %3429 = vmatprep.subr.bf16.mxu0 0
  %3430 = vmatpush1.bf16.msra.mxu0 0
  %3431 = vmatprep.subr.bf16.mxu0 0
  %3432 = vmatpush1.bf16.msra.mxu0 0
  %3433 = vmatprep.subr.bf16.mxu0 0
  %3434 = vmatpush1.bf16.msra.mxu0 0
  %3435 = vmatprep.subr.bf16.mxu0 0
  %3436 = vmatpush1.bf16.msra.mxu0 0
  %3437 = vmatprep.subr.bf16.mxu0 0
  %3438 = vmatpush1.bf16.msra.mxu0 0
  %3439 = vmatprep.subr.bf16.mxu0 0
  %3440 = vmatpush1.bf16.msra.mxu0 0
  %3441 = vmatprep.subr.bf16.mxu0 0
  %3442 = vmatpush1.bf16.msra.mxu0 0
  %3443 = vmatprep.subr.bf16.mxu0 0
  %3444 = vmatpush1.bf16.msra.mxu0 0
  %3445 = vmatprep.subr.bf16.mxu0 0
  %3446 = vmatpush1.bf16.msra.mxu0 0
  %3447 = vmatprep.mubr.bf16.mxu0 0
  %3448 = vmatmul.mubr.bf16.gmra.mrb[0].mxu0 %v3410
  %v3449 = vpop.f32.mrb[0].mxu0
  %v3450 = vadd.f32 0.0, %v3449
  %v3451 = vpop.f32.mrb[0].mxu0
  %v3452 = vpop.f32.mrb[0].mxu0
  %v3453 = vpop.f32.mrb[0].mxu0
  %3454 = vdwg.mxu0
  %v3456 = vsel %vm573, %v3353, 0
  %v3459 = vsel %vm577, %v3357, 0
  %3461 = vmatprep.subr.bf16.mxu0 0
  %3462 = vmatpush1.bf16.msra.mxu0 %v3459
  %3463 = vmatprep.subr.bf16.mxu0 0
  %3464 = vmatpush1.bf16.msra.mxu0 0
  %3465 = vmatprep.subr.bf16.mxu0 0
  %3466 = vmatpush1.bf16.msra.mxu0 0
  %3467 = vmatprep.subr.bf16.mxu0 0
  %3468 = vmatpush1.bf16.msra.mxu0 0
  %3469 = vmatprep.subr.bf16.mxu0 0
  %3470 = vmatpush1.bf16.msra.mxu0 0
  %3471 = vmatprep.subr.bf16.mxu0 0
  %3472 = vmatpush1.bf16.msra.mxu0 0
  %3473 = vmatprep.subr.bf16.mxu0 0
  %3474 = vmatpush1.bf16.msra.mxu0 0
  %3475 = vmatprep.subr.bf16.mxu0 0
  %3476 = vmatpush1.bf16.msra.mxu0 0
  %3477 = vmatprep.subr.bf16.mxu0 0
  %3478 = vmatpush1.bf16.msra.mxu0 0
  %3479 = vmatprep.subr.bf16.mxu0 0
  %3480 = vmatpush1.bf16.msra.mxu0 0
  %3481 = vmatprep.subr.bf16.mxu0 0
  %3482 = vmatpush1.bf16.msra.mxu0 0
  %3483 = vmatprep.subr.bf16.mxu0 0
  %3484 = vmatpush1.bf16.msra.mxu0 0
  %3485 = vmatprep.subr.bf16.mxu0 0
  %3486 = vmatpush1.bf16.msra.mxu0 0
  %3487 = vmatprep.subr.bf16.mxu0 0
  %3488 = vmatpush1.bf16.msra.mxu0 0
  %3489 = vmatprep.subr.bf16.mxu0 0
  %3490 = vmatpush1.bf16.msra.mxu0 0
  %3491 = vmatprep.subr.bf16.mxu0 0
  %3492 = vmatpush1.bf16.msra.mxu0 0
  %3493 = vmatprep.mubr.bf16.mxu0 0
  %3494 = vmatmul.mubr.bf16.gmra.mrb[0].mxu0 %v3456
  %v3495 = vpop.f32.mrb[0].mxu0
  %v3496 = vadd.f32 0.0, %v3495
  %v3497 = vpop.f32.mrb[0].mxu0
  %v3498 = vpop.f32.mrb[0].mxu0
  %v3499 = vpop.f32.mrb[0].mxu0
  %3500 = vdwg.mxu0
  %v3502 = vsel %vm573, %v3354, 0
  %v3505 = vsel %vm577, %v3358, 0
  %3507 = vmatprep.subr.bf16.mxu0 0
  %3508 = vmatpush1.bf16.msra.mxu0 %v3505
  %3509 = vmatprep.subr.bf16.mxu0 0
  %3510 = vmatpush1.bf16.msra.mxu0 0
  %3511 = vmatprep.subr.bf16.mxu0 0
  %3512 = vmatpush1.bf16.msra.mxu0 0
  %3513 = vmatprep.subr.bf16.mxu0 0
  %3514 = vmatpush1.bf16.msra.mxu0 0
  %3515 = vmatprep.subr.bf16.mxu0 0
  %3516 = vmatpush1.bf16.msra.mxu0 0
  %3517 = vmatprep.subr.bf16.mxu0 0
  %3518 = vmatpush1.bf16.msra.mxu0 0
  %3519 = vmatprep.subr.bf16.mxu0 0
  %3520 = vmatpush1.bf16.msra.mxu0 0
  %3521 = vmatprep.subr.bf16.mxu0 0
  %3522 = vmatpush1.bf16.msra.mxu0 0
  %3523 = vmatprep.subr.bf16.mxu0 0
  %3524 = vmatpush1.bf16.msra.mxu0 0
  %3525 = vmatprep.subr.bf16.mxu0 0
  %3526 = vmatpush1.bf16.msra.mxu0 0
  %3527 = vmatprep.subr.bf16.mxu0 0
  %3528 = vmatpush1.bf16.msra.mxu0 0
  %3529 = vmatprep.subr.bf16.mxu0 0
  %3530 = vmatpush1.bf16.msra.mxu0 0
  %3531 = vmatprep.subr.bf16.mxu0 0
  %3532 = vmatpush1.bf16.msra.mxu0 0
  %3533 = vmatprep.subr.bf16.mxu0 0
  %3534 = vmatpush1.bf16.msra.mxu0 0
  %3535 = vmatprep.subr.bf16.mxu0 0
  %3536 = vmatpush1.bf16.msra.mxu0 0
  %3537 = vmatprep.subr.bf16.mxu0 0
  %3538 = vmatpush1.bf16.msra.mxu0 0
  %3539 = vmatprep.mubr.bf16.mxu0 0
  %3540 = vmatmul.mubr.bf16.gmra.mrb[0].mxu0 %v3502
  %v3541 = vpop.f32.mrb[0].mxu0
  %v3542 = vadd.f32 0.0, %v3541
  %v3543 = vpop.f32.mrb[0].mxu0
  %v3544 = vpop.f32.mrb[0].mxu0
  %v3545 = vpop.f32.mrb[0].mxu0
  %3546 = vdwg.mxu0
  %v3547 = vmul.f32 %v3404, 0.35355338
  %v3548 = vmul.f32 %v3450, 0.35355338
  %v3549 = vmul.f32 %v3496, 0.35355338
  %v3550 = vmul.f32 %v3542, 0.35355338
  %v3551 = vadd.f32 %v3547, %v1564
  %v3552 = vadd.f32 %v3548, %v1564
  %v3553 = vadd.f32 %v3549, %v1564
  %v3554 = vadd.f32 %v3550, %v1564
  %v3555 = vsel %vm573, %v3551, -inf
  %3556 = vmax.xlane.f32.xlu0 %v3555
  %v3557 = vpop.xlane.xlu0 %3556
  %v3558 = vsel %vm573, %v3552, -inf
  %3559 = vmax.xlane.f32.xlu0 %v3558
  %v3560 = vpop.xlane.xlu0 %3559
  %v3561 = vsel %vm573, %v3553, -inf
  %3562 = vmax.xlane.f32.xlu0 %v3561
  %v3563 = vpop.xlane.xlu0 %3562
  %v3564 = vsel %vm573, %v3554, -inf
  %3565 = vmax.xlane.f32.xlu0 %v3564
  %v3566 = vpop.xlane.xlu0 %3565
  %v3567 = vsub.f32 %v3551, %v3557
  %v3568 = vsub.f32 %v3552, %v3560
  %v3569 = vsub.f32 %v3553, %v3563
  %v3570 = vsub.f32 %v3554, %v3566
  %v3571 = vmul.f32 %v3567, 1.442695
  %v3572 = vpow.pop %v3571
  %v3573 = vmul.f32 %v3568, 1.442695
  %v3574 = vpow.pop %v3573
  %v3575 = vmul.f32 %v3569, 1.442695
  %v3576 = vpow.pop %v3575
  %v3577 = vmul.f32 %v3570, 1.442695
  %v3578 = vpow.pop %v3577
  %v3579 = vsel %vm573, %v3572, 0.0
  %3580 = vadd.xlane.f32.xlu0 %v3579
  %v3581 = vpop.xlane.xlu0 %3580
  %v3582 = vsel %vm573, %v3574, 0.0
  %3583 = vadd.xlane.f32.xlu0 %v3582
  %v3584 = vpop.xlane.xlu0 %3583
  %v3585 = vsel %vm573, %v3576, 0.0
  %3586 = vadd.xlane.f32.xlu0 %v3585
  %v3587 = vpop.xlane.xlu0 %3586
  %v3588 = vsel %vm573, %v3578, 0.0
  %3589 = vadd.xlane.f32.xlu0 %v3588
  %v3590 = vpop.xlane.xlu0 %3589
  %v3591 = vrcp.pop %v3581
  %v3592 = vrcp.pop %v3584
  %v3593 = vrcp.pop %v3587
  %v3594 = vrcp.pop %v3590
  %v3595 = vmul.f32 %v3572, %v3591
  %v3596 = vmul.f32 %v3574, %v3592
  %v3597 = vmul.f32 %v3576, %v3593
  %v3598 = vmul.f32 %v3578, %v3594
  %v3599 = vpack.c.bf16 %v3595, %v3595
  %v3600 = vpack.c.bf16 %v3596, %v3596
  %v3601 = vpack.c.bf16 %v3597, %v3597
  %v3602 = vpack.c.bf16 %v3598, %v3598
  %v3604 = vsel %vm573, %v3359, 0
  %v3607 = vsel %vm573, %v3599, 0
  %3609 = vmatprep.subr.bf16.mxu0 0
  %3610 = vmatpush1.bf16.xpose.msra.mxu0 %v3607
  %3611 = vmatprep.subr.bf16.mxu0 0
  %3612 = vmatpush1.bf16.xpose.msra.mxu0 0
  %3613 = vmatprep.subr.bf16.mxu0 0
  %3614 = vmatpush1.bf16.xpose.msra.mxu0 0
  %3615 = vmatprep.subr.bf16.mxu0 0
  %3616 = vmatpush1.bf16.xpose.msra.mxu0 0
  %3617 = vmatprep.subr.bf16.mxu0 0
  %3618 = vmatpush1.bf16.xpose.msra.mxu0 0
  %3619 = vmatprep.subr.bf16.mxu0 0
  %3620 = vmatpush1.bf16.xpose.msra.mxu0 0
  %3621 = vmatprep.subr.bf16.mxu0 0
  %3622 = vmatpush1.bf16.xpose.msra.mxu0 0
  %3623 = vmatprep.subr.bf16.mxu0 0
  %3624 = vmatpush1.bf16.xpose.msra.mxu0 0
  %3625 = vmatprep.subr.bf16.mxu0 0
  %3626 = vmatpush1.bf16.xpose.msra.mxu0 0
  %3627 = vmatprep.subr.bf16.mxu0 0
  %3628 = vmatpush1.bf16.xpose.msra.mxu0 0
  %3629 = vmatprep.subr.bf16.mxu0 0
  %3630 = vmatpush1.bf16.xpose.msra.mxu0 0
  %3631 = vmatprep.subr.bf16.mxu0 0
  %3632 = vmatpush1.bf16.xpose.msra.mxu0 0
  %3633 = vmatprep.subr.bf16.mxu0 0
  %3634 = vmatpush1.bf16.xpose.msra.mxu0 0
  %3635 = vmatprep.subr.bf16.mxu0 0
  %3636 = vmatpush1.bf16.xpose.msra.mxu0 0
  %3637 = vmatprep.subr.bf16.mxu0 0
  %3638 = vmatpush1.bf16.xpose.msra.mxu0 0
  %3639 = vmatprep.subr.bf16.mxu0 0
  %3640 = vmatpush1.bf16.xpose.msra.mxu0 0
  %3641 = vmatprep.mubr.bf16.mxu0 0
  %3642 = vmatmul.mubr.bf16.gmra.mrb[0].mxu0 %v3604
  %v3643 = vpop.f32.mrb[0].mxu0
  %v3644 = vadd.f32 0.0, %v3643
  %v3645 = vpop.f32.mrb[0].mxu0
  %v3646 = vpop.f32.mrb[0].mxu0
  %v3647 = vpop.f32.mrb[0].mxu0
  %3648 = vdwg.mxu0
  %v3650 = vsel %vm573, %v3360, 0
  %v3653 = vsel %vm573, %v3600, 0
  %3655 = vmatprep.subr.bf16.mxu0 0
  %3656 = vmatpush1.bf16.xpose.msra.mxu0 %v3653
  %3657 = vmatprep.subr.bf16.mxu0 0
  %3658 = vmatpush1.bf16.xpose.msra.mxu0 0
  %3659 = vmatprep.subr.bf16.mxu0 0
  %3660 = vmatpush1.bf16.xpose.msra.mxu0 0
  %3661 = vmatprep.subr.bf16.mxu0 0
  %3662 = vmatpush1.bf16.xpose.msra.mxu0 0
  %3663 = vmatprep.subr.bf16.mxu0 0
  %3664 = vmatpush1.bf16.xpose.msra.mxu0 0
  %3665 = vmatprep.subr.bf16.mxu0 0
  %3666 = vmatpush1.bf16.xpose.msra.mxu0 0
  %3667 = vmatprep.subr.bf16.mxu0 0
  %3668 = vmatpush1.bf16.xpose.msra.mxu0 0
  %3669 = vmatprep.subr.bf16.mxu0 0
  %3670 = vmatpush1.bf16.xpose.msra.mxu0 0
  %3671 = vmatprep.subr.bf16.mxu0 0
  %3672 = vmatpush1.bf16.xpose.msra.mxu0 0
  %3673 = vmatprep.subr.bf16.mxu0 0
  %3674 = vmatpush1.bf16.xpose.msra.mxu0 0
  %3675 = vmatprep.subr.bf16.mxu0 0
  %3676 = vmatpush1.bf16.xpose.msra.mxu0 0
  %3677 = vmatprep.subr.bf16.mxu0 0
  %3678 = vmatpush1.bf16.xpose.msra.mxu0 0
  %3679 = vmatprep.subr.bf16.mxu0 0
  %3680 = vmatpush1.bf16.xpose.msra.mxu0 0
  %3681 = vmatprep.subr.bf16.mxu0 0
  %3682 = vmatpush1.bf16.xpose.msra.mxu0 0
  %3683 = vmatprep.subr.bf16.mxu0 0
  %3684 = vmatpush1.bf16.xpose.msra.mxu0 0
  %3685 = vmatprep.subr.bf16.mxu0 0
  %3686 = vmatpush1.bf16.xpose.msra.mxu0 0
  %3687 = vmatprep.mubr.bf16.mxu0 0
  %3688 = vmatmul.mubr.bf16.gmra.mrb[0].mxu0 %v3650
  %v3689 = vpop.f32.mrb[0].mxu0
  %v3690 = vadd.f32 0.0, %v3689
  %v3691 = vpop.f32.mrb[0].mxu0
  %v3692 = vpop.f32.mrb[0].mxu0
  %v3693 = vpop.f32.mrb[0].mxu0
  %3694 = vdwg.mxu0
  %v3696 = vsel %vm573, %v3361, 0
  %v3699 = vsel %vm573, %v3601, 0
  %3701 = vmatprep.subr.bf16.mxu0 0
  %3702 = vmatpush1.bf16.xpose.msra.mxu0 %v3699
  %3703 = vmatprep.subr.bf16.mxu0 0
  %3704 = vmatpush1.bf16.xpose.msra.mxu0 0
  %3705 = vmatprep.subr.bf16.mxu0 0
  %3706 = vmatpush1.bf16.xpose.msra.mxu0 0
  %3707 = vmatprep.subr.bf16.mxu0 0
  %3708 = vmatpush1.bf16.xpose.msra.mxu0 0
  %3709 = vmatprep.subr.bf16.mxu0 0
  %3710 = vmatpush1.bf16.xpose.msra.mxu0 0
  %3711 = vmatprep.subr.bf16.mxu0 0
  %3712 = vmatpush1.bf16.xpose.msra.mxu0 0
  %3713 = vmatprep.subr.bf16.mxu0 0
  %3714 = vmatpush1.bf16.xpose.msra.mxu0 0
  %3715 = vmatprep.subr.bf16.mxu0 0
  %3716 = vmatpush1.bf16.xpose.msra.mxu0 0
  %3717 = vmatprep.subr.bf16.mxu0 0
  %3718 = vmatpush1.bf16.xpose.msra.mxu0 0
  %3719 = vmatprep.subr.bf16.mxu0 0
  %3720 = vmatpush1.bf16.xpose.msra.mxu0 0
  %3721 = vmatprep.subr.bf16.mxu0 0
  %3722 = vmatpush1.bf16.xpose.msra.mxu0 0
  %3723 = vmatprep.subr.bf16.mxu0 0
  %3724 = vmatpush1.bf16.xpose.msra.mxu0 0
  %3725 = vmatprep.subr.bf16.mxu0 0
  %3726 = vmatpush1.bf16.xpose.msra.mxu0 0
  %3727 = vmatprep.subr.bf16.mxu0 0
  %3728 = vmatpush1.bf16.xpose.msra.mxu0 0
  %3729 = vmatprep.subr.bf16.mxu0 0
  %3730 = vmatpush1.bf16.xpose.msra.mxu0 0
  %3731 = vmatprep.subr.bf16.mxu0 0
  %3732 = vmatpush1.bf16.xpose.msra.mxu0 0
  %3733 = vmatprep.mubr.bf16.mxu0 0
  %3734 = vmatmul.mubr.bf16.gmra.mrb[0].mxu0 %v3696
  %v3735 = vpop.f32.mrb[0].mxu0
  %v3736 = vadd.f32 0.0, %v3735
  %v3737 = vpop.f32.mrb[0].mxu0
  %v3738 = vpop.f32.mrb[0].mxu0
  %v3739 = vpop.f32.mrb[0].mxu0
  %3740 = vdwg.mxu0
  %v3742 = vsel %vm573, %v3362, 0
  %v3745 = vsel %vm573, %v3602, 0
  %3747 = vmatprep.subr.bf16.mxu0 0
  %3748 = vmatpush1.bf16.xpose.msra.mxu0 %v3745
  %3749 = vmatprep.subr.bf16.mxu0 0
  %3750 = vmatpush1.bf16.xpose.msra.mxu0 0
  %3751 = vmatprep.subr.bf16.mxu0 0
  %3752 = vmatpush1.bf16.xpose.msra.mxu0 0
  %3753 = vmatprep.subr.bf16.mxu0 0
  %3754 = vmatpush1.bf16.xpose.msra.mxu0 0
  %3755 = vmatprep.subr.bf16.mxu0 0
  %3756 = vmatpush1.bf16.xpose.msra.mxu0 0
  %3757 = vmatprep.subr.bf16.mxu0 0
  %3758 = vmatpush1.bf16.xpose.msra.mxu0 0
  %3759 = vmatprep.subr.bf16.mxu0 0
  %3760 = vmatpush1.bf16.xpose.msra.mxu0 0
  %3761 = vmatprep.subr.bf16.mxu0 0
  %3762 = vmatpush1.bf16.xpose.msra.mxu0 0
  %3763 = vmatprep.subr.bf16.mxu0 0
  %3764 = vmatpush1.bf16.xpose.msra.mxu0 0
  %3765 = vmatprep.subr.bf16.mxu0 0
  %3766 = vmatpush1.bf16.xpose.msra.mxu0 0
  %3767 = vmatprep.subr.bf16.mxu0 0
  %3768 = vmatpush1.bf16.xpose.msra.mxu0 0
  %3769 = vmatprep.subr.bf16.mxu0 0
  %3770 = vmatpush1.bf16.xpose.msra.mxu0 0
  %3771 = vmatprep.subr.bf16.mxu0 0
  %3772 = vmatpush1.bf16.xpose.msra.mxu0 0
  %3773 = vmatprep.subr.bf16.mxu0 0
  %3774 = vmatpush1.bf16.xpose.msra.mxu0 0
  %3775 = vmatprep.subr.bf16.mxu0 0
  %3776 = vmatpush1.bf16.xpose.msra.mxu0 0
  %3777 = vmatprep.subr.bf16.mxu0 0
  %3778 = vmatpush1.bf16.xpose.msra.mxu0 0
  %3779 = vmatprep.mubr.bf16.mxu0 0
  %3780 = vmatmul.mubr.bf16.gmra.mrb[0].mxu0 %v3742
  %v3781 = vpop.f32.mrb[0].mxu0
  %v3782 = vadd.f32 0.0, %v3781
  %v3783 = vpop.f32.mrb[0].mxu0
  %v3784 = vpop.f32.mrb[0].mxu0
  %v3785 = vpop.f32.mrb[0].mxu0
  %3786 = vdwg.mxu0
  %v3787 = vpack.c.bf16 %v3690, %v3644
  %v3788 = vpack.c.bf16 %v3782, %v3736
  %3789 = vxpose.xlu0.c.b16.start [1/8] %v3787, 128
  %3790 = vxpose.xlu0.c.b16.cont [2/8] %v3788, 128
  %3791 = vxpose.xlu0.c.b16.cont [3/8] 0, 128
  %3792 = vxpose.xlu0.c.b16.cont [4/8] 0, 128
  %3793 = vxpose.xlu0.c.b16.cont [5/8] 0, 128
  %3794 = vxpose.xlu0.c.b16.cont [6/8] 0, 128
  %3795 = vxpose.xlu0.c.b16.cont [7/8] 0, 128
  %3796 = vxpose.xlu0.c.b16.end [8/8] 0, 128
  %v3797 = vpop.trf.xlu0
  %v3798 = vpop.trf.xlu0
  %v3799 = vpop.trf.xlu0
  %v3800 = vpop.trf.xlu0
  %v3801 = vpop.trf.xlu0
  %v3802 = vpop.trf.xlu0
  %v3803 = vpop.trf.xlu0
  %v3804 = vpop.trf.xlu0
  %v3806 = vsel %vm82, %v3797, 0
  %3808 = vmatprep.subr.bf16.mxu0 0
  %3809 = vmatpush1.bf16.msra.mxu0 %v3025
  %3810 = vmatprep.subr.bf16.mxu0 0
  %3811 = vmatpush1.bf16.msra.mxu0 %v3026
  %3812 = vmatprep.subr.bf16.mxu0 0
  %3813 = vmatpush1.bf16.msra.mxu0 0
  %3814 = vmatprep.subr.bf16.mxu0 0
  %3815 = vmatpush1.bf16.msra.mxu0 0
  %3816 = vmatprep.subr.bf16.mxu0 0
  %3817 = vmatpush1.bf16.msra.mxu0 0
  %3818 = vmatprep.subr.bf16.mxu0 0
  %3819 = vmatpush1.bf16.msra.mxu0 0
  %3820 = vmatprep.subr.bf16.mxu0 0
  %3821 = vmatpush1.bf16.msra.mxu0 0
  %3822 = vmatprep.subr.bf16.mxu0 0
  %3823 = vmatpush1.bf16.msra.mxu0 0
  %3824 = vmatprep.subr.bf16.mxu0 0
  %3825 = vmatpush1.bf16.msra.mxu0 0
  %3826 = vmatprep.subr.bf16.mxu0 0
  %3827 = vmatpush1.bf16.msra.mxu0 0
  %3828 = vmatprep.subr.bf16.mxu0 0
  %3829 = vmatpush1.bf16.msra.mxu0 0
  %3830 = vmatprep.subr.bf16.mxu0 0
  %3831 = vmatpush1.bf16.msra.mxu0 0
  %3832 = vmatprep.subr.bf16.mxu0 0
  %3833 = vmatpush1.bf16.msra.mxu0 0
  %3834 = vmatprep.subr.bf16.mxu0 0
  %3835 = vmatpush1.bf16.msra.mxu0 0
  %3836 = vmatprep.subr.bf16.mxu0 0
  %3837 = vmatpush1.bf16.msra.mxu0 0
  %3838 = vmatprep.subr.bf16.mxu0 0
  %3839 = vmatpush1.bf16.msra.mxu0 0
  %3840 = vmatprep.mubr.bf16.mxu0 0
  %3841 = vmatmul.mubr.bf16.gmra.mrb[0].mxu0 %v3806
  %v3842 = vpop.f32.mrb[0].mxu0
  %v3843 = vadd.f32 %v2999, %v3842
  %v3844 = vpop.f32.mrb[0].mxu0
  %v3845 = vpop.f32.mrb[0].mxu0
  %v3846 = vpop.f32.mrb[0].mxu0
  %3847 = vdwg.mxu0
  %v3848 = vadd.f32 %v2105, %v3067
  %v3849 = vadd.f32 %v2106, %v3843
  %v3850 = vsel %vm82, %v3848, 0.0
  %3851 = vadd.xlane.f32.xlu0 %v3850
  %v3852 = vpop.xlane.xlu0 %3851
  %v3853 = vsel %vm82, %v3849, 0.0
  %3854 = vadd.xlane.f32.xlu0 %v3853
  %v3855 = vpop.xlane.xlu0 %3854
  %v3856 = vmul.f32 %v3852, %v89
  %v3857 = vmul.f32 %v3855, %v89
  %v3858 = vsub.f32 %v3848, %v3856
  %v3859 = vsub.f32 %v3849, %v3857
  %v3860 = vmul.f32 %v3858, %v3858
  %v3861 = vmul.f32 %v3859, %v3859
  %v3862 = vsel %vm82, %v3860, 0.0
  %3863 = vadd.xlane.f32.xlu0 %v3862
  %v3864 = vpop.xlane.xlu0 %3863
  %v3865 = vsel %vm82, %v3861, 0.0
  %3866 = vadd.xlane.f32.xlu0 %v3865
  %v3867 = vpop.xlane.xlu0 %3866
  %v3868 = vmul.f32 %v3864, %v89
  %v3869 = vmul.f32 %v3867, %v89
  %v3870 = vadd.f32 %v3868, 1e-05
  %v3871 = vadd.f32 %v3869, 1e-05
  %v3872 = vrsqrt.pop %v3870
  %v3873 = vrsqrt.pop %v3871
  %v3874 = vmul.f32 %v3858, %v3872
  %v3875 = vmul.f32 %v3859, %v3873
  %v3877 = vlaneseq
  %v3878 = vshrl.u32 %v3877, 7
  %v3879 = vsub.s32 0, %v3878
  %v3880 = vrot.slane %v2145, %v3879
  %v3882 = vmul.f32 %v3874, %v3880
  %v3883 = vmul.f32 %v3875, %v3880
  %v3885 = vlaneseq
  %v3886 = vshrl.u32 %v3885, 7
  %v3887 = vsub.s32 0, %v3886
  %v3888 = vrot.slane %v2147, %v3887
  %v3890 = vadd.f32 %v3882, %v3888
  %v3891 = vadd.f32 %v3883, %v3888
  %v3892 = vpack.c.bf16 %v3891, %v3890
  %v3894 = vlaneseq
  %v3895 = vshrl.u32 %v3894, 7
  %v3896 = vsub.s32 0, %v3895
  %v3897 = vrot.slane %v2154, %v3896
  %v3903 = vunpack.c.l.b16 %v2149
  %v3904 = vunpack.c.l.b16 %v2150
  %v3905 = vunpack.c.l.b16 %v2151
  %v3906 = vunpack.c.l.b16 %v2152
  %v3907 = vpack.c.b16 %v3904, %v3903
  %v3908 = vpack.c.b16 %v3906, %v3905
  %v3912 = vsel %vm82, %v3892, 0
  %3914 = vmatprep.subr.bf16.mxu0 0
  %3915 = vmatpush1.bf16.msra.mxu0 %v3907
  %3916 = vmatprep.subr.bf16.mxu0 0
  %3917 = vmatpush1.bf16.msra.mxu0 %v3908
  %3918 = vmatprep.subr.bf16.mxu0 0
  %3919 = vmatpush1.bf16.msra.mxu0 0
  %3920 = vmatprep.subr.bf16.mxu0 0
  %3921 = vmatpush1.bf16.msra.mxu0 0
  %3922 = vmatprep.subr.bf16.mxu0 0
  %3923 = vmatpush1.bf16.msra.mxu0 0
  %3924 = vmatprep.subr.bf16.mxu0 0
  %3925 = vmatpush1.bf16.msra.mxu0 0
  %3926 = vmatprep.subr.bf16.mxu0 0
  %3927 = vmatpush1.bf16.msra.mxu0 0
  %3928 = vmatprep.subr.bf16.mxu0 0
  %3929 = vmatpush1.bf16.msra.mxu0 0
  %3930 = vmatprep.subr.bf16.mxu0 0
  %3931 = vmatpush1.bf16.msra.mxu0 0
  %3932 = vmatprep.subr.bf16.mxu0 0
  %3933 = vmatpush1.bf16.msra.mxu0 0
  %3934 = vmatprep.subr.bf16.mxu0 0
  %3935 = vmatpush1.bf16.msra.mxu0 0
  %3936 = vmatprep.subr.bf16.mxu0 0
  %3937 = vmatpush1.bf16.msra.mxu0 0
  %3938 = vmatprep.subr.bf16.mxu0 0
  %3939 = vmatpush1.bf16.msra.mxu0 0
  %3940 = vmatprep.subr.bf16.mxu0 0
  %3941 = vmatpush1.bf16.msra.mxu0 0
  %3942 = vmatprep.subr.bf16.mxu0 0
  %3943 = vmatpush1.bf16.msra.mxu0 0
  %3944 = vmatprep.subr.bf16.mxu0 0
  %3945 = vmatpush1.bf16.msra.mxu0 0
  %3946 = vmatprep.mubr.bf16.mxu0 0
  %3947 = vmatmul.mubr.bf16.gmra.mrb[0].mxu0 %v3912
  %v3948 = vpop.f32.mrb[0].mxu0
  %v3949 = vadd.f32 %v3897, %v3948
  %v3950 = vpop.f32.mrb[0].mxu0
  %v3951 = vpop.f32.mrb[0].mxu0
  %v3952 = vadd.f32 %v3897, %v3951
  %v3953 = vpop.f32.mrb[0].mxu0
  %3954 = vdwg.mxu0
  %v3955 = vmul.f32 %v3949, 0.5
  %v3956 = vmul.f32 %v3952, 0.5
  %v3957 = vmul.f32 %v3949, 0.044715
  %v3958 = vmul.f32 %v3952, 0.044715
  %v3959 = vmul.f32 %v3957, %v3949
  %v3960 = vmul.f32 %v3958, %v3952
  %v3961 = vmul.f32 %v3959, %v3949
  %v3962 = vmul.f32 %v3960, %v3952
  %v3963 = vadd.f32 %v3949, %v3961
  %v3964 = vadd.f32 %v3952, %v3962
  %v3965 = vmul.f32 %v3963, 0.7978846
  %v3966 = vmul.f32 %v3964, 0.7978846
  %v3967 = vtanh.pop %v3965
  %v3968 = vtanh.pop %v3966
  %v3969 = vadd.f32 %v3967, 1.0
  %v3970 = vadd.f32 %v3968, 1.0
  %v3971 = vmul.f32 %v3955, %v3969
  %v3972 = vmul.f32 %v3956, %v3970
  %v3973 = vpack.c.bf16 %v3972, %v3971
  %v3975 = vlaneseq
  %v3976 = vshrl.u32 %v3975, 7
  %v3977 = vsub.s32 0, %v3976
  %v3978 = vrot.slane %v2165, %v3977
  %v3988 = vunpack.c.l.b16 %v2156
  %v3989 = vunpack.c.l.b16 %v2157
  %v3990 = vunpack.c.l.b16 %v2158
  %v3991 = vunpack.c.l.b16 %v2159
  %v3992 = vunpack.c.l.b16 %v2160
  %v3993 = vunpack.c.l.b16 %v2161
  %v3994 = vunpack.c.l.b16 %v2162
  %v3995 = vunpack.c.l.b16 %v2163
  %v3996 = vpack.c.b16 %v3989, %v3988
  %v3997 = vpack.c.b16 %v3991, %v3990
  %v3998 = vpack.c.b16 %v3993, %v3992
  %v3999 = vpack.c.b16 %v3995, %v3994
  %v4005 = vsel %vm2018, %v3973, 0
  %4007 = vmatprep.subr.bf16.mxu0 0
  %4008 = vmatpush1.bf16.msra.mxu0 %v3996
  %4009 = vmatprep.subr.bf16.mxu0 0
  %4010 = vmatpush1.bf16.msra.mxu0 %v3997
  %4011 = vmatprep.subr.bf16.mxu0 0
  %4012 = vmatpush1.bf16.msra.mxu0 %v3998
  %4013 = vmatprep.subr.bf16.mxu0 0
  %4014 = vmatpush1.bf16.msra.mxu0 %v3999
  %4015 = vmatprep.subr.bf16.mxu0 0
  %4016 = vmatpush1.bf16.msra.mxu0 0
  %4017 = vmatprep.subr.bf16.mxu0 0
  %4018 = vmatpush1.bf16.msra.mxu0 0
  %4019 = vmatprep.subr.bf16.mxu0 0
  %4020 = vmatpush1.bf16.msra.mxu0 0
  %4021 = vmatprep.subr.bf16.mxu0 0
  %4022 = vmatpush1.bf16.msra.mxu0 0
  %4023 = vmatprep.subr.bf16.mxu0 0
  %4024 = vmatpush1.bf16.msra.mxu0 0
  %4025 = vmatprep.subr.bf16.mxu0 0
  %4026 = vmatpush1.bf16.msra.mxu0 0
  %4027 = vmatprep.subr.bf16.mxu0 0
  %4028 = vmatpush1.bf16.msra.mxu0 0
  %4029 = vmatprep.subr.bf16.mxu0 0
  %4030 = vmatpush1.bf16.msra.mxu0 0
  %4031 = vmatprep.subr.bf16.mxu0 0
  %4032 = vmatpush1.bf16.msra.mxu0 0
  %4033 = vmatprep.subr.bf16.mxu0 0
  %4034 = vmatpush1.bf16.msra.mxu0 0
  %4035 = vmatprep.subr.bf16.mxu0 0
  %4036 = vmatpush1.bf16.msra.mxu0 0
  %4037 = vmatprep.subr.bf16.mxu0 0
  %4038 = vmatpush1.bf16.msra.mxu0 0
  %4039 = vmatprep.mubr.bf16.mxu0 0
  %4040 = vmatmul.mubr.bf16.gmra.mrb[0].mxu0 %v4005
  %v4041 = vpop.f32.mrb[0].mxu0
  %v4042 = vadd.f32 %v3978, %v4041
  %v4043 = vpop.f32.mrb[0].mxu0
  %v4044 = vpop.f32.mrb[0].mxu0
  %v4045 = vadd.f32 %v3978, %v4044
  %v4046 = vpop.f32.mrb[0].mxu0
  %4047 = vdwg.mxu0
  %v4048 = vadd.f32 %v3890, %v4042
  %v4049 = vadd.f32 %v3891, %v4045
  %v4050 = vsel %vm82, %v4048, 0.0
  %4051 = vadd.xlane.f32.xlu0 %v4050
  %v4052 = vpop.xlane.xlu0 %4051
  %v4053 = vsel %vm82, %v4049, 0.0
  %4054 = vadd.xlane.f32.xlu0 %v4053
  %v4055 = vpop.xlane.xlu0 %4054
  %v4056 = vmul.f32 %v4052, %v89
  %v4057 = vmul.f32 %v4055, %v89
  %v4058 = vsub.f32 %v4048, %v4056
  %v4059 = vsub.f32 %v4049, %v4057
  %v4060 = vmul.f32 %v4058, %v4058
  %v4061 = vmul.f32 %v4059, %v4059
  %v4062 = vsel %vm82, %v4060, 0.0
  %4063 = vadd.xlane.f32.xlu0 %v4062
  %v4064 = vpop.xlane.xlu0 %4063
  %v4065 = vsel %vm82, %v4061, 0.0
  %4066 = vadd.xlane.f32.xlu0 %v4065
  %v4067 = vpop.xlane.xlu0 %4066
  %v4068 = vmul.f32 %v4064, %v89
  %v4069 = vmul.f32 %v4067, %v89
  %v4070 = vadd.f32 %v4068, 1e-05
  %v4071 = vadd.f32 %v4069, 1e-05
  %v4072 = vrsqrt.pop %v4070
  %v4073 = vrsqrt.pop %v4071
  %v4074 = vmul.f32 %v4058, %v4072
  %v4075 = vmul.f32 %v4059, %v4073
  %v4077 = vlaneseq
  %v4078 = vshrl.u32 %v4077, 7
  %v4079 = vsub.s32 0, %v4078
  %v4080 = vrot.slane %v2167, %v4079
  %v4082 = vmul.f32 %v4074, %v4080
  %v4083 = vmul.f32 %v4075, %v4080
  %v4085 = vlaneseq
  %v4086 = vshrl.u32 %v4085, 7
  %v4087 = vsub.s32 0, %v4086
  %v4088 = vrot.slane %v2169, %v4087
  %v4090 = vadd.f32 %v4082, %v4088
  %v4091 = vadd.f32 %v4083, %v4088
  %v4092 = vpack.c.bf16 %v4091, %v4090
  %v4093 = vld [vmem:[%s20] sm:$0xf]
  %v4094 = vld [vmem:[%s20 + $0x4] sm:$0xf]
  %v4095 = vld [vmem:[%s20 + $0x8] sm:$0xf]
  %v4096 = vld [vmem:[%s20 + $0xc] sm:$0xf]
  %v4097 = vld [vmem:[%s21] sm:$0x1]
  %v4099 = vlaneseq
  %v4100 = vshrl.u32 %v4099, 7
  %v4101 = vsub.s32 0, %v4100
  %v4102 = vrot.slane %v4097, %v4101
  %v4108 = vunpack.c.l.b16 %v4093
  %v4109 = vunpack.c.l.b16 %v4094
  %v4110 = vunpack.c.l.b16 %v4095
  %v4111 = vunpack.c.l.b16 %v4096
  %v4112 = vpack.c.b16 %v4109, %v4108
  %v4113 = vpack.c.b16 %v4111, %v4110
  %v4117 = vsel %vm82, %v4092, 0
  %4119 = vmatprep.subr.bf16.mxu0 0
  %4120 = vmatpush1.bf16.msra.mxu0 %v4112
  %4121 = vmatprep.subr.bf16.mxu0 0
  %4122 = vmatpush1.bf16.msra.mxu0 %v4113
  %4123 = vmatprep.subr.bf16.mxu0 0
  %4124 = vmatpush1.bf16.msra.mxu0 0
  %4125 = vmatprep.subr.bf16.mxu0 0
  %4126 = vmatpush1.bf16.msra.mxu0 0
  %4127 = vmatprep.subr.bf16.mxu0 0
  %4128 = vmatpush1.bf16.msra.mxu0 0
  %4129 = vmatprep.subr.bf16.mxu0 0
  %4130 = vmatpush1.bf16.msra.mxu0 0
  %4131 = vmatprep.subr.bf16.mxu0 0
  %4132 = vmatpush1.bf16.msra.mxu0 0
  %4133 = vmatprep.subr.bf16.mxu0 0
  %4134 = vmatpush1.bf16.msra.mxu0 0
  %4135 = vmatprep.subr.bf16.mxu0 0
  %4136 = vmatpush1.bf16.msra.mxu0 0
  %4137 = vmatprep.subr.bf16.mxu0 0
  %4138 = vmatpush1.bf16.msra.mxu0 0
  %4139 = vmatprep.subr.bf16.mxu0 0
  %4140 = vmatpush1.bf16.msra.mxu0 0
  %4141 = vmatprep.subr.bf16.mxu0 0
  %4142 = vmatpush1.bf16.msra.mxu0 0
  %4143 = vmatprep.subr.bf16.mxu0 0
  %4144 = vmatpush1.bf16.msra.mxu0 0
  %4145 = vmatprep.subr.bf16.mxu0 0
  %4146 = vmatpush1.bf16.msra.mxu0 0
  %4147 = vmatprep.subr.bf16.mxu0 0
  %4148 = vmatpush1.bf16.msra.mxu0 0
  %4149 = vmatprep.subr.bf16.mxu0 0
  %4150 = vmatpush1.bf16.msra.mxu0 0
  %4151 = vmatprep.mubr.bf16.mxu0 0
  %4152 = vmatmul.mubr.bf16.gmra.mrb[0].mxu0 %v4117
  %v4153 = vpop.f32.mrb[0].mxu0
  %v4154 = vadd.f32 %v4102, %v4153
  %v4155 = vpop.f32.mrb[0].mxu0
  %v4156 = vpop.f32.mrb[0].mxu0
  %v4157 = vadd.f32 %v4102, %v4156
  %v4158 = vpop.f32.mrb[0].mxu0
  %4159 = vdwg.mxu0
  %v4160 = vmax.f32 %v4154, 0.0
  %v4161 = vmax.f32 %v4157, 0.0
  %v4162 = vpack.c.bf16 %v4161, %v4160
  %v4163 = vld [vmem:[%s22] sm:$0xf]
  %v4164 = vld [vmem:[%s22 + $0x4] sm:$0xf]
  %v4165 = vld [vmem:[%s22 + $0x8] sm:$0xf]
  %v4166 = vld [vmem:[%s22 + $0xc] sm:$0xf]
  %v4167 = vld [vmem:[%s22 + $0x10] sm:$0xf]
  %v4168 = vld [vmem:[%s22 + $0x14] sm:$0xf]
  %v4169 = vld [vmem:[%s22 + $0x18] sm:$0xf]
  %v4170 = vld [vmem:[%s22 + $0x1c] sm:$0xf]
  %v4171 = vld [vmem:[%s22 + $0x20] sm:$0xf]
  %v4172 = vld [vmem:[%s22 + $0x24] sm:$0xf]
  %v4173 = vld [vmem:[%s22 + $0x28] sm:$0xf]
  %v4174 = vld [vmem:[%s22 + $0x2c] sm:$0xf]
  %v4175 = vld [vmem:[%s22 + $0x30] sm:$0xf]
  %v4176 = vld [vmem:[%s22 + $0x34] sm:$0xf]
  %v4177 = vld [vmem:[%s22 + $0x38] sm:$0xf]
  %v4178 = vld [vmem:[%s22 + $0x3c] sm:$0xf]
  %v4179 = vld [vmem:[%s23] sm:$0x1]
  %v4181 = vlaneseq
  %v4182 = vshrl.u32 %v4181, 7
  %v4183 = vsub.s32 0, %v4182
  %v4184 = vrot.slane %v4179, %v4183
  %v4202 = vunpack.c.l.b16 %v4163
  %v4203 = vunpack.c.l.b16 %v4164
  %v4204 = vunpack.c.l.b16 %v4165
  %v4205 = vunpack.c.l.b16 %v4166
  %v4206 = vunpack.c.l.b16 %v4167
  %v4207 = vunpack.c.l.b16 %v4168
  %v4208 = vunpack.c.l.b16 %v4169
  %v4209 = vunpack.c.l.b16 %v4170
  %v4210 = vunpack.c.l.b16 %v4171
  %v4211 = vunpack.c.l.b16 %v4172
  %v4212 = vunpack.c.l.b16 %v4173
  %v4213 = vunpack.c.l.b16 %v4174
  %v4214 = vunpack.c.l.b16 %v4175
  %v4215 = vunpack.c.l.b16 %v4176
  %v4216 = vunpack.c.l.b16 %v4177
  %v4217 = vunpack.c.l.b16 %v4178
  %v4218 = vpack.c.b16 %v4203, %v4202
  %v4219 = vpack.c.b16 %v4205, %v4204
  %v4220 = vpack.c.b16 %v4207, %v4206
  %v4221 = vpack.c.b16 %v4209, %v4208
  %v4222 = vpack.c.b16 %v4211, %v4210
  %v4223 = vpack.c.b16 %v4213, %v4212
  %v4224 = vpack.c.b16 %v4215, %v4214
  %v4225 = vpack.c.b16 %v4217, %v4216
  %4234 = vmatprep.subr.bf16.mxu0 0
  %4235 = vmatpush1.bf16.msra.mxu0 %v4218
  %4236 = vmatprep.subr.bf16.mxu0 0
  %4237 = vmatpush1.bf16.msra.mxu0 %v4219
  %4238 = vmatprep.subr.bf16.mxu0 0
  %4239 = vmatpush1.bf16.msra.mxu0 %v4220
  %4240 = vmatprep.subr.bf16.mxu0 0
  %4241 = vmatpush1.bf16.msra.mxu0 %v4221
  %4242 = vmatprep.subr.bf16.mxu0 0
  %4243 = vmatpush1.bf16.msra.mxu0 %v4222
  %4244 = vmatprep.subr.bf16.mxu0 0
  %4245 = vmatpush1.bf16.msra.mxu0 %v4223
  %4246 = vmatprep.subr.bf16.mxu0 0
  %4247 = vmatpush1.bf16.msra.mxu0 %v4224
  %4248 = vmatprep.subr.bf16.mxu0 0
  %4249 = vmatpush1.bf16.msra.mxu0 %v4225
  %4250 = vmatprep.subr.bf16.mxu0 0
  %4251 = vmatpush1.bf16.msra.mxu0 0
  %4252 = vmatprep.subr.bf16.mxu0 0
  %4253 = vmatpush1.bf16.msra.mxu0 0
  %4254 = vmatprep.subr.bf16.mxu0 0
  %4255 = vmatpush1.bf16.msra.mxu0 0
  %4256 = vmatprep.subr.bf16.mxu0 0
  %4257 = vmatpush1.bf16.msra.mxu0 0
  %4258 = vmatprep.subr.bf16.mxu0 0
  %4259 = vmatpush1.bf16.msra.mxu0 0
  %4260 = vmatprep.subr.bf16.mxu0 0
  %4261 = vmatpush1.bf16.msra.mxu0 0
  %4262 = vmatprep.subr.bf16.mxu0 0
  %4263 = vmatpush1.bf16.msra.mxu0 0
  %4264 = vmatprep.subr.bf16.mxu0 0
  %4265 = vmatpush1.bf16.msra.mxu0 0
  %4266 = vmatprep.mubr.bf16.mxu0 0
  %4267 = vmatmul.mubr.bf16.gmra.mrb[0].mxu0 %v4162
  %v4268 = vpop.f32.mrb[0].mxu0
  %v4269 = vadd.f32 %v4184, %v4268
  %v4270 = vpop.f32.mrb[0].mxu0
  %v4271 = vpop.f32.mrb[0].mxu0
  %v4272 = vadd.f32 %v4184, %v4271
  %v4273 = vpop.f32.mrb[0].mxu0
  %4274 = vdwg.mxu0
  %4275 = vst [vmem:[%s24] sm:$0xff] %v4269
  %4276 = vst [vmem:[%s24 + $0x8] sm:$0xff] %v4272
  // Predicated region
  $region98: #{custom_nli_forward.1} parent=0 // pred_check
    _
  $region99: #{custom_nli_forward.1} parent=0 // pred_check_branch
    %4278 = sbr.rel (0) target = $region101
  $region100: #{custom_nli_forward.1} parent=0 // pred_region
    _
  $region101: #{custom_nli_forward.1} parent=0 // pred_fallthru
    _
  // Predicated region
  $region102: #{custom_nli_forward.1} parent=0 // pred_check
    _
  $region103: #{custom_nli_forward.1} parent=0 // pred_check_branch
    %4280 = sbr.rel (0) target = $region105
  $region104: #{custom_nli_forward.1} parent=0 // pred_region
    _
  $region105: #{custom_nli_forward.1} parent=0 // pred_fallthru
    _

</llo_original>
